<compile_context>
chip_gen: v5e
topology: v5e:2x2
jax: 0.10.0
libtpu: 0.0.40
codegen_flags: <defaults>
</compile_context>

<pallas_src>
import jax
import jax.numpy as jnp
from jax.experimental import pallas as pl
from jax.experimental.pallas import tpu as pltpu


def tgcn_kernel(x_ref, a_ref, wc_ref, l1_ref, l2zr_ref, bg_ref, l2h_ref,
                wo_ref, bo_ref, o_ref, h_scr, hseq_scr):
    # x_ref    : (T, B*N, Fin)      bf16, time-major, rows ordered (b, n)
    # a_ref    : (B*N, B*N)         bf16, block-diag normalized adjacency kron(I_B, A_hat)
    # wc_ref   : (Fin, 3*Hd)        bf16, stacked conv weights [z | r | h]
    # l1_ref   : (3*Hd, 3*Hd)       bf16, block-diag gate weights (conv half)
    # l2zr_ref : (Hd, 3*Hd)         bf16, gate weights (H half), candidate third zeroed
    # bg_ref   : (1, 3*Hd)          f32, fused bias (conv bias folded through L1 + gate bias)
    # l2h_ref  : (Hd, Hd)           bf16, candidate-gate weight applied to H*R
    # wo_ref   : (Hd, Co)           bf16, output Linear weight
    # bo_ref   : (1, Co)            f32, output Linear bias
    # o_ref    : (T*B*N, Co)        f32 output (rows ordered (t, b, n))
    # h_scr    : (B*N, Hd)          f32 recurrent hidden state
    # hseq_scr : (T*B*N, Hd)        f32 ReLU'd hidden-state sequence
    T = x_ref.shape[0]
    BN = x_ref.shape[1]
    Hd = h_scr.shape[1]
    bf = jnp.bfloat16

    # Hidden state starts at zero (h = None in the reference).
    h_scr[...] = jnp.zeros_like(h_scr)

    # Load loop-invariant operands once.
    A = a_ref[...]
    Wc = wc_ref[...]
    L1 = l1_ref[...]
    L2zr = l2zr_ref[...]
    Bg = bg_ref[...]
    L2h = l2h_ref[...]

    def step(t, carry):
        X = x_ref[t]                                                   # (BN, Fin) bf16
        # Fused GCNConv for all 3 gates: A_hat @ (X @ Wc_all); bias folded into Bg.
        XW = jnp.dot(X, Wc, preferred_element_type=jnp.float32)       # (BN, 3Hd)
        conv = jnp.dot(A, XW.astype(bf),
                       preferred_element_type=jnp.float32)            # (BN, 3Hd)

        H = h_scr[...]                                                 # (BN, Hd) f32
        # Fused gate linears: conv-half (block-diag) + H-half (z/r only) + fused bias.
        gate = (jnp.dot(conv.astype(bf), L1, preferred_element_type=jnp.float32)
                + jnp.dot(H.astype(bf), L2zr, preferred_element_type=jnp.float32)
                + Bg)                                                  # (BN, 3Hd)

        zr = jax.nn.sigmoid(gate[:, :2 * Hd])                          # fused Z|R sigmoid
        Z = zr[:, :Hd]
        R = zr[:, Hd:2 * Hd]

        h_pre = gate[:, 2 * Hd:] + jnp.dot((H * R).astype(bf), L2h,
                                           preferred_element_type=jnp.float32)
        H_tilde = jnp.tanh(h_pre)
        H_new = Z * H + (1.0 - Z) * H_tilde
        h_scr[...] = H_new

        row = pl.multiple_of(t * BN, BN)
        hseq_scr[pl.ds(row, BN), :] = jnp.maximum(H_new, 0.0)          # F.relu(h)
        return carry

    jax.lax.fori_loop(0, T, step, None, unroll=True)

    # Output head applied once over the whole sequence: (T*BN, Hd) @ (Hd, Co) + b.
    out = jnp.dot(hseq_scr[...].astype(bf), wo_ref[...],
                  preferred_element_type=jnp.float32) + bo_ref[...]
    o_ref[...] = out.astype(o_ref.dtype)


def batched_tgcn(x, edge_index, edge_weight, params):
    B, N, Fin, T = x.shape
    Hd = params['wc'].shape[-1]
    Co = params['wo'].shape[-1]
    BN = B * N

    # --- glue (plain JAX): GCN-normalized adjacency with self loops ---
    src = edge_index[0]
    dst = edge_index[1]
    A = jnp.zeros((N, N), jnp.float32).at[dst, src].add(edge_weight.astype(jnp.float32))
    A = A + jnp.eye(N, dtype=jnp.float32)
    deg = jnp.sum(A, axis=1)
    dinv = jnp.where(deg > 0, 1.0 / jnp.sqrt(deg), 0.0)
    A_hat = dinv[:, None] * A * dinv[None, :]
    A_bd = jnp.kron(jnp.eye(B, dtype=jnp.float32), A_hat)              # (BN, BN)

    # --- glue: fuse per-gate parameters into wide, MXU-friendly operands ---
    wc, bc = params['wc'], params['bc']            # (3,Fin,Hd), (3,1,Hd)
    l1, l2, lb = params['l1'], params['l2'], params['lb']
    wo, bo = params['wo'], params['bo']            # (Hd,Co), (1,Co)

    wc_all = jnp.concatenate([wc[0], wc[1], wc[2]], axis=1)            # (Fin, 3Hd)
    Zb = jnp.zeros((Hd, Hd), jnp.float32)
    w_l1 = jnp.concatenate([                                            # block-diag (3Hd,3Hd)
        jnp.concatenate([l1[0], Zb, Zb], axis=1),
        jnp.concatenate([Zb, l1[1], Zb], axis=1),
        jnp.concatenate([Zb, Zb, l1[2]], axis=1)], axis=0)
    w_l2zr = jnp.concatenate([l2[0], l2[1], Zb], axis=1)               # (Hd, 3Hd)
    b_fused = jnp.concatenate([bc[0] @ l1[0] + lb[0],                  # conv bias folded
                               bc[1] @ l1[1] + lb[1],                  # through L1 + gate bias
                               bc[2] @ l1[2] + lb[2]], axis=1)         # (1, 3Hd)
    l2h = l2[2]                                                         # (Hd, Hd)

    # Time-major, batch folded into rows: (T, B*N, Fin), rows ordered (b, n).
    x_flat = jnp.transpose(x, (3, 0, 1, 2)).reshape(T, BN, Fin)

    bf = jnp.bfloat16
    out_flat = pl.pallas_call(
        tgcn_kernel,
        out_shape=jax.ShapeDtypeStruct((T * BN, Co), jnp.float32),
        scratch_shapes=[pltpu.VMEM((BN, Hd), jnp.float32),             # recurrent H
                        pltpu.VMEM((T * BN, Hd), jnp.float32)],        # ReLU'd H sequence
    )(x_flat.astype(bf), A_bd.astype(bf), wc_all.astype(bf), w_l1.astype(bf),
      w_l2zr.astype(bf), b_fused.astype(jnp.float32), l2h.astype(bf),
      wo.astype(bf), bo.astype(jnp.float32))

    # (T*B*N, Co) rows ordered (t, b, n)  ->  (B, T, N, Co) to match torch.cat(dim=1).
    return out_flat.reshape(T, B, N, Co).transpose(1, 0, 2, 3)


if __name__ == "__main__":
    key = jax.random.PRNGKey(0)
    B, N, Fin, T = 2, 16, 4, 8
    Hd, Co = 32, 4

    keys = jax.random.split(key, 9)
    x = jax.random.normal(keys[0], (B, N, Fin, T), jnp.float32)

    # deterministic bidirectional ring graph on N nodes
    s = jnp.arange(N, dtype=jnp.int32)
    d = (s + 1) % N
    edge_index = jnp.stack([jnp.concatenate([s, d]),
                            jnp.concatenate([d, s])], axis=0)           # [2, 2N]
    edge_weight = jax.random.uniform(keys[1], (2 * N,), jnp.float32, 0.5, 1.5)

    scale = 0.1
    params = {
        # stacked per-gate GCNConv params, order: [z, r, h]
        'wc': scale * jax.random.normal(keys[2], (3, Fin, Hd), jnp.float32),
        'bc': scale * jax.random.normal(keys[3], (3, 1, Hd), jnp.float32),
        # gate Linear(2*Hd, Hd) split into the conv-half and H-half (already transposed)
        'l1': scale * jax.random.normal(keys[4], (3, Hd, Hd), jnp.float32),
        'l2': scale * jax.random.normal(keys[5], (3, Hd, Hd), jnp.float32),
        'lb': scale * jax.random.normal(keys[6], (3, 1, Hd), jnp.float32),
        # output Linear(Hd, Co) (stored transposed for right-multiplication)
        'wo': scale * jax.random.normal(keys[7], (Hd, Co), jnp.float32),
        'bo': scale * jax.random.normal(keys[8], (1, Co), jnp.float32),
    }

    out = batched_tgcn(x, edge_index, edge_weight, params)
    out = jax.block_until_ready(out)
    assert out.shape == (B, T, N, Co), out.shape
    print("KERNEL_OK")
</pallas_src>

<mosaic_0001>
module attributes {stable_mosaic.version = 11 : i64} {
  func.func @tgcn_kernel(%arg0: memref<8x32x4xbf16, #tpu.memory_space<vmem>>, %arg1: memref<32x32xbf16, #tpu.memory_space<vmem>>, %arg2: memref<4x96xbf16, #tpu.memory_space<vmem>>, %arg3: memref<96x96xbf16, #tpu.memory_space<vmem>>, %arg4: memref<32x96xbf16, #tpu.memory_space<vmem>>, %arg5: memref<1x96xf32, #tpu.memory_space<vmem>>, %arg6: memref<32x32xbf16, #tpu.memory_space<vmem>>, %arg7: memref<32x4xbf16, #tpu.memory_space<vmem>>, %arg8: memref<1x4xf32, #tpu.memory_space<vmem>>, %arg9: memref<256x4xf32, #tpu.memory_space<vmem>>, %arg10: memref<32x32xf32, #tpu.memory_space<vmem>>, %arg11: memref<256x32xf32, #tpu.memory_space<vmem>>) attributes {dimension_semantics = [], scalar_prefetch = 0 : i64, scratch_operands = 2 : i64, tpu.core_type = #tpu.core_type<tc>} {
    %cst = arith.constant 0.000000e+00 : f32
    %0 = vector.broadcast %cst : f32 to vector<32x32xf32>
    %c0 = arith.constant 0 : index
    %c0_0 = arith.constant 0 : index
    %1 = vector.load %arg10[%c0, %c0_0] : memref<32x32xf32, #tpu.memory_space<vmem>>, vector<32x32xf32>
    tpu.vector_store %arg10[%c0, %c0_0], %0 {strides = array<i32>} : memref<32x32xf32, #tpu.memory_space<vmem>>, vector<32x32xf32>,
    %c0_1 = arith.constant 0 : index
    %c0_2 = arith.constant 0 : index
    %2 = vector.load %arg1[%c0_1, %c0_2] : memref<32x32xbf16, #tpu.memory_space<vmem>>, vector<32x32xbf16>
    %c0_3 = arith.constant 0 : index
    %c0_4 = arith.constant 0 : index
    %3 = vector.load %arg2[%c0_3, %c0_4] : memref<4x96xbf16, #tpu.memory_space<vmem>>, vector<4x96xbf16>
    %c0_5 = arith.constant 0 : index
    %c0_6 = arith.constant 0 : index
    %4 = vector.load %arg3[%c0_5, %c0_6] : memref<96x96xbf16, #tpu.memory_space<vmem>>, vector<96x96xbf16>
    %c0_7 = arith.constant 0 : index
    %c0_8 = arith.constant 0 : index
    %5 = vector.load %arg4[%c0_7, %c0_8] : memref<32x96xbf16, #tpu.memory_space<vmem>>, vector<32x96xbf16>
    %c0_9 = arith.constant 0 : index
    %c0_10 = arith.constant 0 : index
    %6 = vector.load %arg5[%c0_9, %c0_10] : memref<1x96xf32, #tpu.memory_space<vmem>>, vector<1x96xf32>
    %c0_11 = arith.constant 0 : index
    %c0_12 = arith.constant 0 : index
    %7 = vector.load %arg6[%c0_11, %c0_12] : memref<32x32xbf16, #tpu.memory_space<vmem>>, vector<32x32xbf16>
    %c0_i32 = arith.constant 0 : i32
    %8 = arith.index_cast %c0_i32 : i32 to index
    %c0_13 = arith.constant 0 : index
    %c0_14 = arith.constant 0 : index
    %9 = vector.load %arg0[%8, %c0_13, %c0_14] : memref<8x32x4xbf16, #tpu.memory_space<vmem>>, vector<1x32x4xbf16>
    %10 = vector.shape_cast %9 : vector<1x32x4xbf16> to vector<32x4xbf16>
    %cst_15 = arith.constant dense<0.000000e+00> : vector<32x96xf32>
    %11 = tpu.matmul %10, %3, %cst_15 {dimension_numbers = #tpu.dot_dimension_numbers<[1], [0], [0], [1], [0, 0, 1, 1], [], []>} : vector<32x4xbf16>, vector<4x96xbf16>, vector<32x96xf32> -> vector<32x96xf32>
    %12 = arith.truncf %11 : vector<32x96xf32> to vector<32x96xbf16>
    %cst_16 = arith.constant dense<0.000000e+00> : vector<32x96xf32>
    %13 = tpu.matmul %2, %12, %cst_16 {dimension_numbers = #tpu.dot_dimension_numbers<[1], [0], [0], [1], [0, 0, 1, 1], [], []>} : vector<32x32xbf16>, vector<32x96xbf16>, vector<32x96xf32> -> vector<32x96xf32>
    %c0_17 = arith.constant 0 : index
    %c0_18 = arith.constant 0 : index
    %14 = vector.load %arg10[%c0_17, %c0_18] : memref<32x32xf32, #tpu.memory_space<vmem>>, vector<32x32xf32>
    %15 = arith.truncf %13 : vector<32x96xf32> to vector<32x96xbf16>
    %cst_19 = arith.constant dense<0.000000e+00> : vector<32x96xf32>
    %16 = tpu.matmul %15, %4, %cst_19 {dimension_numbers = #tpu.dot_dimension_numbers<[1], [0], [0], [1], [0, 0, 1, 1], [], []>} : vector<32x96xbf16>, vector<96x96xbf16>, vector<32x96xf32> -> vector<32x96xf32>
    %17 = arith.truncf %14 : vector<32x32xf32> to vector<32x32xbf16>
    %cst_20 = arith.constant dense<0.000000e+00> : vector<32x96xf32>
    %18 = tpu.matmul %17, %5, %cst_20 {dimension_numbers = #tpu.dot_dimension_numbers<[1], [0], [0], [1], [0, 0, 1, 1], [], []>} : vector<32x32xbf16>, vector<32x96xbf16>, vector<32x96xf32> -> vector<32x96xf32>
    %19 = arith.addf %16, %18 : vector<32x96xf32>
    %20 = vector.broadcast %6 : vector<1x96xf32> to vector<32x96xf32>
    %21 = arith.addf %19, %20 : vector<32x96xf32>
    %22 = vector.extract_strided_slice %21 {offsets = [0, 0], sizes = [32, 64], strides = [1, 1]} : vector<32x96xf32> to vector<32x64xf32>
    %23 = arith.negf %22 : vector<32x64xf32>
    %24 = math.exp %23 : vector<32x64xf32>
    %cst_21 = arith.constant 1.000000e+00 : f32
    %25 = vector.broadcast %cst_21 : f32 to vector<32x64xf32>
    %26 = arith.addf %25, %24 : vector<32x64xf32>
    %27 = arith.divf %25, %26 : vector<32x64xf32>
    %28 = vector.extract_strided_slice %27 {offsets = [0, 0], sizes = [32, 32], strides = [1, 1]} : vector<32x64xf32> to vector<32x32xf32>
    %29 = vector.extract_strided_slice %27 {offsets = [0, 32], sizes = [32, 32], strides = [1, 1]} : vector<32x64xf32> to vector<32x32xf32>
    %30 = vector.extract_strided_slice %21 {offsets = [0, 64], sizes = [32, 32], strides = [1, 1]} : vector<32x96xf32> to vector<32x32xf32>
    %31 = arith.mulf %14, %29 : vector<32x32xf32>
    %32 = arith.truncf %31 : vector<32x32xf32> to vector<32x32xbf16>
    %cst_22 = arith.constant dense<0.000000e+00> : vector<32x32xf32>
    %33 = tpu.matmul %32, %7, %cst_22 {dimension_numbers = #tpu.dot_dimension_numbers<[1], [0], [0], [1], [0, 0, 1, 1], [], []>} : vector<32x32xbf16>, vector<32x32xbf16>, vector<32x32xf32> -> vector<32x32xf32>
    %34 = arith.addf %30, %33 : vector<32x32xf32>
    %35 = math.tanh %34 : vector<32x32xf32>
    %36 = arith.mulf %28, %14 : vector<32x32xf32>
    %cst_23 = arith.constant 1.000000e+00 : f32
    %37 = vector.broadcast %cst_23 : f32 to vector<32x32xf32>
    %38 = arith.subf %37, %28 : vector<32x32xf32>
    %39 = arith.mulf %38, %35 : vector<32x32xf32>
    %40 = arith.addf %36, %39 : vector<32x32xf32>
    %c0_24 = arith.constant 0 : index
    %c0_25 = arith.constant 0 : index
    %41 = vector.load %arg10[%c0_24, %c0_25] : memref<32x32xf32, #tpu.memory_space<vmem>>, vector<32x32xf32>
    tpu.vector_store %arg10[%c0_24, %c0_25], %40 {strides = array<i32>} : memref<32x32xf32, #tpu.memory_space<vmem>>, vector<32x32xf32>,
    %c32_i32 = arith.constant 32 : i32
    %42 = arith.muli %c0_i32, %c32_i32 : i32
    %43 = tpu.assume_multiple %42, 32 : i32
    %cst_26 = arith.constant 0.000000e+00 : f32
    %44 = vector.broadcast %cst_26 : f32 to vector<32x32xf32>
    %45 = arith.maximumf %40, %44 : vector<32x32xf32>
    %46 = arith.index_cast %43 : i32 to index
    %c0_27 = arith.constant 0 : index
    %47 = vector.load %arg11[%46, %c0_27] : memref<256x32xf32, #tpu.memory_space<vmem>>, vector<32x32xf32>
    tpu.vector_store %arg11[%46, %c0_27], %45 {strides = array<i32>} : memref<256x32xf32, #tpu.memory_space<vmem>>, vector<32x32xf32>,
    %c1_i32 = arith.constant 1 : i32
    %48 = arith.index_cast %c1_i32 : i32 to index
    %c0_28 = arith.constant 0 : index
    %c0_29 = arith.constant 0 : index
    %49 = vector.load %arg0[%48, %c0_28, %c0_29] : memref<8x32x4xbf16, #tpu.memory_space<vmem>>, vector<1x32x4xbf16>
    %50 = vector.shape_cast %49 : vector<1x32x4xbf16> to vector<32x4xbf16>
    %cst_30 = arith.constant dense<0.000000e+00> : vector<32x96xf32>
    %51 = tpu.matmul %50, %3, %cst_30 {dimension_numbers = #tpu.dot_dimension_numbers<[1], [0], [0], [1], [0, 0, 1, 1], [], []>} : vector<32x4xbf16>, vector<4x96xbf16>, vector<32x96xf32> -> vector<32x96xf32>
    %52 = arith.truncf %51 : vector<32x96xf32> to vector<32x96xbf16>
    %cst_31 = arith.constant dense<0.000000e+00> : vector<32x96xf32>
    %53 = tpu.matmul %2, %52, %cst_31 {dimension_numbers = #tpu.dot_dimension_numbers<[1], [0], [0], [1], [0, 0, 1, 1], [], []>} : vector<32x32xbf16>, vector<32x96xbf16>, vector<32x96xf32> -> vector<32x96xf32>
    %c0_32 = arith.constant 0 : index
    %c0_33 = arith.constant 0 : index
    %54 = vector.load %arg10[%c0_32, %c0_33] : memref<32x32xf32, #tpu.memory_space<vmem>>, vector<32x32xf32>
    %55 = arith.truncf %53 : vector<32x96xf32> to vector<32x96xbf16>
    %cst_34 = arith.constant dense<0.000000e+00> : vector<32x96xf32>
    %56 = tpu.matmul %55, %4, %cst_34 {dimension_numbers = #tpu.dot_dimension_numbers<[1], [0], [0], [1], [0, 0, 1, 1], [], []>} : vector<32x96xbf16>, vector<96x96xbf16>, vector<32x96xf32> -> vector<32x96xf32>
    %57 = arith.truncf %54 : vector<32x32xf32> to vector<32x32xbf16>
    %cst_35 = arith.constant dense<0.000000e+00> : vector<32x96xf32>
    %58 = tpu.matmul %57, %5, %cst_35 {dimension_numbers = #tpu.dot_dimension_numbers<[1], [0], [0], [1], [0, 0, 1, 1], [], []>} : vector<32x32xbf16>, vector<32x96xbf16>, vector<32x96xf32> -> vector<32x96xf32>
    %59 = arith.addf %56, %58 : vector<32x96xf32>
    %60 = vector.broadcast %6 : vector<1x96xf32> to vector<32x96xf32>
    %61 = arith.addf %59, %60 : vector<32x96xf32>
    %62 = vector.extract_strided_slice %61 {offsets = [0, 0], sizes = [32, 64], strides = [1, 1]} : vector<32x96xf32> to vector<32x64xf32>
    %63 = arith.negf %62 : vector<32x64xf32>
    %64 = math.exp %63 : vector<32x64xf32>
    %cst_36 = arith.constant 1.000000e+00 : f32
    %65 = vector.broadcast %cst_36 : f32 to vector<32x64xf32>
    %66 = arith.addf %65, %64 : vector<32x64xf32>
    %67 = arith.divf %65, %66 : vector<32x64xf32>
    %68 = vector.extract_strided_slice %67 {offsets = [0, 0], sizes = [32, 32], strides = [1, 1]} : vector<32x64xf32> to vector<32x32xf32>
    %69 = vector.extract_strided_slice %67 {offsets = [0, 32], sizes = [32, 32], strides = [1, 1]} : vector<32x64xf32> to vector<32x32xf32>
    %70 = vector.extract_strided_slice %61 {offsets = [0, 64], sizes = [32, 32], strides = [1, 1]} : vector<32x96xf32> to vector<32x32xf32>
    %71 = arith.mulf %54, %69 : vector<32x32xf32>
    %72 = arith.truncf %71 : vector<32x32xf32> to vector<32x32xbf16>
    %cst_37 = arith.constant dense<0.000000e+00> : vector<32x32xf32>
    %73 = tpu.matmul %72, %7, %cst_37 {dimension_numbers = #tpu.dot_dimension_numbers<[1], [0], [0], [1], [0, 0, 1, 1], [], []>} : vector<32x32xbf16>, vector<32x32xbf16>, vector<32x32xf32> -> vector<32x32xf32>
    %74 = arith.addf %70, %73 : vector<32x32xf32>
    %75 = math.tanh %74 : vector<32x32xf32>
    %76 = arith.mulf %68, %54 : vector<32x32xf32>
    %cst_38 = arith.constant 1.000000e+00 : f32
    %77 = vector.broadcast %cst_38 : f32 to vector<32x32xf32>
    %78 = arith.subf %77, %68 : vector<32x32xf32>
    %79 = arith.mulf %78, %75 : vector<32x32xf32>
    %80 = arith.addf %76, %79 : vector<32x32xf32>
    %c0_39 = arith.constant 0 : index
    %c0_40 = arith.constant 0 : index
    %81 = vector.load %arg10[%c0_39, %c0_40] : memref<32x32xf32, #tpu.memory_space<vmem>>, vector<32x32xf32>
    tpu.vector_store %arg10[%c0_39, %c0_40], %80 {strides = array<i32>} : memref<32x32xf32, #tpu.memory_space<vmem>>, vector<32x32xf32>,
    %c32_i32_41 = arith.constant 32 : i32
    %82 = arith.muli %c1_i32, %c32_i32_41 : i32
    %83 = tpu.assume_multiple %82, 32 : i32
    %cst_42 = arith.constant 0.000000e+00 : f32
    %84 = vector.broadcast %cst_42 : f32 to vector<32x32xf32>
    %85 = arith.maximumf %80, %84 : vector<32x32xf32>
    %86 = arith.index_cast %83 : i32 to index
    %c0_43 = arith.constant 0 : index
    %87 = vector.load %arg11[%86, %c0_43] : memref<256x32xf32, #tpu.memory_space<vmem>>, vector<32x32xf32>
    tpu.vector_store %arg11[%86, %c0_43], %85 {strides = array<i32>} : memref<256x32xf32, #tpu.memory_space<vmem>>, vector<32x32xf32>,
    %c2_i32 = arith.constant 2 : i32
    %88 = arith.index_cast %c2_i32 : i32 to index
    %c0_44 = arith.constant 0 : index
    %c0_45 = arith.constant 0 : index
    %89 = vector.load %arg0[%88, %c0_44, %c0_45] : memref<8x32x4xbf16, #tpu.memory_space<vmem>>, vector<1x32x4xbf16>
    %90 = vector.shape_cast %89 : vector<1x32x4xbf16> to vector<32x4xbf16>
    %cst_46 = arith.constant dense<0.000000e+00> : vector<32x96xf32>
    %91 = tpu.matmul %90, %3, %cst_46 {dimension_numbers = #tpu.dot_dimension_numbers<[1], [0], [0], [1], [0, 0, 1, 1], [], []>} : vector<32x4xbf16>, vector<4x96xbf16>, vector<32x96xf32> -> vector<32x96xf32>
    %92 = arith.truncf %91 : vector<32x96xf32> to vector<32x96xbf16>
    %cst_47 = arith.constant dense<0.000000e+00> : vector<32x96xf32>
    %93 = tpu.matmul %2, %92, %cst_47 {dimension_numbers = #tpu.dot_dimension_numbers<[1], [0], [0], [1], [0, 0, 1, 1], [], []>} : vector<32x32xbf16>, vector<32x96xbf16>, vector<32x96xf32> -> vector<32x96xf32>
    %c0_48 = arith.constant 0 : index
    %c0_49 = arith.constant 0 : index
    %94 = vector.load %arg10[%c0_48, %c0_49] : memref<32x32xf32, #tpu.memory_space<vmem>>, vector<32x32xf32>
    %95 = arith.truncf %93 : vector<32x96xf32> to vector<32x96xbf16>
    %cst_50 = arith.constant dense<0.000000e+00> : vector<32x96xf32>
    %96 = tpu.matmul %95, %4, %cst_50 {dimension_numbers = #tpu.dot_dimension_numbers<[1], [0], [0], [1], [0, 0, 1, 1], [], []>} : vector<32x96xbf16>, vector<96x96xbf16>, vector<32x96xf32> -> vector<32x96xf32>
    %97 = arith.truncf %94 : vector<32x32xf32> to vector<32x32xbf16>
    %cst_51 = arith.constant dense<0.000000e+00> : vector<32x96xf32>
    %98 = tpu.matmul %97, %5, %cst_51 {dimension_numbers = #tpu.dot_dimension_numbers<[1], [0], [0], [1], [0, 0, 1, 1], [], []>} : vector<32x32xbf16>, vector<32x96xbf16>, vector<32x96xf32> -> vector<32x96xf32>
    %99 = arith.addf %96, %98 : vector<32x96xf32>
    %100 = vector.broadcast %6 : vector<1x96xf32> to vector<32x96xf32>
    %101 = arith.addf %99, %100 : vector<32x96xf32>
    %102 = vector.extract_strided_slice %101 {offsets = [0, 0], sizes = [32, 64], strides = [1, 1]} : vector<32x96xf32> to vector<32x64xf32>
    %103 = arith.negf %102 : vector<32x64xf32>
    %104 = math.exp %103 : vector<32x64xf32>
    %cst_52 = arith.constant 1.000000e+00 : f32
    %105 = vector.broadcast %cst_52 : f32 to vector<32x64xf32>
    %106 = arith.addf %105, %104 : vector<32x64xf32>
    %107 = arith.divf %105, %106 : vector<32x64xf32>
    %108 = vector.extract_strided_slice %107 {offsets = [0, 0], sizes = [32, 32], strides = [1, 1]} : vector<32x64xf32> to vector<32x32xf32>
    %109 = vector.extract_strided_slice %107 {offsets = [0, 32], sizes = [32, 32], strides = [1, 1]} : vector<32x64xf32> to vector<32x32xf32>
    %110 = vector.extract_strided_slice %101 {offsets = [0, 64], sizes = [32, 32], strides = [1, 1]} : vector<32x96xf32> to vector<32x32xf32>
    %111 = arith.mulf %94, %109 : vector<32x32xf32>
    %112 = arith.truncf %111 : vector<32x32xf32> to vector<32x32xbf16>
    %cst_53 = arith.constant dense<0.000000e+00> : vector<32x32xf32>
    %113 = tpu.matmul %112, %7, %cst_53 {dimension_numbers = #tpu.dot_dimension_numbers<[1], [0], [0], [1], [0, 0, 1, 1], [], []>} : vector<32x32xbf16>, vector<32x32xbf16>, vector<32x32xf32> -> vector<32x32xf32>
    %114 = arith.addf %110, %113 : vector<32x32xf32>
    %115 = math.tanh %114 : vector<32x32xf32>
    %116 = arith.mulf %108, %94 : vector<32x32xf32>
    %cst_54 = arith.constant 1.000000e+00 : f32
    %117 = vector.broadcast %cst_54 : f32 to vector<32x32xf32>
    %118 = arith.subf %117, %108 : vector<32x32xf32>
    %119 = arith.mulf %118, %115 : vector<32x32xf32>
    %120 = arith.addf %116, %119 : vector<32x32xf32>
    %c0_55 = arith.constant 0 : index
    %c0_56 = arith.constant 0 : index
    %121 = vector.load %arg10[%c0_55, %c0_56] : memref<32x32xf32, #tpu.memory_space<vmem>>, vector<32x32xf32>
    tpu.vector_store %arg10[%c0_55, %c0_56], %120 {strides = array<i32>} : memref<32x32xf32, #tpu.memory_space<vmem>>, vector<32x32xf32>,
    %c32_i32_57 = arith.constant 32 : i32
    %122 = arith.muli %c2_i32, %c32_i32_57 : i32
    %123 = tpu.assume_multiple %122, 32 : i32
    %cst_58 = arith.constant 0.000000e+00 : f32
    %124 = vector.broadcast %cst_58 : f32 to vector<32x32xf32>
    %125 = arith.maximumf %120, %124 : vector<32x32xf32>
    %126 = arith.index_cast %123 : i32 to index
    %c0_59 = arith.constant 0 : index
    %127 = vector.load %arg11[%126, %c0_59] : memref<256x32xf32, #tpu.memory_space<vmem>>, vector<32x32xf32>
    tpu.vector_store %arg11[%126, %c0_59], %125 {strides = array<i32>} : memref<256x32xf32, #tpu.memory_space<vmem>>, vector<32x32xf32>,
    %c3_i32 = arith.constant 3 : i32
    %128 = arith.index_cast %c3_i32 : i32 to index
    %c0_60 = arith.constant 0 : index
    %c0_61 = arith.constant 0 : index
    %129 = vector.load %arg0[%128, %c0_60, %c0_61] : memref<8x32x4xbf16, #tpu.memory_space<vmem>>, vector<1x32x4xbf16>
    %130 = vector.shape_cast %129 : vector<1x32x4xbf16> to vector<32x4xbf16>
    %cst_62 = arith.constant dense<0.000000e+00> : vector<32x96xf32>
    %131 = tpu.matmul %130, %3, %cst_62 {dimension_numbers = #tpu.dot_dimension_numbers<[1], [0], [0], [1], [0, 0, 1, 1], [], []>} : vector<32x4xbf16>, vector<4x96xbf16>, vector<32x96xf32> -> vector<32x96xf32>
    %132 = arith.truncf %131 : vector<32x96xf32> to vector<32x96xbf16>
    %cst_63 = arith.constant dense<0.000000e+00> : vector<32x96xf32>
    %133 = tpu.matmul %2, %132, %cst_63 {dimension_numbers = #tpu.dot_dimension_numbers<[1], [0], [0], [1], [0, 0, 1, 1], [], []>} : vector<32x32xbf16>, vector<32x96xbf16>, vector<32x96xf32> -> vector<32x96xf32>
    %c0_64 = arith.constant 0 : index
    %c0_65 = arith.constant 0 : index
    %134 = vector.load %arg10[%c0_64, %c0_65] : memref<32x32xf32, #tpu.memory_space<vmem>>, vector<32x32xf32>
    %135 = arith.truncf %133 : vector<32x96xf32> to vector<32x96xbf16>
    %cst_66 = arith.constant dense<0.000000e+00> : vector<32x96xf32>
    %136 = tpu.matmul %135, %4, %cst_66 {dimension_numbers = #tpu.dot_dimension_numbers<[1], [0], [0], [1], [0, 0, 1, 1], [], []>} : vector<32x96xbf16>, vector<96x96xbf16>, vector<32x96xf32> -> vector<32x96xf32>
    %137 = arith.truncf %134 : vector<32x32xf32> to vector<32x32xbf16>
    %cst_67 = arith.constant dense<0.000000e+00> : vector<32x96xf32>
    %138 = tpu.matmul %137, %5, %cst_67 {dimension_numbers = #tpu.dot_dimension_numbers<[1], [0], [0], [1], [0, 0, 1, 1], [], []>} : vector<32x32xbf16>, vector<32x96xbf16>, vector<32x96xf32> -> vector<32x96xf32>
    %139 = arith.addf %136, %138 : vector<32x96xf32>
    %140 = vector.broadcast %6 : vector<1x96xf32> to vector<32x96xf32>
    %141 = arith.addf %139, %140 : vector<32x96xf32>
    %142 = vector.extract_strided_slice %141 {offsets = [0, 0], sizes = [32, 64], strides = [1, 1]} : vector<32x96xf32> to vector<32x64xf32>
    %143 = arith.negf %142 : vector<32x64xf32>
    %144 = math.exp %143 : vector<32x64xf32>
    %cst_68 = arith.constant 1.000000e+00 : f32
    %145 = vector.broadcast %cst_68 : f32 to vector<32x64xf32>
    %146 = arith.addf %145, %144 : vector<32x64xf32>
    %147 = arith.divf %145, %146 : vector<32x64xf32>
    %148 = vector.extract_strided_slice %147 {offsets = [0, 0], sizes = [32, 32], strides = [1, 1]} : vector<32x64xf32> to vector<32x32xf32>
    %149 = vector.extract_strided_slice %147 {offsets = [0, 32], sizes = [32, 32], strides = [1, 1]} : vector<32x64xf32> to vector<32x32xf32>
    %150 = vector.extract_strided_slice %141 {offsets = [0, 64], sizes = [32, 32], strides = [1, 1]} : vector<32x96xf32> to vector<32x32xf32>
    %151 = arith.mulf %134, %149 : vector<32x32xf32>
    %152 = arith.truncf %151 : vector<32x32xf32> to vector<32x32xbf16>
    %cst_69 = arith.constant dense<0.000000e+00> : vector<32x32xf32>
    %153 = tpu.matmul %152, %7, %cst_69 {dimension_numbers = #tpu.dot_dimension_numbers<[1], [0], [0], [1], [0, 0, 1, 1], [], []>} : vector<32x32xbf16>, vector<32x32xbf16>, vector<32x32xf32> -> vector<32x32xf32>
    %154 = arith.addf %150, %153 : vector<32x32xf32>
    %155 = math.tanh %154 : vector<32x32xf32>
    %156 = arith.mulf %148, %134 : vector<32x32xf32>
    %cst_70 = arith.constant 1.000000e+00 : f32
    %157 = vector.broadcast %cst_70 : f32 to vector<32x32xf32>
    %158 = arith.subf %157, %148 : vector<32x32xf32>
    %159 = arith.mulf %158, %155 : vector<32x32xf32>
    %160 = arith.addf %156, %159 : vector<32x32xf32>
    %c0_71 = arith.constant 0 : index
    %c0_72 = arith.constant 0 : index
    %161 = vector.load %arg10[%c0_71, %c0_72] : memref<32x32xf32, #tpu.memory_space<vmem>>, vector<32x32xf32>
    tpu.vector_store %arg10[%c0_71, %c0_72], %160 {strides = array<i32>} : memref<32x32xf32, #tpu.memory_space<vmem>>, vector<32x32xf32>,
    %c32_i32_73 = arith.constant 32 : i32
    %162 = arith.muli %c3_i32, %c32_i32_73 : i32
    %163 = tpu.assume_multiple %162, 32 : i32
    %cst_74 = arith.constant 0.000000e+00 : f32
    %164 = vector.broadcast %cst_74 : f32 to vector<32x32xf32>
    %165 = arith.maximumf %160, %164 : vector<32x32xf32>
    %166 = arith.index_cast %163 : i32 to index
    %c0_75 = arith.constant 0 : index
    %167 = vector.load %arg11[%166, %c0_75] : memref<256x32xf32, #tpu.memory_space<vmem>>, vector<32x32xf32>
    tpu.vector_store %arg11[%166, %c0_75], %165 {strides = array<i32>} : memref<256x32xf32, #tpu.memory_space<vmem>>, vector<32x32xf32>,
    %c4_i32 = arith.constant 4 : i32
    %168 = arith.index_cast %c4_i32 : i32 to index
    %c0_76 = arith.constant 0 : index
    %c0_77 = arith.constant 0 : index
    %169 = vector.load %arg0[%168, %c0_76, %c0_77] : memref<8x32x4xbf16, #tpu.memory_space<vmem>>, vector<1x32x4xbf16>
    %170 = vector.shape_cast %169 : vector<1x32x4xbf16> to vector<32x4xbf16>
    %cst_78 = arith.constant dense<0.000000e+00> : vector<32x96xf32>
    %171 = tpu.matmul %170, %3, %cst_78 {dimension_numbers = #tpu.dot_dimension_numbers<[1], [0], [0], [1], [0, 0, 1, 1], [], []>} : vector<32x4xbf16>, vector<4x96xbf16>, vector<32x96xf32> -> vector<32x96xf32>
    %172 = arith.truncf %171 : vector<32x96xf32> to vector<32x96xbf16>
    %cst_79 = arith.constant dense<0.000000e+00> : vector<32x96xf32>
    %173 = tpu.matmul %2, %172, %cst_79 {dimension_numbers = #tpu.dot_dimension_numbers<[1], [0], [0], [1], [0, 0, 1, 1], [], []>} : vector<32x32xbf16>, vector<32x96xbf16>, vector<32x96xf32> -> vector<32x96xf32>
    %c0_80 = arith.constant 0 : index
    %c0_81 = arith.constant 0 : index
    %174 = vector.load %arg10[%c0_80, %c0_81] : memref<32x32xf32, #tpu.memory_space<vmem>>, vector<32x32xf32>
    %175 = arith.truncf %173 : vector<32x96xf32> to vector<32x96xbf16>
    %cst_82 = arith.constant dense<0.000000e+00> : vector<32x96xf32>
    %176 = tpu.matmul %175, %4, %cst_82 {dimension_numbers = #tpu.dot_dimension_numbers<[1], [0], [0], [1], [0, 0, 1, 1], [], []>} : vector<32x96xbf16>, vector<96x96xbf16>, vector<32x96xf32> -> vector<32x96xf32>
    %177 = arith.truncf %174 : vector<32x32xf32> to vector<32x32xbf16>
    %cst_83 = arith.constant dense<0.000000e+00> : vector<32x96xf32>
    %178 = tpu.matmul %177, %5, %cst_83 {dimension_numbers = #tpu.dot_dimension_numbers<[1], [0], [0], [1], [0, 0, 1, 1], [], []>} : vector<32x32xbf16>, vector<32x96xbf16>, vector<32x96xf32> -> vector<32x96xf32>
    %179 = arith.addf %176, %178 : vector<32x96xf32>
    %180 = vector.broadcast %6 : vector<1x96xf32> to vector<32x96xf32>
    %181 = arith.addf %179, %180 : vector<32x96xf32>
    %182 = vector.extract_strided_slice %181 {offsets = [0, 0], sizes = [32, 64], strides = [1, 1]} : vector<32x96xf32> to vector<32x64xf32>
    %183 = arith.negf %182 : vector<32x64xf32>
    %184 = math.exp %183 : vector<32x64xf32>
    %cst_84 = arith.constant 1.000000e+00 : f32
    %185 = vector.broadcast %cst_84 : f32 to vector<32x64xf32>
    %186 = arith.addf %185, %184 : vector<32x64xf32>
    %187 = arith.divf %185, %186 : vector<32x64xf32>
    %188 = vector.extract_strided_slice %187 {offsets = [0, 0], sizes = [32, 32], strides = [1, 1]} : vector<32x64xf32> to vector<32x32xf32>
    %189 = vector.extract_strided_slice %187 {offsets = [0, 32], sizes = [32, 32], strides = [1, 1]} : vector<32x64xf32> to vector<32x32xf32>
    %190 = vector.extract_strided_slice %181 {offsets = [0, 64], sizes = [32, 32], strides = [1, 1]} : vector<32x96xf32> to vector<32x32xf32>
    %191 = arith.mulf %174, %189 : vector<32x32xf32>
    %192 = arith.truncf %191 : vector<32x32xf32> to vector<32x32xbf16>
    %cst_85 = arith.constant dense<0.000000e+00> : vector<32x32xf32>
    %193 = tpu.matmul %192, %7, %cst_85 {dimension_numbers = #tpu.dot_dimension_numbers<[1], [0], [0], [1], [0, 0, 1, 1], [], []>} : vector<32x32xbf16>, vector<32x32xbf16>, vector<32x32xf32> -> vector<32x32xf32>
    %194 = arith.addf %190, %193 : vector<32x32xf32>
    %195 = math.tanh %194 : vector<32x32xf32>
    %196 = arith.mulf %188, %174 : vector<32x32xf32>
    %cst_86 = arith.constant 1.000000e+00 : f32
    %197 = vector.broadcast %cst_86 : f32 to vector<32x32xf32>
    %198 = arith.subf %197, %188 : vector<32x32xf32>
    %199 = arith.mulf %198, %195 : vector<32x32xf32>
    %200 = arith.addf %196, %199 : vector<32x32xf32>
    %c0_87 = arith.constant 0 : index
    %c0_88 = arith.constant 0 : index
    %201 = vector.load %arg10[%c0_87, %c0_88] : memref<32x32xf32, #tpu.memory_space<vmem>>, vector<32x32xf32>
    tpu.vector_store %arg10[%c0_87, %c0_88], %200 {strides = array<i32>} : memref<32x32xf32, #tpu.memory_space<vmem>>, vector<32x32xf32>,
    %c32_i32_89 = arith.constant 32 : i32
    %202 = arith.muli %c4_i32, %c32_i32_89 : i32
    %203 = tpu.assume_multiple %202, 32 : i32
    %cst_90 = arith.constant 0.000000e+00 : f32
    %204 = vector.broadcast %cst_90 : f32 to vector<32x32xf32>
    %205 = arith.maximumf %200, %204 : vector<32x32xf32>
    %206 = arith.index_cast %203 : i32 to index
    %c0_91 = arith.constant 0 : index
    %207 = vector.load %arg11[%206, %c0_91] : memref<256x32xf32, #tpu.memory_space<vmem>>, vector<32x32xf32>
    tpu.vector_store %arg11[%206, %c0_91], %205 {strides = array<i32>} : memref<256x32xf32, #tpu.memory_space<vmem>>, vector<32x32xf32>,
    %c5_i32 = arith.constant 5 : i32
    %208 = arith.index_cast %c5_i32 : i32 to index
    %c0_92 = arith.constant 0 : index
    %c0_93 = arith.constant 0 : index
    %209 = vector.load %arg0[%208, %c0_92, %c0_93] : memref<8x32x4xbf16, #tpu.memory_space<vmem>>, vector<1x32x4xbf16>
    %210 = vector.shape_cast %209 : vector<1x32x4xbf16> to vector<32x4xbf16>
    %cst_94 = arith.constant dense<0.000000e+00> : vector<32x96xf32>
    %211 = tpu.matmul %210, %3, %cst_94 {dimension_numbers = #tpu.dot_dimension_numbers<[1], [0], [0], [1], [0, 0, 1, 1], [], []>} : vector<32x4xbf16>, vector<4x96xbf16>, vector<32x96xf32> -> vector<32x96xf32>
    %212 = arith.truncf %211 : vector<32x96xf32> to vector<32x96xbf16>
    %cst_95 = arith.constant dense<0.000000e+00> : vector<32x96xf32>
    %213 = tpu.matmul %2, %212, %cst_95 {dimension_numbers = #tpu.dot_dimension_numbers<[1], [0], [0], [1], [0, 0, 1, 1], [], []>} : vector<32x32xbf16>, vector<32x96xbf16>, vector<32x96xf32> -> vector<32x96xf32>
    %c0_96 = arith.constant 0 : index
    %c0_97 = arith.constant 0 : index
    %214 = vector.load %arg10[%c0_96, %c0_97] : memref<32x32xf32, #tpu.memory_space<vmem>>, vector<32x32xf32>
    %215 = arith.truncf %213 : vector<32x96xf32> to vector<32x96xbf16>
    %cst_98 = arith.constant dense<0.000000e+00> : vector<32x96xf32>
    %216 = tpu.matmul %215, %4, %cst_98 {dimension_numbers = #tpu.dot_dimension_numbers<[1], [0], [0], [1], [0, 0, 1, 1], [], []>} : vector<32x96xbf16>, vector<96x96xbf16>, vector<32x96xf32> -> vector<32x96xf32>
    %217 = arith.truncf %214 : vector<32x32xf32> to vector<32x32xbf16>
    %cst_99 = arith.constant dense<0.000000e+00> : vector<32x96xf32>
    %218 = tpu.matmul %217, %5, %cst_99 {dimension_numbers = #tpu.dot_dimension_numbers<[1], [0], [0], [1], [0, 0, 1, 1], [], []>} : vector<32x32xbf16>, vector<32x96xbf16>, vector<32x96xf32> -> vector<32x96xf32>
    %219 = arith.addf %216, %218 : vector<32x96xf32>
    %220 = vector.broadcast %6 : vector<1x96xf32> to vector<32x96xf32>
    %221 = arith.addf %219, %220 : vector<32x96xf32>
    %222 = vector.extract_strided_slice %221 {offsets = [0, 0], sizes = [32, 64], strides = [1, 1]} : vector<32x96xf32> to vector<32x64xf32>
    %223 = arith.negf %222 : vector<32x64xf32>
    %224 = math.exp %223 : vector<32x64xf32>
    %cst_100 = arith.constant 1.000000e+00 : f32
    %225 = vector.broadcast %cst_100 : f32 to vector<32x64xf32>
    %226 = arith.addf %225, %224 : vector<32x64xf32>
    %227 = arith.divf %225, %226 : vector<32x64xf32>
    %228 = vector.extract_strided_slice %227 {offsets = [0, 0], sizes = [32, 32], strides = [1, 1]} : vector<32x64xf32> to vector<32x32xf32>
    %229 = vector.extract_strided_slice %227 {offsets = [0, 32], sizes = [32, 32], strides = [1, 1]} : vector<32x64xf32> to vector<32x32xf32>
    %230 = vector.extract_strided_slice %221 {offsets = [0, 64], sizes = [32, 32], strides = [1, 1]} : vector<32x96xf32> to vector<32x32xf32>
    %231 = arith.mulf %214, %229 : vector<32x32xf32>
    %232 = arith.truncf %231 : vector<32x32xf32> to vector<32x32xbf16>
    %cst_101 = arith.constant dense<0.000000e+00> : vector<32x32xf32>
    %233 = tpu.matmul %232, %7, %cst_101 {dimension_numbers = #tpu.dot_dimension_numbers<[1], [0], [0], [1], [0, 0, 1, 1], [], []>} : vector<32x32xbf16>, vector<32x32xbf16>, vector<32x32xf32> -> vector<32x32xf32>
    %234 = arith.addf %230, %233 : vector<32x32xf32>
    %235 = math.tanh %234 : vector<32x32xf32>
    %236 = arith.mulf %228, %214 : vector<32x32xf32>
    %cst_102 = arith.constant 1.000000e+00 : f32
    %237 = vector.broadcast %cst_102 : f32 to vector<32x32xf32>
    %238 = arith.subf %237, %228 : vector<32x32xf32>
    %239 = arith.mulf %238, %235 : vector<32x32xf32>
    %240 = arith.addf %236, %239 : vector<32x32xf32>
    %c0_103 = arith.constant 0 : index
    %c0_104 = arith.constant 0 : index
    %241 = vector.load %arg10[%c0_103, %c0_104] : memref<32x32xf32, #tpu.memory_space<vmem>>, vector<32x32xf32>
    tpu.vector_store %arg10[%c0_103, %c0_104], %240 {strides = array<i32>} : memref<32x32xf32, #tpu.memory_space<vmem>>, vector<32x32xf32>,
    %c32_i32_105 = arith.constant 32 : i32
    %242 = arith.muli %c5_i32, %c32_i32_105 : i32
    %243 = tpu.assume_multiple %242, 32 : i32
    %cst_106 = arith.constant 0.000000e+00 : f32
    %244 = vector.broadcast %cst_106 : f32 to vector<32x32xf32>
    %245 = arith.maximumf %240, %244 : vector<32x32xf32>
    %246 = arith.index_cast %243 : i32 to index
    %c0_107 = arith.constant 0 : index
    %247 = vector.load %arg11[%246, %c0_107] : memref<256x32xf32, #tpu.memory_space<vmem>>, vector<32x32xf32>
    tpu.vector_store %arg11[%246, %c0_107], %245 {strides = array<i32>} : memref<256x32xf32, #tpu.memory_space<vmem>>, vector<32x32xf32>,
    %c6_i32 = arith.constant 6 : i32
    %248 = arith.index_cast %c6_i32 : i32 to index
    %c0_108 = arith.constant 0 : index
    %c0_109 = arith.constant 0 : index
    %249 = vector.load %arg0[%248, %c0_108, %c0_109] : memref<8x32x4xbf16, #tpu.memory_space<vmem>>, vector<1x32x4xbf16>
    %250 = vector.shape_cast %249 : vector<1x32x4xbf16> to vector<32x4xbf16>
    %cst_110 = arith.constant dense<0.000000e+00> : vector<32x96xf32>
    %251 = tpu.matmul %250, %3, %cst_110 {dimension_numbers = #tpu.dot_dimension_numbers<[1], [0], [0], [1], [0, 0, 1, 1], [], []>} : vector<32x4xbf16>, vector<4x96xbf16>, vector<32x96xf32> -> vector<32x96xf32>
    %252 = arith.truncf %251 : vector<32x96xf32> to vector<32x96xbf16>
    %cst_111 = arith.constant dense<0.000000e+00> : vector<32x96xf32>
    %253 = tpu.matmul %2, %252, %cst_111 {dimension_numbers = #tpu.dot_dimension_numbers<[1], [0], [0], [1], [0, 0, 1, 1], [], []>} : vector<32x32xbf16>, vector<32x96xbf16>, vector<32x96xf32> -> vector<32x96xf32>
    %c0_112 = arith.constant 0 : index
    %c0_113 = arith.constant 0 : index
    %254 = vector.load %arg10[%c0_112, %c0_113] : memref<32x32xf32, #tpu.memory_space<vmem>>, vector<32x32xf32>
    %255 = arith.truncf %253 : vector<32x96xf32> to vector<32x96xbf16>
    %cst_114 = arith.constant dense<0.000000e+00> : vector<32x96xf32>
    %256 = tpu.matmul %255, %4, %cst_114 {dimension_numbers = #tpu.dot_dimension_numbers<[1], [0], [0], [1], [0, 0, 1, 1], [], []>} : vector<32x96xbf16>, vector<96x96xbf16>, vector<32x96xf32> -> vector<32x96xf32>
    %257 = arith.truncf %254 : vector<32x32xf32> to vector<32x32xbf16>
    %cst_115 = arith.constant dense<0.000000e+00> : vector<32x96xf32>
    %258 = tpu.matmul %257, %5, %cst_115 {dimension_numbers = #tpu.dot_dimension_numbers<[1], [0], [0], [1], [0, 0, 1, 1], [], []>} : vector<32x32xbf16>, vector<32x96xbf16>, vector<32x96xf32> -> vector<32x96xf32>
    %259 = arith.addf %256, %258 : vector<32x96xf32>
    %260 = vector.broadcast %6 : vector<1x96xf32> to vector<32x96xf32>
    %261 = arith.addf %259, %260 : vector<32x96xf32>
    %262 = vector.extract_strided_slice %261 {offsets = [0, 0], sizes = [32, 64], strides = [1, 1]} : vector<32x96xf32> to vector<32x64xf32>
    %263 = arith.negf %262 : vector<32x64xf32>
    %264 = math.exp %263 : vector<32x64xf32>
    %cst_116 = arith.constant 1.000000e+00 : f32
    %265 = vector.broadcast %cst_116 : f32 to vector<32x64xf32>
    %266 = arith.addf %265, %264 : vector<32x64xf32>
    %267 = arith.divf %265, %266 : vector<32x64xf32>
    %268 = vector.extract_strided_slice %267 {offsets = [0, 0], sizes = [32, 32], strides = [1, 1]} : vector<32x64xf32> to vector<32x32xf32>
    %269 = vector.extract_strided_slice %267 {offsets = [0, 32], sizes = [32, 32], strides = [1, 1]} : vector<32x64xf32> to vector<32x32xf32>
    %270 = vector.extract_strided_slice %261 {offsets = [0, 64], sizes = [32, 32], strides = [1, 1]} : vector<32x96xf32> to vector<32x32xf32>
    %271 = arith.mulf %254, %269 : vector<32x32xf32>
    %272 = arith.truncf %271 : vector<32x32xf32> to vector<32x32xbf16>
    %cst_117 = arith.constant dense<0.000000e+00> : vector<32x32xf32>
    %273 = tpu.matmul %272, %7, %cst_117 {dimension_numbers = #tpu.dot_dimension_numbers<[1], [0], [0], [1], [0, 0, 1, 1], [], []>} : vector<32x32xbf16>, vector<32x32xbf16>, vector<32x32xf32> -> vector<32x32xf32>
    %274 = arith.addf %270, %273 : vector<32x32xf32>
    %275 = math.tanh %274 : vector<32x32xf32>
    %276 = arith.mulf %268, %254 : vector<32x32xf32>
    %cst_118 = arith.constant 1.000000e+00 : f32
    %277 = vector.broadcast %cst_118 : f32 to vector<32x32xf32>
    %278 = arith.subf %277, %268 : vector<32x32xf32>
    %279 = arith.mulf %278, %275 : vector<32x32xf32>
    %280 = arith.addf %276, %279 : vector<32x32xf32>
    %c0_119 = arith.constant 0 : index
    %c0_120 = arith.constant 0 : index
    %281 = vector.load %arg10[%c0_119, %c0_120] : memref<32x32xf32, #tpu.memory_space<vmem>>, vector<32x32xf32>
    tpu.vector_store %arg10[%c0_119, %c0_120], %280 {strides = array<i32>} : memref<32x32xf32, #tpu.memory_space<vmem>>, vector<32x32xf32>,
    %c32_i32_121 = arith.constant 32 : i32
    %282 = arith.muli %c6_i32, %c32_i32_121 : i32
    %283 = tpu.assume_multiple %282, 32 : i32
    %cst_122 = arith.constant 0.000000e+00 : f32
    %284 = vector.broadcast %cst_122 : f32 to vector<32x32xf32>
    %285 = arith.maximumf %280, %284 : vector<32x32xf32>
    %286 = arith.index_cast %283 : i32 to index
    %c0_123 = arith.constant 0 : index
    %287 = vector.load %arg11[%286, %c0_123] : memref<256x32xf32, #tpu.memory_space<vmem>>, vector<32x32xf32>
    tpu.vector_store %arg11[%286, %c0_123], %285 {strides = array<i32>} : memref<256x32xf32, #tpu.memory_space<vmem>>, vector<32x32xf32>,
    %c7_i32 = arith.constant 7 : i32
    %288 = arith.index_cast %c7_i32 : i32 to index
    %c0_124 = arith.constant 0 : index
    %c0_125 = arith.constant 0 : index
    %289 = vector.load %arg0[%288, %c0_124, %c0_125] : memref<8x32x4xbf16, #tpu.memory_space<vmem>>, vector<1x32x4xbf16>
    %290 = vector.shape_cast %289 : vector<1x32x4xbf16> to vector<32x4xbf16>
    %cst_126 = arith.constant dense<0.000000e+00> : vector<32x96xf32>
    %291 = tpu.matmul %290, %3, %cst_126 {dimension_numbers = #tpu.dot_dimension_numbers<[1], [0], [0], [1], [0, 0, 1, 1], [], []>} : vector<32x4xbf16>, vector<4x96xbf16>, vector<32x96xf32> -> vector<32x96xf32>
    %292 = arith.truncf %291 : vector<32x96xf32> to vector<32x96xbf16>
    %cst_127 = arith.constant dense<0.000000e+00> : vector<32x96xf32>
    %293 = tpu.matmul %2, %292, %cst_127 {dimension_numbers = #tpu.dot_dimension_numbers<[1], [0], [0], [1], [0, 0, 1, 1], [], []>} : vector<32x32xbf16>, vector<32x96xbf16>, vector<32x96xf32> -> vector<32x96xf32>
    %c0_128 = arith.constant 0 : index
    %c0_129 = arith.constant 0 : index
    %294 = vector.load %arg10[%c0_128, %c0_129] : memref<32x32xf32, #tpu.memory_space<vmem>>, vector<32x32xf32>
    %295 = arith.truncf %293 : vector<32x96xf32> to vector<32x96xbf16>
    %cst_130 = arith.constant dense<0.000000e+00> : vector<32x96xf32>
    %296 = tpu.matmul %295, %4, %cst_130 {dimension_numbers = #tpu.dot_dimension_numbers<[1], [0], [0], [1], [0, 0, 1, 1], [], []>} : vector<32x96xbf16>, vector<96x96xbf16>, vector<32x96xf32> -> vector<32x96xf32>
    %297 = arith.truncf %294 : vector<32x32xf32> to vector<32x32xbf16>
    %cst_131 = arith.constant dense<0.000000e+00> : vector<32x96xf32>
    %298 = tpu.matmul %297, %5, %cst_131 {dimension_numbers = #tpu.dot_dimension_numbers<[1], [0], [0], [1], [0, 0, 1, 1], [], []>} : vector<32x32xbf16>, vector<32x96xbf16>, vector<32x96xf32> -> vector<32x96xf32>
    %299 = arith.addf %296, %298 : vector<32x96xf32>
    %300 = vector.broadcast %6 : vector<1x96xf32> to vector<32x96xf32>
    %301 = arith.addf %299, %300 : vector<32x96xf32>
    %302 = vector.extract_strided_slice %301 {offsets = [0, 0], sizes = [32, 64], strides = [1, 1]} : vector<32x96xf32> to vector<32x64xf32>
    %303 = arith.negf %302 : vector<32x64xf32>
    %304 = math.exp %303 : vector<32x64xf32>
    %cst_132 = arith.constant 1.000000e+00 : f32
    %305 = vector.broadcast %cst_132 : f32 to vector<32x64xf32>
    %306 = arith.addf %305, %304 : vector<32x64xf32>
    %307 = arith.divf %305, %306 : vector<32x64xf32>
    %308 = vector.extract_strided_slice %307 {offsets = [0, 0], sizes = [32, 32], strides = [1, 1]} : vector<32x64xf32> to vector<32x32xf32>
    %309 = vector.extract_strided_slice %307 {offsets = [0, 32], sizes = [32, 32], strides = [1, 1]} : vector<32x64xf32> to vector<32x32xf32>
    %310 = vector.extract_strided_slice %301 {offsets = [0, 64], sizes = [32, 32], strides = [1, 1]} : vector<32x96xf32> to vector<32x32xf32>
    %311 = arith.mulf %294, %309 : vector<32x32xf32>
    %312 = arith.truncf %311 : vector<32x32xf32> to vector<32x32xbf16>
    %cst_133 = arith.constant dense<0.000000e+00> : vector<32x32xf32>
    %313 = tpu.matmul %312, %7, %cst_133 {dimension_numbers = #tpu.dot_dimension_numbers<[1], [0], [0], [1], [0, 0, 1, 1], [], []>} : vector<32x32xbf16>, vector<32x32xbf16>, vector<32x32xf32> -> vector<32x32xf32>
    %314 = arith.addf %310, %313 : vector<32x32xf32>
    %315 = math.tanh %314 : vector<32x32xf32>
    %316 = arith.mulf %308, %294 : vector<32x32xf32>
    %cst_134 = arith.constant 1.000000e+00 : f32
    %317 = vector.broadcast %cst_134 : f32 to vector<32x32xf32>
    %318 = arith.subf %317, %308 : vector<32x32xf32>
    %319 = arith.mulf %318, %315 : vector<32x32xf32>
    %320 = arith.addf %316, %319 : vector<32x32xf32>
    %c0_135 = arith.constant 0 : index
    %c0_136 = arith.constant 0 : index
    %321 = vector.load %arg10[%c0_135, %c0_136] : memref<32x32xf32, #tpu.memory_space<vmem>>, vector<32x32xf32>
    tpu.vector_store %arg10[%c0_135, %c0_136], %320 {strides = array<i32>} : memref<32x32xf32, #tpu.memory_space<vmem>>, vector<32x32xf32>,
    %c32_i32_137 = arith.constant 32 : i32
    %322 = arith.muli %c7_i32, %c32_i32_137 : i32
    %323 = tpu.assume_multiple %322, 32 : i32
    %cst_138 = arith.constant 0.000000e+00 : f32
    %324 = vector.broadcast %cst_138 : f32 to vector<32x32xf32>
    %325 = arith.maximumf %320, %324 : vector<32x32xf32>
    %326 = arith.index_cast %323 : i32 to index
    %c0_139 = arith.constant 0 : index
    %327 = vector.load %arg11[%326, %c0_139] : memref<256x32xf32, #tpu.memory_space<vmem>>, vector<32x32xf32>
    tpu.vector_store %arg11[%326, %c0_139], %325 {strides = array<i32>} : memref<256x32xf32, #tpu.memory_space<vmem>>, vector<32x32xf32>,
    %c8_i32 = arith.constant 8 : i32
    %c0_140 = arith.constant 0 : index
    %c0_141 = arith.constant 0 : index
    %328 = vector.load %arg11[%c0_140, %c0_141] : memref<256x32xf32, #tpu.memory_space<vmem>>, vector<256x32xf32>
    %329 = arith.truncf %328 : vector<256x32xf32> to vector<256x32xbf16>
    %c0_142 = arith.constant 0 : index
    %c0_143 = arith.constant 0 : index
    %330 = vector.load %arg7[%c0_142, %c0_143] : memref<32x4xbf16, #tpu.memory_space<vmem>>, vector<32x4xbf16>
    %cst_144 = arith.constant dense<0.000000e+00> : vector<256x4xf32>
    %331 = tpu.matmul %329, %330, %cst_144 {dimension_numbers = #tpu.dot_dimension_numbers<[1], [0], [0], [1], [0, 0, 1, 1], [], []>} : vector<256x32xbf16>, vector<32x4xbf16>, vector<256x4xf32> -> vector<256x4xf32>
    %c0_145 = arith.constant 0 : index
    %c0_146 = arith.constant 0 : index
    %332 = vector.load %arg8[%c0_145, %c0_146] : memref<1x4xf32, #tpu.memory_space<vmem>>, vector<1x4xf32>
    %333 = vector.broadcast %332 : vector<1x4xf32> to vector<256x4xf32>
    %334 = arith.addf %331, %333 : vector<256x4xf32>
    %c0_147 = arith.constant 0 : index
    %c0_148 = arith.constant 0 : index
    %335 = vector.load %arg9[%c0_147, %c0_148] : memref<256x4xf32, #tpu.memory_space<vmem>>, vector<256x4xf32>
    tpu.vector_store %arg9[%c0_147, %c0_148], %334 {strides = array<i32>} : memref<256x4xf32, #tpu.memory_space<vmem>>, vector<256x4xf32>,
    return
  }
}

</mosaic_0001>

<llo_original>
// kernel: tpu_custom_call.1
$region0: #{tpu_custom_call.1}
  #allocation0 [shape = 'u32[]', space=smem, size = 0x4, offset = 0x4, fixed_abs, tag = 'smem constant byte address 0x4 - core index']
  #allocation1 [shape = 'u32[72,128]{1,0:T(1,128)}', space=vmem, size = 0x9000, scoped, tag = 'internal scratch']
  #allocation2 [shape = 'f32[32,32]{1,0:T(8,128)}', space=vmem, size = 0x4000, scoped, tag = 'scratch operand']
  #allocation3 [shape = 'f32[256,32]{1,0:T(8,128)}', space=vmem, size = 0x20000, scoped, tag = 'scratch operand']
  %s0 = inlined_call_operand.vmem [shape: bf16[8,32,4], index: 0, kind: input, shape index: {}]
  %s1 = inlined_call_operand.vmem [shape: bf16[32,32], index: 1, kind: input, shape index: {}]
  %s2 = inlined_call_operand.vmem [shape: bf16[4,96], index: 2, kind: input, shape index: {}]
  %s3 = inlined_call_operand.vmem [shape: bf16[96,96], index: 3, kind: input, shape index: {}]
  %s4 = inlined_call_operand.vmem [shape: bf16[32,96], index: 4, kind: input, shape index: {}]
  %s5 = inlined_call_operand.vmem [shape: f32[1,96], index: 5, kind: input, shape index: {}]
  %s6 = inlined_call_operand.vmem [shape: bf16[32,32], index: 6, kind: input, shape index: {}]
  %s7 = inlined_call_operand.vmem [shape: bf16[32,4], index: 7, kind: input, shape index: {}]
  %s8 = inlined_call_operand.vmem [shape: f32[1,4], index: 8, kind: input, shape index: {}]
  %s9 = inlined_call_operand.vmem [shape: f32[256,4], index: 9, kind: output, shape index: {}]
  %s10 = sld [smem:[#allocation0]]
  $region46: #{tpu_custom_call.1} parent=0
    _
  %s12 = ssub.s32 1, %s10
  %s13 = scalar_select 0, %s12, %s10
  // Predicated region
  $region2: #{tpu_custom_call.1} parent=0 // pred_check
    _
  $region3: #{tpu_custom_call.1} parent=0 // pred_check_branch
    %15 = sbr.rel (0) target = $region5
  $region4: #{tpu_custom_call.1} parent=0 // pred_region
    _
  $region5: #{tpu_custom_call.1} parent=0 // pred_fallthru
    _
  // Predicated region
  $region6: #{tpu_custom_call.1} parent=0 // pred_check
    _
  $region7: #{tpu_custom_call.1} parent=0 // pred_check_branch
    %17 = sbr.rel (0) target = $region9
  $region8: #{tpu_custom_call.1} parent=0 // pred_region
    _
  $region9: #{tpu_custom_call.1} parent=0 // pred_fallthru
    _
  // Predicated region
  $region10: #{tpu_custom_call.1} parent=0 // pred_check
    _
  $region11: #{tpu_custom_call.1} parent=0 // pred_check_branch
    %19 = sbr.rel (0) target = $region13
  $region12: #{tpu_custom_call.1} parent=0 // pred_region
    _
  $region13: #{tpu_custom_call.1} parent=0 // pred_fallthru
    _
  // Predicated region
  $region14: #{tpu_custom_call.1} parent=0 // pred_check
    _
  $region15: #{tpu_custom_call.1} parent=0 // pred_check_branch
    %21 = sbr.rel (0) target = $region17
  $region16: #{tpu_custom_call.1} parent=0 // pred_region
    _
  $region17: #{tpu_custom_call.1} parent=0 // pred_fallthru
    _
  // Predicated region
  $region18: #{tpu_custom_call.1} parent=0 // pred_check
    _
  $region19: #{tpu_custom_call.1} parent=0 // pred_check_branch
    %23 = sbr.rel (0) target = $region21
  $region20: #{tpu_custom_call.1} parent=0 // pred_region
    _
  $region21: #{tpu_custom_call.1} parent=0 // pred_fallthru
    _
  // Predicated region
  $region22: #{tpu_custom_call.1} parent=0 // pred_check
    _
  $region23: #{tpu_custom_call.1} parent=0 // pred_check_branch
    %25 = sbr.rel (0) target = $region25
  $region24: #{tpu_custom_call.1} parent=0 // pred_region
    _
  $region25: #{tpu_custom_call.1} parent=0 // pred_fallthru
    _
  // Predicated region
  $region26: #{tpu_custom_call.1} parent=0 // pred_check
    _
  $region27: #{tpu_custom_call.1} parent=0 // pred_check_branch
    %27 = sbr.rel (0) target = $region29
  $region28: #{tpu_custom_call.1} parent=0 // pred_region
    _
  $region29: #{tpu_custom_call.1} parent=0 // pred_fallthru
    _
  // Predicated region
  $region30: #{tpu_custom_call.1} parent=0 // pred_check
    _
  $region31: #{tpu_custom_call.1} parent=0 // pred_check_branch
    %29 = sbr.rel (0) target = $region33
  $region32: #{tpu_custom_call.1} parent=0 // pred_region
    _
  $region33: #{tpu_custom_call.1} parent=0 // pred_fallthru
    _
  // Predicated region
  $region34: #{tpu_custom_call.1} parent=0 // pred_check
    _
  $region35: #{tpu_custom_call.1} parent=0 // pred_check_branch
    %31 = sbr.rel (0) target = $region37
  $region36: #{tpu_custom_call.1} parent=0 // pred_region
    _
  $region37: #{tpu_custom_call.1} parent=0 // pred_fallthru
    _
  %vm33 = vcmask 261120
  %34 = vst.msk [vmem:[#allocation2] sm:$0xff] %vm33, 0.0
  %35 = vst.msk [vmem:[#allocation2 + $0x8] sm:$0xff] %vm33, 0.0
  %36 = vst.msk [vmem:[#allocation2 + $0x10] sm:$0xff] %vm33, 0.0
  %37 = vst.msk [vmem:[#allocation2 + $0x18] sm:$0xff] %vm33, 0.0
  %v38 = vld [vmem:[%s1] sm:$0xf]
  %v39 = vld [vmem:[%s1 + $0x4] sm:$0xf]
  %v40 = vld [vmem:[%s1 + $0x8] sm:$0xf]
  %v41 = vld [vmem:[%s1 + $0xc] sm:$0xf]
  %v42 = vld [vmem:[%s2] sm:$0x3]
  %v43 = vld [vmem:[%s3] sm:$0xf]
  %v44 = vld [vmem:[%s3 + $0x4] sm:$0xf]
  %v45 = vld [vmem:[%s3 + $0x8] sm:$0xf]
  %v46 = vld [vmem:[%s3 + $0xc] sm:$0xf]
  %v47 = vld [vmem:[%s3 + $0x10] sm:$0xf]
  %v48 = vld [vmem:[%s3 + $0x14] sm:$0xf]
  %v49 = vld [vmem:[%s3 + $0x18] sm:$0xf]
  %v50 = vld [vmem:[%s3 + $0x1c] sm:$0xf]
  %v51 = vld [vmem:[%s3 + $0x20] sm:$0xf]
  %v52 = vld [vmem:[%s3 + $0x24] sm:$0xf]
  %v53 = vld [vmem:[%s3 + $0x28] sm:$0xf]
  %v54 = vld [vmem:[%s3 + $0x2c] sm:$0xf]
  %v55 = vld [vmem:[%s4] sm:$0xf]
  %v56 = vld [vmem:[%s4 + $0x4] sm:$0xf]
  %v57 = vld [vmem:[%s4 + $0x8] sm:$0xf]
  %v58 = vld [vmem:[%s4 + $0xc] sm:$0xf]
  %v59 = vld [vmem:[%s5] sm:$0x1]
  %v60 = vld [vmem:[%s6] sm:$0xf]
  %v61 = vld [vmem:[%s6 + $0x4] sm:$0xf]
  %v62 = vld [vmem:[%s6 + $0x8] sm:$0xf]
  %v63 = vld [vmem:[%s6 + $0xc] sm:$0xf]
  %v64 = vld [vmem:[%s0] sm:$0xf]
  %v65 = vld [vmem:[%s0 + $0x4] sm:$0xf]
  %v66 = vld [vmem:[%s0 + $0x8] sm:$0xf]
  %v67 = vld [vmem:[%s0 + $0xc] sm:$0xf]
  %v72 = vunpack.c.l.b16 %v64
  %v73 = vunpack.c.l.b16 %v65
  %v74 = vunpack.c.l.b16 %v66
  %v75 = vunpack.c.l.b16 %v67
  %v76 = vpack.c.b16 %v73, %v72
  %v77 = vpack.c.b16 %v75, %v74
  %vm78 = vcmask 31744
  %v80 = vsel %vm78, %v76, 0
  %v83 = vsel %vm78, %v77, 0
  %vm85 = vcmask 1041408
  %v87 = vsel %vm85, %v42, 0
  %89 = vmatpush.bf16.msra.mxu0 0
  %90 = vmatpush.bf16.msra.mxu0 0
  %91 = vmatpush.bf16.msra.mxu0 0
  %92 = vmatpush.bf16.msra.mxu0 0
  %93 = vmatpush.bf16.msra.mxu0 0
  %94 = vmatpush.bf16.msra.mxu0 0
  %95 = vmatpush.bf16.msra.mxu0 0
  %96 = vmatpush.bf16.msra.mxu0 %v87
  %97 = vmatmul.bf16.gmra.mxu0 %v80
  %v98 = vpop.f32.mrf.mxu0
  %v99 = vadd.f32 0.0, %v98
  %v100 = vpop.f32.mrf.mxu0
  %v101 = vadd.f32 0.0, %v100
  %102 = vmatmul.bf16.gmra.mxu0 %v83
  %v103 = vpop.f32.mrf.mxu0
  %v104 = vadd.f32 0.0, %v103
  %v105 = vpop.f32.mrf.mxu0
  %v106 = vadd.f32 0.0, %v105
  %107 = vdwg.mxu0
  %v108 = vpack.c.bf16 %v101, %v99
  %v109 = vpack.c.bf16 %v106, %v104
  %v114 = vunpack.c.l.b16 %v38
  %v115 = vunpack.c.l.b16 %v39
  %v116 = vunpack.c.l.b16 %v40
  %v117 = vunpack.c.l.b16 %v41
  %v118 = vpack.c.b16 %v115, %v114
  %v119 = vpack.c.b16 %v117, %v116
  %v121 = vsel %vm33, %v118, 0
  %v124 = vsel %vm33, %v119, 0
  %126 = vmatpush.bf16.msra.mxu0 0
  %127 = vmatpush.bf16.msra.mxu0 0
  %128 = vmatpush.bf16.msra.mxu0 0
  %129 = vmatpush.bf16.msra.mxu0 0
  %130 = vmatpush.bf16.msra.mxu0 0
  %131 = vmatpush.bf16.msra.mxu0 0
  %132 = vmatpush.bf16.msra.mxu0 %v109
  %133 = vmatpush.bf16.msra.mxu0 %v108
  %134 = vmatmul.bf16.gmra.mxu0 %v121
  %v135 = vpop.f32.mrf.mxu0
  %v136 = vadd.f32 0.0, %v135
  %v137 = vpop.f32.mrf.mxu0
  %v138 = vadd.f32 0.0, %v137
  %139 = vmatmul.bf16.gmra.mxu0 %v124
  %v140 = vpop.f32.mrf.mxu0
  %v141 = vadd.f32 0.0, %v140
  %v142 = vpop.f32.mrf.mxu0
  %v143 = vadd.f32 0.0, %v142
  %144 = vdwg.mxu0
  %v145 = vld [vmem:[#allocation2] sm:$0xff]
  %v146 = vld [vmem:[#allocation2 + $0x8] sm:$0xff]
  %v147 = vld [vmem:[#allocation2 + $0x10] sm:$0xff]
  %v148 = vld [vmem:[#allocation2 + $0x18] sm:$0xff]
  %v149 = vpack.c.bf16 %v138, %v136
  %v150 = vpack.c.bf16 %v143, %v141
  %v151 = vpack.c.bf16 %v146, %v145
  %v152 = vpack.c.bf16 %v148, %v147
  %v157 = vunpack.c.l.b16 %v55
  %v158 = vunpack.c.l.b16 %v56
  %v159 = vunpack.c.l.b16 %v57
  %v160 = vunpack.c.l.b16 %v58
  %v161 = vpack.c.b16 %v158, %v157
  %v162 = vpack.c.b16 %v160, %v159
  %v166 = vsel %vm33, %v151, 0
  %v169 = vsel %vm33, %v152, 0
  %171 = vmatpush.bf16.msra.mxu0 0
  %172 = vmatpush.bf16.msra.mxu0 0
  %173 = vmatpush.bf16.msra.mxu0 0
  %174 = vmatpush.bf16.msra.mxu0 0
  %175 = vmatpush.bf16.msra.mxu0 0
  %176 = vmatpush.bf16.msra.mxu0 0
  %177 = vmatpush.bf16.msra.mxu0 %v162
  %178 = vmatpush.bf16.msra.mxu0 %v161
  %179 = vmatmul.bf16.gmra.mxu0 %v166
  %v180 = vpop.f32.mrf.mxu0
  %v181 = vadd.f32 0.0, %v180
  %v182 = vpop.f32.mrf.mxu0
  %v183 = vadd.f32 0.0, %v182
  %184 = vmatmul.bf16.gmra.mxu0 %v169
  %v185 = vpop.f32.mrf.mxu0
  %v186 = vadd.f32 0.0, %v185
  %v187 = vpop.f32.mrf.mxu0
  %v188 = vadd.f32 0.0, %v187
  %189 = vdwg.mxu0
  %v202 = vunpack.c.l.b16 %v43
  %v203 = vunpack.c.l.b16 %v44
  %v204 = vunpack.c.l.b16 %v45
  %v205 = vunpack.c.l.b16 %v46
  %v206 = vunpack.c.l.b16 %v47
  %v207 = vunpack.c.l.b16 %v48
  %v208 = vunpack.c.l.b16 %v49
  %v209 = vunpack.c.l.b16 %v50
  %v210 = vunpack.c.l.b16 %v51
  %v211 = vunpack.c.l.b16 %v52
  %v212 = vunpack.c.l.b16 %v53
  %v213 = vunpack.c.l.b16 %v54
  %v214 = vpack.c.b16 %v203, %v202
  %v215 = vpack.c.b16 %v205, %v204
  %v216 = vpack.c.b16 %v207, %v206
  %v217 = vpack.c.b16 %v209, %v208
  %v218 = vpack.c.b16 %v211, %v210
  %v219 = vpack.c.b16 %v213, %v212
  %vm226 = vcmask 785408
  %v228 = vsel %vm226, %v149, 0
  %v231 = vsel %vm226, %v150, 0
  %233 = vmatpush.bf16.msra.mxu0 0
  %234 = vmatpush.bf16.msra.mxu0 0
  %235 = vmatpush.bf16.msra.mxu0 %v219
  %236 = vmatpush.bf16.msra.mxu0 %v218
  %237 = vmatpush.bf16.msra.mxu0 %v217
  %238 = vmatpush.bf16.msra.mxu0 %v216
  %239 = vmatpush.bf16.msra.mxu0 %v215
  %240 = vmatpush.bf16.msra.mxu0 %v214
  %241 = vmatmul.bf16.gmra.mxu0 %v228
  %v242 = vpop.f32.mrf.mxu0
  %v243 = vadd.f32 %v181, %v242
  %v244 = vpop.f32.mrf.mxu0
  %v245 = vadd.f32 %v183, %v244
  %246 = vmatmul.bf16.gmra.mxu0 %v231
  %v247 = vpop.f32.mrf.mxu0
  %v248 = vadd.f32 %v186, %v247
  %v249 = vpop.f32.mrf.mxu0
  %v250 = vadd.f32 %v188, %v249
  %251 = vdwg.mxu0
  %v253 = vperm.slane %v59, 0
  %v255 = vadd.f32 %v243, %v253
  %v256 = vadd.f32 %v245, %v253
  %v257 = vadd.f32 %v248, %v253
  %v258 = vadd.f32 %v250, %v253
  %v259 = vxor.u32 %v255, 2147483648
  %v260 = vxor.u32 %v256, 2147483648
  %v261 = vxor.u32 %v257, 2147483648
  %v262 = vxor.u32 %v258, 2147483648
  %v263 = vmul.f32 %v259, 1.442695
  %v264 = vpow.pop %v263
  %v265 = vmul.f32 %v260, 1.442695
  %v266 = vpow.pop %v265
  %v267 = vmul.f32 %v261, 1.442695
  %v268 = vpow.pop %v267
  %v269 = vmul.f32 %v262, 1.442695
  %v270 = vpow.pop %v269
  %v271 = vadd.f32 %v264, 1.0
  %v272 = vadd.f32 %v266, 1.0
  %v273 = vadd.f32 %v268, 1.0
  %v274 = vadd.f32 %v270, 1.0
  %v275 = vrcp.pop %v271
  %v276 = vmul.f32 %v271, %v275
  %v277 = vsub.f32 1.0, %v276
  %v278 = vmul.f32 %v275, %v277
  %v279 = vadd.f32 %v275, %v278
  %vm280 = vweird.f32 %v271
  %vm281 = vweird.f32 %v275
  %vm282 = vmor %vm280, %vm281
  %v283 = vsel %vm282, %v275, %v279
  %v284 = vand.u32 2147483647, %v271
  %vm285 = vcmp.eq.f32.partialorder %v284, 8.507059e+37
  %v286 = vand.u32 %v271, 2147483648
  %v287 = vor.u32 1.1754944e-38, %v286
  %v288 = vsel %vm285, %v287, %v283
  %v289 = vmul.f32 1.0, %v288
  %v290 = vrcp.pop %v272
  %v291 = vmul.f32 %v272, %v290
  %v292 = vsub.f32 1.0, %v291
  %v293 = vmul.f32 %v290, %v292
  %v294 = vadd.f32 %v290, %v293
  %vm295 = vweird.f32 %v272
  %vm296 = vweird.f32 %v290
  %vm297 = vmor %vm295, %vm296
  %v298 = vsel %vm297, %v290, %v294
  %v299 = vand.u32 2147483647, %v272
  %vm300 = vcmp.eq.f32.partialorder %v299, 8.507059e+37
  %v301 = vand.u32 %v272, 2147483648
  %v302 = vor.u32 1.1754944e-38, %v301
  %v303 = vsel %vm300, %v302, %v298
  %v304 = vmul.f32 1.0, %v303
  %v305 = vrcp.pop %v273
  %v306 = vmul.f32 %v273, %v305
  %v307 = vsub.f32 1.0, %v306
  %v308 = vmul.f32 %v305, %v307
  %v309 = vadd.f32 %v305, %v308
  %vm310 = vweird.f32 %v273
  %vm311 = vweird.f32 %v305
  %vm312 = vmor %vm310, %vm311
  %v313 = vsel %vm312, %v305, %v309
  %v314 = vand.u32 2147483647, %v273
  %vm315 = vcmp.eq.f32.partialorder %v314, 8.507059e+37
  %v316 = vand.u32 %v273, 2147483648
  %v317 = vor.u32 1.1754944e-38, %v316
  %v318 = vsel %vm315, %v317, %v313
  %v319 = vmul.f32 1.0, %v318
  %v320 = vrcp.pop %v274
  %v321 = vmul.f32 %v274, %v320
  %v322 = vsub.f32 1.0, %v321
  %v323 = vmul.f32 %v320, %v322
  %v324 = vadd.f32 %v320, %v323
  %vm325 = vweird.f32 %v274
  %vm326 = vweird.f32 %v320
  %vm327 = vmor %vm325, %vm326
  %v328 = vsel %vm327, %v320, %v324
  %v329 = vand.u32 2147483647, %v274
  %vm330 = vcmp.eq.f32.partialorder %v329, 8.507059e+37
  %v331 = vand.u32 %v274, 2147483648
  %v332 = vor.u32 1.1754944e-38, %v331
  %v333 = vsel %vm330, %v332, %v328
  %v334 = vmul.f32 1.0, %v333
  %339 = vrot.lane.b32.xlu0 %v289, 96
  %v340 = vpop.permute.xlu0 %339
  %341 = vrot.lane.b32.xlu0 %v304, 96
  %v342 = vpop.permute.xlu0 %341
  %343 = vrot.lane.b32.xlu0 %v319, 96
  %v344 = vpop.permute.xlu0 %343
  %345 = vrot.lane.b32.xlu0 %v334, 96
  %v346 = vpop.permute.xlu0 %345
  %v351 = vmul.f32 %v145, %v340
  %v352 = vmul.f32 %v146, %v342
  %v353 = vmul.f32 %v147, %v344
  %v354 = vmul.f32 %v148, %v346
  %v355 = vpack.c.bf16 %v352, %v351
  %v356 = vpack.c.bf16 %v354, %v353
  %v361 = vunpack.c.l.b16 %v60
  %v362 = vunpack.c.l.b16 %v61
  %v363 = vunpack.c.l.b16 %v62
  %v364 = vunpack.c.l.b16 %v63
  %v365 = vpack.c.b16 %v362, %v361
  %v366 = vpack.c.b16 %v364, %v363
  %v370 = vsel %vm33, %v355, 0
  %v373 = vsel %vm33, %v356, 0
  %375 = vmatpush.bf16.msra.mxu0 0
  %376 = vmatpush.bf16.msra.mxu0 0
  %377 = vmatpush.bf16.msra.mxu0 0
  %378 = vmatpush.bf16.msra.mxu0 0
  %379 = vmatpush.bf16.msra.mxu0 0
  %380 = vmatpush.bf16.msra.mxu0 0
  %381 = vmatpush.bf16.msra.mxu0 %v366
  %382 = vmatpush.bf16.msra.mxu0 %v365
  %383 = vmatmul.bf16.gmra.mxu0 %v370
  %v384 = vpop.f32.mrf.mxu0
  %v385 = vadd.f32 0.0, %v384
  %v386 = vpop.f32.mrf.mxu0
  %v387 = vadd.f32 0.0, %v386
  %388 = vmatmul.bf16.gmra.mxu0 %v373
  %v389 = vpop.f32.mrf.mxu0
  %v390 = vadd.f32 0.0, %v389
  %v391 = vpop.f32.mrf.mxu0
  %v392 = vadd.f32 0.0, %v391
  %393 = vdwg.mxu0
  %398 = vrot.lane.b32.xlu0 %v385, 64
  %v399 = vpop.permute.xlu0 %398
  %400 = vrot.lane.b32.xlu0 %v387, 64
  %v401 = vpop.permute.xlu0 %400
  %402 = vrot.lane.b32.xlu0 %v390, 64
  %v403 = vpop.permute.xlu0 %402
  %404 = vrot.lane.b32.xlu0 %v392, 64
  %v405 = vpop.permute.xlu0 %404
  %v410 = vadd.f32 %v255, %v399
  %v411 = vadd.f32 %v256, %v401
  %v412 = vadd.f32 %v257, %v403
  %v413 = vadd.f32 %v258, %v405
  %v414 = vtanh.pop %v410
  %v415 = vtanh.pop %v411
  %v416 = vtanh.pop %v412
  %v417 = vtanh.pop %v413
  %v418 = vmul.f32 %v289, %v145
  %v419 = vmul.f32 %v304, %v146
  %v420 = vmul.f32 %v319, %v147
  %v421 = vmul.f32 %v334, %v148
  %v422 = vsub.f32 1.0, %v289
  %v423 = vsub.f32 1.0, %v304
  %v424 = vsub.f32 1.0, %v319
  %v425 = vsub.f32 1.0, %v334
  %430 = vrot.lane.b32.xlu0 %v414, 64
  %v431 = vpop.permute.xlu0 %430
  %432 = vrot.lane.b32.xlu0 %v415, 64
  %v433 = vpop.permute.xlu0 %432
  %434 = vrot.lane.b32.xlu0 %v416, 64
  %v435 = vpop.permute.xlu0 %434
  %436 = vrot.lane.b32.xlu0 %v417, 64
  %v437 = vpop.permute.xlu0 %436
  %v442 = vmul.f32 %v422, %v431
  %v443 = vmul.f32 %v423, %v433
  %v444 = vmul.f32 %v424, %v435
  %v445 = vmul.f32 %v425, %v437
  %v446 = vadd.f32 %v418, %v442
  %v447 = vadd.f32 %v419, %v443
  %v448 = vadd.f32 %v420, %v444
  %v449 = vadd.f32 %v421, %v445
  %450 = vst.msk [vmem:[#allocation2] sm:$0xff] %vm33, %v446
  %451 = vst.msk [vmem:[#allocation2 + $0x8] sm:$0xff] %vm33, %v447
  %452 = vst.msk [vmem:[#allocation2 + $0x10] sm:$0xff] %vm33, %v448
  %453 = vst.msk [vmem:[#allocation2 + $0x18] sm:$0xff] %vm33, %v449
  %v454 = vmax.f32 %v446, 0.0
  %v455 = vmax.f32 %v447, 0.0
  %v456 = vmax.f32 %v448, 0.0
  %v457 = vmax.f32 %v449, 0.0
  %458 = vst.msk [vmem:[#allocation3] sm:$0xff] %vm33, %v454
  %459 = vst.msk [vmem:[#allocation3 + $0x8] sm:$0xff] %vm33, %v455
  %460 = vst.msk [vmem:[#allocation3 + $0x10] sm:$0xff] %vm33, %v456
  %461 = vst.msk [vmem:[#allocation3 + $0x18] sm:$0xff] %vm33, %v457
  %s462 = scalar_lea.vmem %s0, 16
  %v463 = vld [vmem:[%s462] sm:$0xf]
  %v464 = vld [vmem:[%s462 + $0x4] sm:$0xf]
  %v465 = vld [vmem:[%s462 + $0x8] sm:$0xf]
  %v466 = vld [vmem:[%s462 + $0xc] sm:$0xf]
  %v471 = vunpack.c.l.b16 %v463
  %v472 = vunpack.c.l.b16 %v464
  %v473 = vunpack.c.l.b16 %v465
  %v474 = vunpack.c.l.b16 %v466
  %v475 = vpack.c.b16 %v472, %v471
  %v476 = vpack.c.b16 %v474, %v473
  %v478 = vsel %vm78, %v475, 0
  %v481 = vsel %vm78, %v476, 0
  %483 = vmatpush.bf16.msra.mxu0 0
  %484 = vmatpush.bf16.msra.mxu0 0
  %485 = vmatpush.bf16.msra.mxu0 0
  %486 = vmatpush.bf16.msra.mxu0 0
  %487 = vmatpush.bf16.msra.mxu0 0
  %488 = vmatpush.bf16.msra.mxu0 0
  %489 = vmatpush.bf16.msra.mxu0 0
  %490 = vmatpush.bf16.msra.mxu0 %v87
  %491 = vmatmul.bf16.gmra.mxu0 %v478
  %v492 = vpop.f32.mrf.mxu0
  %v493 = vadd.f32 0.0, %v492
  %v494 = vpop.f32.mrf.mxu0
  %v495 = vadd.f32 0.0, %v494
  %496 = vmatmul.bf16.gmra.mxu0 %v481
  %v497 = vpop.f32.mrf.mxu0
  %v498 = vadd.f32 0.0, %v497
  %v499 = vpop.f32.mrf.mxu0
  %v500 = vadd.f32 0.0, %v499
  %501 = vdwg.mxu0
  %v502 = vpack.c.bf16 %v495, %v493
  %v503 = vpack.c.bf16 %v500, %v498
  %504 = vmatpush.bf16.msra.mxu0 0
  %505 = vmatpush.bf16.msra.mxu0 0
  %506 = vmatpush.bf16.msra.mxu0 0
  %507 = vmatpush.bf16.msra.mxu0 0
  %508 = vmatpush.bf16.msra.mxu0 0
  %509 = vmatpush.bf16.msra.mxu0 0
  %510 = vmatpush.bf16.msra.mxu0 %v503
  %511 = vmatpush.bf16.msra.mxu0 %v502
  %512 = vmatmul.bf16.gmra.mxu0 %v121
  %v513 = vpop.f32.mrf.mxu0
  %v514 = vadd.f32 0.0, %v513
  %v515 = vpop.f32.mrf.mxu0
  %v516 = vadd.f32 0.0, %v515
  %517 = vmatmul.bf16.gmra.mxu0 %v124
  %v518 = vpop.f32.mrf.mxu0
  %v519 = vadd.f32 0.0, %v518
  %v520 = vpop.f32.mrf.mxu0
  %v521 = vadd.f32 0.0, %v520
  %522 = vdwg.mxu0
  %v523 = vld [vmem:[#allocation2] sm:$0xff]
  %v524 = vld [vmem:[#allocation2 + $0x8] sm:$0xff]
  %v525 = vld [vmem:[#allocation2 + $0x10] sm:$0xff]
  %v526 = vld [vmem:[#allocation2 + $0x18] sm:$0xff]
  %v527 = vpack.c.bf16 %v516, %v514
  %v528 = vpack.c.bf16 %v521, %v519
  %v529 = vpack.c.bf16 %v524, %v523
  %v530 = vpack.c.bf16 %v526, %v525
  %v532 = vsel %vm33, %v529, 0
  %v535 = vsel %vm33, %v530, 0
  %537 = vmatpush.bf16.msra.mxu0 0
  %538 = vmatpush.bf16.msra.mxu0 0
  %539 = vmatpush.bf16.msra.mxu0 0
  %540 = vmatpush.bf16.msra.mxu0 0
  %541 = vmatpush.bf16.msra.mxu0 0
  %542 = vmatpush.bf16.msra.mxu0 0
  %543 = vmatpush.bf16.msra.mxu0 %v162
  %544 = vmatpush.bf16.msra.mxu0 %v161
  %545 = vmatmul.bf16.gmra.mxu0 %v532
  %v546 = vpop.f32.mrf.mxu0
  %v547 = vadd.f32 0.0, %v546
  %v548 = vpop.f32.mrf.mxu0
  %v549 = vadd.f32 0.0, %v548
  %550 = vmatmul.bf16.gmra.mxu0 %v535
  %v551 = vpop.f32.mrf.mxu0
  %v552 = vadd.f32 0.0, %v551
  %v553 = vpop.f32.mrf.mxu0
  %v554 = vadd.f32 0.0, %v553
  %555 = vdwg.mxu0
  %v557 = vsel %vm226, %v527, 0
  %v560 = vsel %vm226, %v528, 0
  %562 = vmatpush.bf16.msra.mxu0 0
  %563 = vmatpush.bf16.msra.mxu0 0
  %564 = vmatpush.bf16.msra.mxu0 %v219
  %565 = vmatpush.bf16.msra.mxu0 %v218
  %566 = vmatpush.bf16.msra.mxu0 %v217
  %567 = vmatpush.bf16.msra.mxu0 %v216
  %568 = vmatpush.bf16.msra.mxu0 %v215
  %569 = vmatpush.bf16.msra.mxu0 %v214
  %570 = vmatmul.bf16.gmra.mxu0 %v557
  %v571 = vpop.f32.mrf.mxu0
  %v572 = vadd.f32 %v547, %v571
  %v573 = vpop.f32.mrf.mxu0
  %v574 = vadd.f32 %v549, %v573
  %575 = vmatmul.bf16.gmra.mxu0 %v560
  %v576 = vpop.f32.mrf.mxu0
  %v577 = vadd.f32 %v552, %v576
  %v578 = vpop.f32.mrf.mxu0
  %v579 = vadd.f32 %v554, %v578
  %580 = vdwg.mxu0
  %v581 = vadd.f32 %v572, %v253
  %v582 = vadd.f32 %v574, %v253
  %v583 = vadd.f32 %v577, %v253
  %v584 = vadd.f32 %v579, %v253
  %v585 = vxor.u32 %v581, 2147483648
  %v586 = vxor.u32 %v582, 2147483648
  %v587 = vxor.u32 %v583, 2147483648
  %v588 = vxor.u32 %v584, 2147483648
  %v589 = vmul.f32 %v585, 1.442695
  %v590 = vpow.pop %v589
  %v591 = vmul.f32 %v586, 1.442695
  %v592 = vpow.pop %v591
  %v593 = vmul.f32 %v587, 1.442695
  %v594 = vpow.pop %v593
  %v595 = vmul.f32 %v588, 1.442695
  %v596 = vpow.pop %v595
  %v597 = vadd.f32 %v590, 1.0
  %v598 = vadd.f32 %v592, 1.0
  %v599 = vadd.f32 %v594, 1.0
  %v600 = vadd.f32 %v596, 1.0
  %v601 = vrcp.pop %v597
  %v602 = vmul.f32 %v597, %v601
  %v603 = vsub.f32 1.0, %v602
  %v604 = vmul.f32 %v601, %v603
  %v605 = vadd.f32 %v601, %v604
  %vm606 = vweird.f32 %v597
  %vm607 = vweird.f32 %v601
  %vm608 = vmor %vm606, %vm607
  %v609 = vsel %vm608, %v601, %v605
  %v610 = vand.u32 2147483647, %v597
  %vm611 = vcmp.eq.f32.partialorder %v610, 8.507059e+37
  %v612 = vand.u32 %v597, 2147483648
  %v613 = vor.u32 1.1754944e-38, %v612
  %v614 = vsel %vm611, %v613, %v609
  %v615 = vmul.f32 1.0, %v614
  %v616 = vrcp.pop %v598
  %v617 = vmul.f32 %v598, %v616
  %v618 = vsub.f32 1.0, %v617
  %v619 = vmul.f32 %v616, %v618
  %v620 = vadd.f32 %v616, %v619
  %vm621 = vweird.f32 %v598
  %vm622 = vweird.f32 %v616
  %vm623 = vmor %vm621, %vm622
  %v624 = vsel %vm623, %v616, %v620
  %v625 = vand.u32 2147483647, %v598
  %vm626 = vcmp.eq.f32.partialorder %v625, 8.507059e+37
  %v627 = vand.u32 %v598, 2147483648
  %v628 = vor.u32 1.1754944e-38, %v627
  %v629 = vsel %vm626, %v628, %v624
  %v630 = vmul.f32 1.0, %v629
  %v631 = vrcp.pop %v599
  %v632 = vmul.f32 %v599, %v631
  %v633 = vsub.f32 1.0, %v632
  %v634 = vmul.f32 %v631, %v633
  %v635 = vadd.f32 %v631, %v634
  %vm636 = vweird.f32 %v599
  %vm637 = vweird.f32 %v631
  %vm638 = vmor %vm636, %vm637
  %v639 = vsel %vm638, %v631, %v635
  %v640 = vand.u32 2147483647, %v599
  %vm641 = vcmp.eq.f32.partialorder %v640, 8.507059e+37
  %v642 = vand.u32 %v599, 2147483648
  %v643 = vor.u32 1.1754944e-38, %v642
  %v644 = vsel %vm641, %v643, %v639
  %v645 = vmul.f32 1.0, %v644
  %v646 = vrcp.pop %v600
  %v647 = vmul.f32 %v600, %v646
  %v648 = vsub.f32 1.0, %v647
  %v649 = vmul.f32 %v646, %v648
  %v650 = vadd.f32 %v646, %v649
  %vm651 = vweird.f32 %v600
  %vm652 = vweird.f32 %v646
  %vm653 = vmor %vm651, %vm652
  %v654 = vsel %vm653, %v646, %v650
  %v655 = vand.u32 2147483647, %v600
  %vm656 = vcmp.eq.f32.partialorder %v655, 8.507059e+37
  %v657 = vand.u32 %v600, 2147483648
  %v658 = vor.u32 1.1754944e-38, %v657
  %v659 = vsel %vm656, %v658, %v654
  %v660 = vmul.f32 1.0, %v659
  %665 = vrot.lane.b32.xlu0 %v615, 96
  %v666 = vpop.permute.xlu0 %665
  %667 = vrot.lane.b32.xlu0 %v630, 96
  %v668 = vpop.permute.xlu0 %667
  %669 = vrot.lane.b32.xlu0 %v645, 96
  %v670 = vpop.permute.xlu0 %669
  %671 = vrot.lane.b32.xlu0 %v660, 96
  %v672 = vpop.permute.xlu0 %671
  %v677 = vmul.f32 %v523, %v666
  %v678 = vmul.f32 %v524, %v668
  %v679 = vmul.f32 %v525, %v670
  %v680 = vmul.f32 %v526, %v672
  %v681 = vpack.c.bf16 %v678, %v677
  %v682 = vpack.c.bf16 %v680, %v679
  %v684 = vsel %vm33, %v681, 0
  %v687 = vsel %vm33, %v682, 0
  %689 = vmatpush.bf16.msra.mxu0 0
  %690 = vmatpush.bf16.msra.mxu0 0
  %691 = vmatpush.bf16.msra.mxu0 0
  %692 = vmatpush.bf16.msra.mxu0 0
  %693 = vmatpush.bf16.msra.mxu0 0
  %694 = vmatpush.bf16.msra.mxu0 0
  %695 = vmatpush.bf16.msra.mxu0 %v366
  %696 = vmatpush.bf16.msra.mxu0 %v365
  %697 = vmatmul.bf16.gmra.mxu0 %v684
  %v698 = vpop.f32.mrf.mxu0
  %v699 = vadd.f32 0.0, %v698
  %v700 = vpop.f32.mrf.mxu0
  %v701 = vadd.f32 0.0, %v700
  %702 = vmatmul.bf16.gmra.mxu0 %v687
  %v703 = vpop.f32.mrf.mxu0
  %v704 = vadd.f32 0.0, %v703
  %v705 = vpop.f32.mrf.mxu0
  %v706 = vadd.f32 0.0, %v705
  %707 = vdwg.mxu0
  %712 = vrot.lane.b32.xlu0 %v699, 64
  %v713 = vpop.permute.xlu0 %712
  %714 = vrot.lane.b32.xlu0 %v701, 64
  %v715 = vpop.permute.xlu0 %714
  %716 = vrot.lane.b32.xlu0 %v704, 64
  %v717 = vpop.permute.xlu0 %716
  %718 = vrot.lane.b32.xlu0 %v706, 64
  %v719 = vpop.permute.xlu0 %718
  %v724 = vadd.f32 %v581, %v713
  %v725 = vadd.f32 %v582, %v715
  %v726 = vadd.f32 %v583, %v717
  %v727 = vadd.f32 %v584, %v719
  %v728 = vtanh.pop %v724
  %v729 = vtanh.pop %v725
  %v730 = vtanh.pop %v726
  %v731 = vtanh.pop %v727
  %v732 = vmul.f32 %v615, %v523
  %v733 = vmul.f32 %v630, %v524
  %v734 = vmul.f32 %v645, %v525
  %v735 = vmul.f32 %v660, %v526
  %v736 = vsub.f32 1.0, %v615
  %v737 = vsub.f32 1.0, %v630
  %v738 = vsub.f32 1.0, %v645
  %v739 = vsub.f32 1.0, %v660
  %744 = vrot.lane.b32.xlu0 %v728, 64
  %v745 = vpop.permute.xlu0 %744
  %746 = vrot.lane.b32.xlu0 %v729, 64
  %v747 = vpop.permute.xlu0 %746
  %748 = vrot.lane.b32.xlu0 %v730, 64
  %v749 = vpop.permute.xlu0 %748
  %750 = vrot.lane.b32.xlu0 %v731, 64
  %v751 = vpop.permute.xlu0 %750
  %v756 = vmul.f32 %v736, %v745
  %v757 = vmul.f32 %v737, %v747
  %v758 = vmul.f32 %v738, %v749
  %v759 = vmul.f32 %v739, %v751
  %v760 = vadd.f32 %v732, %v756
  %v761 = vadd.f32 %v733, %v757
  %v762 = vadd.f32 %v734, %v758
  %v763 = vadd.f32 %v735, %v759
  %764 = vst.msk [vmem:[#allocation2] sm:$0xff] %vm33, %v760
  %765 = vst.msk [vmem:[#allocation2 + $0x8] sm:$0xff] %vm33, %v761
  %766 = vst.msk [vmem:[#allocation2 + $0x10] sm:$0xff] %vm33, %v762
  %767 = vst.msk [vmem:[#allocation2 + $0x18] sm:$0xff] %vm33, %v763
  %v768 = vmax.f32 %v760, 0.0
  %v769 = vmax.f32 %v761, 0.0
  %v770 = vmax.f32 %v762, 0.0
  %v771 = vmax.f32 %v763, 0.0
  %s772 = scalar_lea.vmem [#allocation3], 32
  %773 = vst.msk [vmem:[%s772] sm:$0xff] %vm33, %v768
  %774 = vst.msk [vmem:[%s772 + $0x8] sm:$0xff] %vm33, %v769
  %775 = vst.msk [vmem:[%s772 + $0x10] sm:$0xff] %vm33, %v770
  %776 = vst.msk [vmem:[%s772 + $0x18] sm:$0xff] %vm33, %v771
  %s777 = scalar_lea.vmem %s0, 32
  %v778 = vld [vmem:[%s777] sm:$0xf]
  %v779 = vld [vmem:[%s777 + $0x4] sm:$0xf]
  %v780 = vld [vmem:[%s777 + $0x8] sm:$0xf]
  %v781 = vld [vmem:[%s777 + $0xc] sm:$0xf]
  %v786 = vunpack.c.l.b16 %v778
  %v787 = vunpack.c.l.b16 %v779
  %v788 = vunpack.c.l.b16 %v780
  %v789 = vunpack.c.l.b16 %v781
  %v790 = vpack.c.b16 %v787, %v786
  %v791 = vpack.c.b16 %v789, %v788
  %v793 = vsel %vm78, %v790, 0
  %v796 = vsel %vm78, %v791, 0
  %798 = vmatpush.bf16.msra.mxu0 0
  %799 = vmatpush.bf16.msra.mxu0 0
  %800 = vmatpush.bf16.msra.mxu0 0
  %801 = vmatpush.bf16.msra.mxu0 0
  %802 = vmatpush.bf16.msra.mxu0 0
  %803 = vmatpush.bf16.msra.mxu0 0
  %804 = vmatpush.bf16.msra.mxu0 0
  %805 = vmatpush.bf16.msra.mxu0 %v87
  %806 = vmatmul.bf16.gmra.mxu0 %v793
  %v807 = vpop.f32.mrf.mxu0
  %v808 = vadd.f32 0.0, %v807
  %v809 = vpop.f32.mrf.mxu0
  %v810 = vadd.f32 0.0, %v809
  %811 = vmatmul.bf16.gmra.mxu0 %v796
  %v812 = vpop.f32.mrf.mxu0
  %v813 = vadd.f32 0.0, %v812
  %v814 = vpop.f32.mrf.mxu0
  %v815 = vadd.f32 0.0, %v814
  %816 = vdwg.mxu0
  %v817 = vpack.c.bf16 %v810, %v808
  %v818 = vpack.c.bf16 %v815, %v813
  %819 = vmatpush.bf16.msra.mxu0 0
  %820 = vmatpush.bf16.msra.mxu0 0
  %821 = vmatpush.bf16.msra.mxu0 0
  %822 = vmatpush.bf16.msra.mxu0 0
  %823 = vmatpush.bf16.msra.mxu0 0
  %824 = vmatpush.bf16.msra.mxu0 0
  %825 = vmatpush.bf16.msra.mxu0 %v818
  %826 = vmatpush.bf16.msra.mxu0 %v817
  %827 = vmatmul.bf16.gmra.mxu0 %v121
  %v828 = vpop.f32.mrf.mxu0
  %v829 = vadd.f32 0.0, %v828
  %v830 = vpop.f32.mrf.mxu0
  %v831 = vadd.f32 0.0, %v830
  %832 = vmatmul.bf16.gmra.mxu0 %v124
  %v833 = vpop.f32.mrf.mxu0
  %v834 = vadd.f32 0.0, %v833
  %v835 = vpop.f32.mrf.mxu0
  %v836 = vadd.f32 0.0, %v835
  %837 = vdwg.mxu0
  %v838 = vld [vmem:[#allocation2] sm:$0xff]
  %v839 = vld [vmem:[#allocation2 + $0x8] sm:$0xff]
  %v840 = vld [vmem:[#allocation2 + $0x10] sm:$0xff]
  %v841 = vld [vmem:[#allocation2 + $0x18] sm:$0xff]
  %v842 = vpack.c.bf16 %v831, %v829
  %v843 = vpack.c.bf16 %v836, %v834
  %v844 = vpack.c.bf16 %v839, %v838
  %v845 = vpack.c.bf16 %v841, %v840
  %v847 = vsel %vm33, %v844, 0
  %v850 = vsel %vm33, %v845, 0
  %852 = vmatpush.bf16.msra.mxu0 0
  %853 = vmatpush.bf16.msra.mxu0 0
  %854 = vmatpush.bf16.msra.mxu0 0
  %855 = vmatpush.bf16.msra.mxu0 0
  %856 = vmatpush.bf16.msra.mxu0 0
  %857 = vmatpush.bf16.msra.mxu0 0
  %858 = vmatpush.bf16.msra.mxu0 %v162
  %859 = vmatpush.bf16.msra.mxu0 %v161
  %860 = vmatmul.bf16.gmra.mxu0 %v847
  %v861 = vpop.f32.mrf.mxu0
  %v862 = vadd.f32 0.0, %v861
  %v863 = vpop.f32.mrf.mxu0
  %v864 = vadd.f32 0.0, %v863
  %865 = vmatmul.bf16.gmra.mxu0 %v850
  %v866 = vpop.f32.mrf.mxu0
  %v867 = vadd.f32 0.0, %v866
  %v868 = vpop.f32.mrf.mxu0
  %v869 = vadd.f32 0.0, %v868
  %870 = vdwg.mxu0
  %v872 = vsel %vm226, %v842, 0
  %v875 = vsel %vm226, %v843, 0
  %877 = vmatpush.bf16.msra.mxu0 0
  %878 = vmatpush.bf16.msra.mxu0 0
  %879 = vmatpush.bf16.msra.mxu0 %v219
  %880 = vmatpush.bf16.msra.mxu0 %v218
  %881 = vmatpush.bf16.msra.mxu0 %v217
  %882 = vmatpush.bf16.msra.mxu0 %v216
  %883 = vmatpush.bf16.msra.mxu0 %v215
  %884 = vmatpush.bf16.msra.mxu0 %v214
  %885 = vmatmul.bf16.gmra.mxu0 %v872
  %v886 = vpop.f32.mrf.mxu0
  %v887 = vadd.f32 %v862, %v886
  %v888 = vpop.f32.mrf.mxu0
  %v889 = vadd.f32 %v864, %v888
  %890 = vmatmul.bf16.gmra.mxu0 %v875
  %v891 = vpop.f32.mrf.mxu0
  %v892 = vadd.f32 %v867, %v891
  %v893 = vpop.f32.mrf.mxu0
  %v894 = vadd.f32 %v869, %v893
  %895 = vdwg.mxu0
  %v896 = vadd.f32 %v887, %v253
  %v897 = vadd.f32 %v889, %v253
  %v898 = vadd.f32 %v892, %v253
  %v899 = vadd.f32 %v894, %v253
  %v900 = vxor.u32 %v896, 2147483648
  %v901 = vxor.u32 %v897, 2147483648
  %v902 = vxor.u32 %v898, 2147483648
  %v903 = vxor.u32 %v899, 2147483648
  %v904 = vmul.f32 %v900, 1.442695
  %v905 = vpow.pop %v904
  %v906 = vmul.f32 %v901, 1.442695
  %v907 = vpow.pop %v906
  %v908 = vmul.f32 %v902, 1.442695
  %v909 = vpow.pop %v908
  %v910 = vmul.f32 %v903, 1.442695
  %v911 = vpow.pop %v910
  %v912 = vadd.f32 %v905, 1.0
  %v913 = vadd.f32 %v907, 1.0
  %v914 = vadd.f32 %v909, 1.0
  %v915 = vadd.f32 %v911, 1.0
  %v916 = vrcp.pop %v912
  %v917 = vmul.f32 %v912, %v916
  %v918 = vsub.f32 1.0, %v917
  %v919 = vmul.f32 %v916, %v918
  %v920 = vadd.f32 %v916, %v919
  %vm921 = vweird.f32 %v912
  %vm922 = vweird.f32 %v916
  %vm923 = vmor %vm921, %vm922
  %v924 = vsel %vm923, %v916, %v920
  %v925 = vand.u32 2147483647, %v912
  %vm926 = vcmp.eq.f32.partialorder %v925, 8.507059e+37
  %v927 = vand.u32 %v912, 2147483648
  %v928 = vor.u32 1.1754944e-38, %v927
  %v929 = vsel %vm926, %v928, %v924
  %v930 = vmul.f32 1.0, %v929
  %v931 = vrcp.pop %v913
  %v932 = vmul.f32 %v913, %v931
  %v933 = vsub.f32 1.0, %v932
  %v934 = vmul.f32 %v931, %v933
  %v935 = vadd.f32 %v931, %v934
  %vm936 = vweird.f32 %v913
  %vm937 = vweird.f32 %v931
  %vm938 = vmor %vm936, %vm937
  %v939 = vsel %vm938, %v931, %v935
  %v940 = vand.u32 2147483647, %v913
  %vm941 = vcmp.eq.f32.partialorder %v940, 8.507059e+37
  %v942 = vand.u32 %v913, 2147483648
  %v943 = vor.u32 1.1754944e-38, %v942
  %v944 = vsel %vm941, %v943, %v939
  %v945 = vmul.f32 1.0, %v944
  %v946 = vrcp.pop %v914
  %v947 = vmul.f32 %v914, %v946
  %v948 = vsub.f32 1.0, %v947
  %v949 = vmul.f32 %v946, %v948
  %v950 = vadd.f32 %v946, %v949
  %vm951 = vweird.f32 %v914
  %vm952 = vweird.f32 %v946
  %vm953 = vmor %vm951, %vm952
  %v954 = vsel %vm953, %v946, %v950
  %v955 = vand.u32 2147483647, %v914
  %vm956 = vcmp.eq.f32.partialorder %v955, 8.507059e+37
  %v957 = vand.u32 %v914, 2147483648
  %v958 = vor.u32 1.1754944e-38, %v957
  %v959 = vsel %vm956, %v958, %v954
  %v960 = vmul.f32 1.0, %v959
  %v961 = vrcp.pop %v915
  %v962 = vmul.f32 %v915, %v961
  %v963 = vsub.f32 1.0, %v962
  %v964 = vmul.f32 %v961, %v963
  %v965 = vadd.f32 %v961, %v964
  %vm966 = vweird.f32 %v915
  %vm967 = vweird.f32 %v961
  %vm968 = vmor %vm966, %vm967
  %v969 = vsel %vm968, %v961, %v965
  %v970 = vand.u32 2147483647, %v915
  %vm971 = vcmp.eq.f32.partialorder %v970, 8.507059e+37
  %v972 = vand.u32 %v915, 2147483648
  %v973 = vor.u32 1.1754944e-38, %v972
  %v974 = vsel %vm971, %v973, %v969
  %v975 = vmul.f32 1.0, %v974
  %980 = vrot.lane.b32.xlu0 %v930, 96
  %v981 = vpop.permute.xlu0 %980
  %982 = vrot.lane.b32.xlu0 %v945, 96
  %v983 = vpop.permute.xlu0 %982
  %984 = vrot.lane.b32.xlu0 %v960, 96
  %v985 = vpop.permute.xlu0 %984
  %986 = vrot.lane.b32.xlu0 %v975, 96
  %v987 = vpop.permute.xlu0 %986
  %v992 = vmul.f32 %v838, %v981
  %v993 = vmul.f32 %v839, %v983
  %v994 = vmul.f32 %v840, %v985
  %v995 = vmul.f32 %v841, %v987
  %v996 = vpack.c.bf16 %v993, %v992
  %v997 = vpack.c.bf16 %v995, %v994
  %v999 = vsel %vm33, %v996, 0
  %v1002 = vsel %vm33, %v997, 0
  %1004 = vmatpush.bf16.msra.mxu0 0
  %1005 = vmatpush.bf16.msra.mxu0 0
  %1006 = vmatpush.bf16.msra.mxu0 0
  %1007 = vmatpush.bf16.msra.mxu0 0
  %1008 = vmatpush.bf16.msra.mxu0 0
  %1009 = vmatpush.bf16.msra.mxu0 0
  %1010 = vmatpush.bf16.msra.mxu0 %v366
  %1011 = vmatpush.bf16.msra.mxu0 %v365
  %1012 = vmatmul.bf16.gmra.mxu0 %v999
  %v1013 = vpop.f32.mrf.mxu0
  %v1014 = vadd.f32 0.0, %v1013
  %v1015 = vpop.f32.mrf.mxu0
  %v1016 = vadd.f32 0.0, %v1015
  %1017 = vmatmul.bf16.gmra.mxu0 %v1002
  %v1018 = vpop.f32.mrf.mxu0
  %v1019 = vadd.f32 0.0, %v1018
  %v1020 = vpop.f32.mrf.mxu0
  %v1021 = vadd.f32 0.0, %v1020
  %1022 = vdwg.mxu0
  %1027 = vrot.lane.b32.xlu0 %v1014, 64
  %v1028 = vpop.permute.xlu0 %1027
  %1029 = vrot.lane.b32.xlu0 %v1016, 64
  %v1030 = vpop.permute.xlu0 %1029
  %1031 = vrot.lane.b32.xlu0 %v1019, 64
  %v1032 = vpop.permute.xlu0 %1031
  %1033 = vrot.lane.b32.xlu0 %v1021, 64
  %v1034 = vpop.permute.xlu0 %1033
  %v1039 = vadd.f32 %v896, %v1028
  %v1040 = vadd.f32 %v897, %v1030
  %v1041 = vadd.f32 %v898, %v1032
  %v1042 = vadd.f32 %v899, %v1034
  %v1043 = vtanh.pop %v1039
  %v1044 = vtanh.pop %v1040
  %v1045 = vtanh.pop %v1041
  %v1046 = vtanh.pop %v1042
  %v1047 = vmul.f32 %v930, %v838
  %v1048 = vmul.f32 %v945, %v839
  %v1049 = vmul.f32 %v960, %v840
  %v1050 = vmul.f32 %v975, %v841
  %v1051 = vsub.f32 1.0, %v930
  %v1052 = vsub.f32 1.0, %v945
  %v1053 = vsub.f32 1.0, %v960
  %v1054 = vsub.f32 1.0, %v975
  %1059 = vrot.lane.b32.xlu0 %v1043, 64
  %v1060 = vpop.permute.xlu0 %1059
  %1061 = vrot.lane.b32.xlu0 %v1044, 64
  %v1062 = vpop.permute.xlu0 %1061
  %1063 = vrot.lane.b32.xlu0 %v1045, 64
  %v1064 = vpop.permute.xlu0 %1063
  %1065 = vrot.lane.b32.xlu0 %v1046, 64
  %v1066 = vpop.permute.xlu0 %1065
  %v1071 = vmul.f32 %v1051, %v1060
  %v1072 = vmul.f32 %v1052, %v1062
  %v1073 = vmul.f32 %v1053, %v1064
  %v1074 = vmul.f32 %v1054, %v1066
  %v1075 = vadd.f32 %v1047, %v1071
  %v1076 = vadd.f32 %v1048, %v1072
  %v1077 = vadd.f32 %v1049, %v1073
  %v1078 = vadd.f32 %v1050, %v1074
  %1079 = vst.msk [vmem:[#allocation2] sm:$0xff] %vm33, %v1075
  %1080 = vst.msk [vmem:[#allocation2 + $0x8] sm:$0xff] %vm33, %v1076
  %1081 = vst.msk [vmem:[#allocation2 + $0x10] sm:$0xff] %vm33, %v1077
  %1082 = vst.msk [vmem:[#allocation2 + $0x18] sm:$0xff] %vm33, %v1078
  %v1083 = vmax.f32 %v1075, 0.0
  %v1084 = vmax.f32 %v1076, 0.0
  %v1085 = vmax.f32 %v1077, 0.0
  %v1086 = vmax.f32 %v1078, 0.0
  %s1087 = scalar_lea.vmem [#allocation3], 64
  %1088 = vst.msk [vmem:[%s1087] sm:$0xff] %vm33, %v1083
  %1089 = vst.msk [vmem:[%s1087 + $0x8] sm:$0xff] %vm33, %v1084
  %1090 = vst.msk [vmem:[%s1087 + $0x10] sm:$0xff] %vm33, %v1085
  %1091 = vst.msk [vmem:[%s1087 + $0x18] sm:$0xff] %vm33, %v1086
  %s1092 = scalar_lea.vmem %s0, 48
  %v1093 = vld [vmem:[%s1092] sm:$0xf]
  %v1094 = vld [vmem:[%s1092 + $0x4] sm:$0xf]
  %v1095 = vld [vmem:[%s1092 + $0x8] sm:$0xf]
  %v1096 = vld [vmem:[%s1092 + $0xc] sm:$0xf]
  %v1101 = vunpack.c.l.b16 %v1093
  %v1102 = vunpack.c.l.b16 %v1094
  %v1103 = vunpack.c.l.b16 %v1095
  %v1104 = vunpack.c.l.b16 %v1096
  %v1105 = vpack.c.b16 %v1102, %v1101
  %v1106 = vpack.c.b16 %v1104, %v1103
  %v1108 = vsel %vm78, %v1105, 0
  %v1111 = vsel %vm78, %v1106, 0
  %1113 = vmatpush.bf16.msra.mxu0 0
  %1114 = vmatpush.bf16.msra.mxu0 0
  %1115 = vmatpush.bf16.msra.mxu0 0
  %1116 = vmatpush.bf16.msra.mxu0 0
  %1117 = vmatpush.bf16.msra.mxu0 0
  %1118 = vmatpush.bf16.msra.mxu0 0
  %1119 = vmatpush.bf16.msra.mxu0 0
  %1120 = vmatpush.bf16.msra.mxu0 %v87
  %1121 = vmatmul.bf16.gmra.mxu0 %v1108
  %v1122 = vpop.f32.mrf.mxu0
  %v1123 = vadd.f32 0.0, %v1122
  %v1124 = vpop.f32.mrf.mxu0
  %v1125 = vadd.f32 0.0, %v1124
  %1126 = vmatmul.bf16.gmra.mxu0 %v1111
  %v1127 = vpop.f32.mrf.mxu0
  %v1128 = vadd.f32 0.0, %v1127
  %v1129 = vpop.f32.mrf.mxu0
  %v1130 = vadd.f32 0.0, %v1129
  %1131 = vdwg.mxu0
  %v1132 = vpack.c.bf16 %v1125, %v1123
  %v1133 = vpack.c.bf16 %v1130, %v1128
  %1134 = vmatpush.bf16.msra.mxu0 0
  %1135 = vmatpush.bf16.msra.mxu0 0
  %1136 = vmatpush.bf16.msra.mxu0 0
  %1137 = vmatpush.bf16.msra.mxu0 0
  %1138 = vmatpush.bf16.msra.mxu0 0
  %1139 = vmatpush.bf16.msra.mxu0 0
  %1140 = vmatpush.bf16.msra.mxu0 %v1133
  %1141 = vmatpush.bf16.msra.mxu0 %v1132
  %1142 = vmatmul.bf16.gmra.mxu0 %v121
  %v1143 = vpop.f32.mrf.mxu0
  %v1144 = vadd.f32 0.0, %v1143
  %v1145 = vpop.f32.mrf.mxu0
  %v1146 = vadd.f32 0.0, %v1145
  %1147 = vmatmul.bf16.gmra.mxu0 %v124
  %v1148 = vpop.f32.mrf.mxu0
  %v1149 = vadd.f32 0.0, %v1148
  %v1150 = vpop.f32.mrf.mxu0
  %v1151 = vadd.f32 0.0, %v1150
  %1152 = vdwg.mxu0
  %v1153 = vld [vmem:[#allocation2] sm:$0xff]
  %v1154 = vld [vmem:[#allocation2 + $0x8] sm:$0xff]
  %v1155 = vld [vmem:[#allocation2 + $0x10] sm:$0xff]
  %v1156 = vld [vmem:[#allocation2 + $0x18] sm:$0xff]
  %v1157 = vpack.c.bf16 %v1146, %v1144
  %v1158 = vpack.c.bf16 %v1151, %v1149
  %v1159 = vpack.c.bf16 %v1154, %v1153
  %v1160 = vpack.c.bf16 %v1156, %v1155
  %v1162 = vsel %vm33, %v1159, 0
  %v1165 = vsel %vm33, %v1160, 0
  %1167 = vmatpush.bf16.msra.mxu0 0
  %1168 = vmatpush.bf16.msra.mxu0 0
  %1169 = vmatpush.bf16.msra.mxu0 0
  %1170 = vmatpush.bf16.msra.mxu0 0
  %1171 = vmatpush.bf16.msra.mxu0 0
  %1172 = vmatpush.bf16.msra.mxu0 0
  %1173 = vmatpush.bf16.msra.mxu0 %v162
  %1174 = vmatpush.bf16.msra.mxu0 %v161
  %1175 = vmatmul.bf16.gmra.mxu0 %v1162
  %v1176 = vpop.f32.mrf.mxu0
  %v1177 = vadd.f32 0.0, %v1176
  %v1178 = vpop.f32.mrf.mxu0
  %v1179 = vadd.f32 0.0, %v1178
  %1180 = vmatmul.bf16.gmra.mxu0 %v1165
  %v1181 = vpop.f32.mrf.mxu0
  %v1182 = vadd.f32 0.0, %v1181
  %v1183 = vpop.f32.mrf.mxu0
  %v1184 = vadd.f32 0.0, %v1183
  %1185 = vdwg.mxu0
  %v1187 = vsel %vm226, %v1157, 0
  %v1190 = vsel %vm226, %v1158, 0
  %1192 = vmatpush.bf16.msra.mxu0 0
  %1193 = vmatpush.bf16.msra.mxu0 0
  %1194 = vmatpush.bf16.msra.mxu0 %v219
  %1195 = vmatpush.bf16.msra.mxu0 %v218
  %1196 = vmatpush.bf16.msra.mxu0 %v217
  %1197 = vmatpush.bf16.msra.mxu0 %v216
  %1198 = vmatpush.bf16.msra.mxu0 %v215
  %1199 = vmatpush.bf16.msra.mxu0 %v214
  %1200 = vmatmul.bf16.gmra.mxu0 %v1187
  %v1201 = vpop.f32.mrf.mxu0
  %v1202 = vadd.f32 %v1177, %v1201
  %v1203 = vpop.f32.mrf.mxu0
  %v1204 = vadd.f32 %v1179, %v1203
  %1205 = vmatmul.bf16.gmra.mxu0 %v1190
  %v1206 = vpop.f32.mrf.mxu0
  %v1207 = vadd.f32 %v1182, %v1206
  %v1208 = vpop.f32.mrf.mxu0
  %v1209 = vadd.f32 %v1184, %v1208
  %1210 = vdwg.mxu0
  %v1211 = vadd.f32 %v1202, %v253
  %v1212 = vadd.f32 %v1204, %v253
  %v1213 = vadd.f32 %v1207, %v253
  %v1214 = vadd.f32 %v1209, %v253
  %v1215 = vxor.u32 %v1211, 2147483648
  %v1216 = vxor.u32 %v1212, 2147483648
  %v1217 = vxor.u32 %v1213, 2147483648
  %v1218 = vxor.u32 %v1214, 2147483648
  %v1219 = vmul.f32 %v1215, 1.442695
  %v1220 = vpow.pop %v1219
  %v1221 = vmul.f32 %v1216, 1.442695
  %v1222 = vpow.pop %v1221
  %v1223 = vmul.f32 %v1217, 1.442695
  %v1224 = vpow.pop %v1223
  %v1225 = vmul.f32 %v1218, 1.442695
  %v1226 = vpow.pop %v1225
  %v1227 = vadd.f32 %v1220, 1.0
  %v1228 = vadd.f32 %v1222, 1.0
  %v1229 = vadd.f32 %v1224, 1.0
  %v1230 = vadd.f32 %v1226, 1.0
  %v1231 = vrcp.pop %v1227
  %v1232 = vmul.f32 %v1227, %v1231
  %v1233 = vsub.f32 1.0, %v1232
  %v1234 = vmul.f32 %v1231, %v1233
  %v1235 = vadd.f32 %v1231, %v1234
  %vm1236 = vweird.f32 %v1227
  %vm1237 = vweird.f32 %v1231
  %vm1238 = vmor %vm1236, %vm1237
  %v1239 = vsel %vm1238, %v1231, %v1235
  %v1240 = vand.u32 2147483647, %v1227
  %vm1241 = vcmp.eq.f32.partialorder %v1240, 8.507059e+37
  %v1242 = vand.u32 %v1227, 2147483648
  %v1243 = vor.u32 1.1754944e-38, %v1242
  %v1244 = vsel %vm1241, %v1243, %v1239
  %v1245 = vmul.f32 1.0, %v1244
  %v1246 = vrcp.pop %v1228
  %v1247 = vmul.f32 %v1228, %v1246
  %v1248 = vsub.f32 1.0, %v1247
  %v1249 = vmul.f32 %v1246, %v1248
  %v1250 = vadd.f32 %v1246, %v1249
  %vm1251 = vweird.f32 %v1228
  %vm1252 = vweird.f32 %v1246
  %vm1253 = vmor %vm1251, %vm1252
  %v1254 = vsel %vm1253, %v1246, %v1250
  %v1255 = vand.u32 2147483647, %v1228
  %vm1256 = vcmp.eq.f32.partialorder %v1255, 8.507059e+37
  %v1257 = vand.u32 %v1228, 2147483648
  %v1258 = vor.u32 1.1754944e-38, %v1257
  %v1259 = vsel %vm1256, %v1258, %v1254
  %v1260 = vmul.f32 1.0, %v1259
  %v1261 = vrcp.pop %v1229
  %v1262 = vmul.f32 %v1229, %v1261
  %v1263 = vsub.f32 1.0, %v1262
  %v1264 = vmul.f32 %v1261, %v1263
  %v1265 = vadd.f32 %v1261, %v1264
  %vm1266 = vweird.f32 %v1229
  %vm1267 = vweird.f32 %v1261
  %vm1268 = vmor %vm1266, %vm1267
  %v1269 = vsel %vm1268, %v1261, %v1265
  %v1270 = vand.u32 2147483647, %v1229
  %vm1271 = vcmp.eq.f32.partialorder %v1270, 8.507059e+37
  %v1272 = vand.u32 %v1229, 2147483648
  %v1273 = vor.u32 1.1754944e-38, %v1272
  %v1274 = vsel %vm1271, %v1273, %v1269
  %v1275 = vmul.f32 1.0, %v1274
  %v1276 = vrcp.pop %v1230
  %v1277 = vmul.f32 %v1230, %v1276
  %v1278 = vsub.f32 1.0, %v1277
  %v1279 = vmul.f32 %v1276, %v1278
  %v1280 = vadd.f32 %v1276, %v1279
  %vm1281 = vweird.f32 %v1230
  %vm1282 = vweird.f32 %v1276
  %vm1283 = vmor %vm1281, %vm1282
  %v1284 = vsel %vm1283, %v1276, %v1280
  %v1285 = vand.u32 2147483647, %v1230
  %vm1286 = vcmp.eq.f32.partialorder %v1285, 8.507059e+37
  %v1287 = vand.u32 %v1230, 2147483648
  %v1288 = vor.u32 1.1754944e-38, %v1287
  %v1289 = vsel %vm1286, %v1288, %v1284
  %v1290 = vmul.f32 1.0, %v1289
  %1295 = vrot.lane.b32.xlu0 %v1245, 96
  %v1296 = vpop.permute.xlu0 %1295
  %1297 = vrot.lane.b32.xlu0 %v1260, 96
  %v1298 = vpop.permute.xlu0 %1297
  %1299 = vrot.lane.b32.xlu0 %v1275, 96
  %v1300 = vpop.permute.xlu0 %1299
  %1301 = vrot.lane.b32.xlu0 %v1290, 96
  %v1302 = vpop.permute.xlu0 %1301
  %v1307 = vmul.f32 %v1153, %v1296
  %v1308 = vmul.f32 %v1154, %v1298
  %v1309 = vmul.f32 %v1155, %v1300
  %v1310 = vmul.f32 %v1156, %v1302
  %v1311 = vpack.c.bf16 %v1308, %v1307
  %v1312 = vpack.c.bf16 %v1310, %v1309
  %v1314 = vsel %vm33, %v1311, 0
  %v1317 = vsel %vm33, %v1312, 0
  %1319 = vmatpush.bf16.msra.mxu0 0
  %1320 = vmatpush.bf16.msra.mxu0 0
  %1321 = vmatpush.bf16.msra.mxu0 0
  %1322 = vmatpush.bf16.msra.mxu0 0
  %1323 = vmatpush.bf16.msra.mxu0 0
  %1324 = vmatpush.bf16.msra.mxu0 0
  %1325 = vmatpush.bf16.msra.mxu0 %v366
  %1326 = vmatpush.bf16.msra.mxu0 %v365
  %1327 = vmatmul.bf16.gmra.mxu0 %v1314
  %v1328 = vpop.f32.mrf.mxu0
  %v1329 = vadd.f32 0.0, %v1328
  %v1330 = vpop.f32.mrf.mxu0
  %v1331 = vadd.f32 0.0, %v1330
  %1332 = vmatmul.bf16.gmra.mxu0 %v1317
  %v1333 = vpop.f32.mrf.mxu0
  %v1334 = vadd.f32 0.0, %v1333
  %v1335 = vpop.f32.mrf.mxu0
  %v1336 = vadd.f32 0.0, %v1335
  %1337 = vdwg.mxu0
  %1342 = vrot.lane.b32.xlu0 %v1329, 64
  %v1343 = vpop.permute.xlu0 %1342
  %1344 = vrot.lane.b32.xlu0 %v1331, 64
  %v1345 = vpop.permute.xlu0 %1344
  %1346 = vrot.lane.b32.xlu0 %v1334, 64
  %v1347 = vpop.permute.xlu0 %1346
  %1348 = vrot.lane.b32.xlu0 %v1336, 64
  %v1349 = vpop.permute.xlu0 %1348
  %v1354 = vadd.f32 %v1211, %v1343
  %v1355 = vadd.f32 %v1212, %v1345
  %v1356 = vadd.f32 %v1213, %v1347
  %v1357 = vadd.f32 %v1214, %v1349
  %v1358 = vtanh.pop %v1354
  %v1359 = vtanh.pop %v1355
  %v1360 = vtanh.pop %v1356
  %v1361 = vtanh.pop %v1357
  %v1362 = vmul.f32 %v1245, %v1153
  %v1363 = vmul.f32 %v1260, %v1154
  %v1364 = vmul.f32 %v1275, %v1155
  %v1365 = vmul.f32 %v1290, %v1156
  %v1366 = vsub.f32 1.0, %v1245
  %v1367 = vsub.f32 1.0, %v1260
  %v1368 = vsub.f32 1.0, %v1275
  %v1369 = vsub.f32 1.0, %v1290
  %1374 = vrot.lane.b32.xlu0 %v1358, 64
  %v1375 = vpop.permute.xlu0 %1374
  %1376 = vrot.lane.b32.xlu0 %v1359, 64
  %v1377 = vpop.permute.xlu0 %1376
  %1378 = vrot.lane.b32.xlu0 %v1360, 64
  %v1379 = vpop.permute.xlu0 %1378
  %1380 = vrot.lane.b32.xlu0 %v1361, 64
  %v1381 = vpop.permute.xlu0 %1380
  %v1386 = vmul.f32 %v1366, %v1375
  %v1387 = vmul.f32 %v1367, %v1377
  %v1388 = vmul.f32 %v1368, %v1379
  %v1389 = vmul.f32 %v1369, %v1381
  %v1390 = vadd.f32 %v1362, %v1386
  %v1391 = vadd.f32 %v1363, %v1387
  %v1392 = vadd.f32 %v1364, %v1388
  %v1393 = vadd.f32 %v1365, %v1389
  %1394 = vst.msk [vmem:[#allocation2] sm:$0xff] %vm33, %v1390
  %1395 = vst.msk [vmem:[#allocation2 + $0x8] sm:$0xff] %vm33, %v1391
  %1396 = vst.msk [vmem:[#allocation2 + $0x10] sm:$0xff] %vm33, %v1392
  %1397 = vst.msk [vmem:[#allocation2 + $0x18] sm:$0xff] %vm33, %v1393
  %v1398 = vmax.f32 %v1390, 0.0
  %v1399 = vmax.f32 %v1391, 0.0
  %v1400 = vmax.f32 %v1392, 0.0
  %v1401 = vmax.f32 %v1393, 0.0
  %s1402 = scalar_lea.vmem [#allocation3], 96
  %1403 = vst.msk [vmem:[%s1402] sm:$0xff] %vm33, %v1398
  %1404 = vst.msk [vmem:[%s1402 + $0x8] sm:$0xff] %vm33, %v1399
  %1405 = vst.msk [vmem:[%s1402 + $0x10] sm:$0xff] %vm33, %v1400
  %1406 = vst.msk [vmem:[%s1402 + $0x18] sm:$0xff] %vm33, %v1401
  %s1407 = scalar_lea.vmem %s0, 64
  %v1408 = vld [vmem:[%s1407] sm:$0xf]
  %v1409 = vld [vmem:[%s1407 + $0x4] sm:$0xf]
  %v1410 = vld [vmem:[%s1407 + $0x8] sm:$0xf]
  %v1411 = vld [vmem:[%s1407 + $0xc] sm:$0xf]
  %v1416 = vunpack.c.l.b16 %v1408
  %v1417 = vunpack.c.l.b16 %v1409
  %v1418 = vunpack.c.l.b16 %v1410
  %v1419 = vunpack.c.l.b16 %v1411
  %v1420 = vpack.c.b16 %v1417, %v1416
  %v1421 = vpack.c.b16 %v1419, %v1418
  %v1423 = vsel %vm78, %v1420, 0
  %v1426 = vsel %vm78, %v1421, 0
  %1428 = vmatpush.bf16.msra.mxu0 0
  %1429 = vmatpush.bf16.msra.mxu0 0
  %1430 = vmatpush.bf16.msra.mxu0 0
  %1431 = vmatpush.bf16.msra.mxu0 0
  %1432 = vmatpush.bf16.msra.mxu0 0
  %1433 = vmatpush.bf16.msra.mxu0 0
  %1434 = vmatpush.bf16.msra.mxu0 0
  %1435 = vmatpush.bf16.msra.mxu0 %v87
  %1436 = vmatmul.bf16.gmra.mxu0 %v1423
  %v1437 = vpop.f32.mrf.mxu0
  %v1438 = vadd.f32 0.0, %v1437
  %v1439 = vpop.f32.mrf.mxu0
  %v1440 = vadd.f32 0.0, %v1439
  %1441 = vmatmul.bf16.gmra.mxu0 %v1426
  %v1442 = vpop.f32.mrf.mxu0
  %v1443 = vadd.f32 0.0, %v1442
  %v1444 = vpop.f32.mrf.mxu0
  %v1445 = vadd.f32 0.0, %v1444
  %1446 = vdwg.mxu0
  %v1447 = vpack.c.bf16 %v1440, %v1438
  %v1448 = vpack.c.bf16 %v1445, %v1443
  %1449 = vmatpush.bf16.msra.mxu0 0
  %1450 = vmatpush.bf16.msra.mxu0 0
  %1451 = vmatpush.bf16.msra.mxu0 0
  %1452 = vmatpush.bf16.msra.mxu0 0
  %1453 = vmatpush.bf16.msra.mxu0 0
  %1454 = vmatpush.bf16.msra.mxu0 0
  %1455 = vmatpush.bf16.msra.mxu0 %v1448
  %1456 = vmatpush.bf16.msra.mxu0 %v1447
  %1457 = vmatmul.bf16.gmra.mxu0 %v121
  %v1458 = vpop.f32.mrf.mxu0
  %v1459 = vadd.f32 0.0, %v1458
  %v1460 = vpop.f32.mrf.mxu0
  %v1461 = vadd.f32 0.0, %v1460
  %1462 = vmatmul.bf16.gmra.mxu0 %v124
  %v1463 = vpop.f32.mrf.mxu0
  %v1464 = vadd.f32 0.0, %v1463
  %v1465 = vpop.f32.mrf.mxu0
  %v1466 = vadd.f32 0.0, %v1465
  %1467 = vdwg.mxu0
  %v1468 = vld [vmem:[#allocation2] sm:$0xff]
  %v1469 = vld [vmem:[#allocation2 + $0x8] sm:$0xff]
  %v1470 = vld [vmem:[#allocation2 + $0x10] sm:$0xff]
  %v1471 = vld [vmem:[#allocation2 + $0x18] sm:$0xff]
  %v1472 = vpack.c.bf16 %v1461, %v1459
  %v1473 = vpack.c.bf16 %v1466, %v1464
  %v1474 = vpack.c.bf16 %v1469, %v1468
  %v1475 = vpack.c.bf16 %v1471, %v1470
  %v1477 = vsel %vm33, %v1474, 0
  %v1480 = vsel %vm33, %v1475, 0
  %1482 = vmatpush.bf16.msra.mxu0 0
  %1483 = vmatpush.bf16.msra.mxu0 0
  %1484 = vmatpush.bf16.msra.mxu0 0
  %1485 = vmatpush.bf16.msra.mxu0 0
  %1486 = vmatpush.bf16.msra.mxu0 0
  %1487 = vmatpush.bf16.msra.mxu0 0
  %1488 = vmatpush.bf16.msra.mxu0 %v162
  %1489 = vmatpush.bf16.msra.mxu0 %v161
  %1490 = vmatmul.bf16.gmra.mxu0 %v1477
  %v1491 = vpop.f32.mrf.mxu0
  %v1492 = vadd.f32 0.0, %v1491
  %v1493 = vpop.f32.mrf.mxu0
  %v1494 = vadd.f32 0.0, %v1493
  %1495 = vmatmul.bf16.gmra.mxu0 %v1480
  %v1496 = vpop.f32.mrf.mxu0
  %v1497 = vadd.f32 0.0, %v1496
  %v1498 = vpop.f32.mrf.mxu0
  %v1499 = vadd.f32 0.0, %v1498
  %1500 = vdwg.mxu0
  %v1502 = vsel %vm226, %v1472, 0
  %v1505 = vsel %vm226, %v1473, 0
  %1507 = vmatpush.bf16.msra.mxu0 0
  %1508 = vmatpush.bf16.msra.mxu0 0
  %1509 = vmatpush.bf16.msra.mxu0 %v219
  %1510 = vmatpush.bf16.msra.mxu0 %v218
  %1511 = vmatpush.bf16.msra.mxu0 %v217
  %1512 = vmatpush.bf16.msra.mxu0 %v216
  %1513 = vmatpush.bf16.msra.mxu0 %v215
  %1514 = vmatpush.bf16.msra.mxu0 %v214
  %1515 = vmatmul.bf16.gmra.mxu0 %v1502
  %v1516 = vpop.f32.mrf.mxu0
  %v1517 = vadd.f32 %v1492, %v1516
  %v1518 = vpop.f32.mrf.mxu0
  %v1519 = vadd.f32 %v1494, %v1518
  %1520 = vmatmul.bf16.gmra.mxu0 %v1505
  %v1521 = vpop.f32.mrf.mxu0
  %v1522 = vadd.f32 %v1497, %v1521
  %v1523 = vpop.f32.mrf.mxu0
  %v1524 = vadd.f32 %v1499, %v1523
  %1525 = vdwg.mxu0
  %v1526 = vadd.f32 %v1517, %v253
  %v1527 = vadd.f32 %v1519, %v253
  %v1528 = vadd.f32 %v1522, %v253
  %v1529 = vadd.f32 %v1524, %v253
  %v1530 = vxor.u32 %v1526, 2147483648
  %v1531 = vxor.u32 %v1527, 2147483648
  %v1532 = vxor.u32 %v1528, 2147483648
  %v1533 = vxor.u32 %v1529, 2147483648
  %v1534 = vmul.f32 %v1530, 1.442695
  %v1535 = vpow.pop %v1534
  %v1536 = vmul.f32 %v1531, 1.442695
  %v1537 = vpow.pop %v1536
  %v1538 = vmul.f32 %v1532, 1.442695
  %v1539 = vpow.pop %v1538
  %v1540 = vmul.f32 %v1533, 1.442695
  %v1541 = vpow.pop %v1540
  %v1542 = vadd.f32 %v1535, 1.0
  %v1543 = vadd.f32 %v1537, 1.0
  %v1544 = vadd.f32 %v1539, 1.0
  %v1545 = vadd.f32 %v1541, 1.0
  %v1546 = vrcp.pop %v1542
  %v1547 = vmul.f32 %v1542, %v1546
  %v1548 = vsub.f32 1.0, %v1547
  %v1549 = vmul.f32 %v1546, %v1548
  %v1550 = vadd.f32 %v1546, %v1549
  %vm1551 = vweird.f32 %v1542
  %vm1552 = vweird.f32 %v1546
  %vm1553 = vmor %vm1551, %vm1552
  %v1554 = vsel %vm1553, %v1546, %v1550
  %v1555 = vand.u32 2147483647, %v1542
  %vm1556 = vcmp.eq.f32.partialorder %v1555, 8.507059e+37
  %v1557 = vand.u32 %v1542, 2147483648
  %v1558 = vor.u32 1.1754944e-38, %v1557
  %v1559 = vsel %vm1556, %v1558, %v1554
  %v1560 = vmul.f32 1.0, %v1559
  %v1561 = vrcp.pop %v1543
  %v1562 = vmul.f32 %v1543, %v1561
  %v1563 = vsub.f32 1.0, %v1562
  %v1564 = vmul.f32 %v1561, %v1563
  %v1565 = vadd.f32 %v1561, %v1564
  %vm1566 = vweird.f32 %v1543
  %vm1567 = vweird.f32 %v1561
  %vm1568 = vmor %vm1566, %vm1567
  %v1569 = vsel %vm1568, %v1561, %v1565
  %v1570 = vand.u32 2147483647, %v1543
  %vm1571 = vcmp.eq.f32.partialorder %v1570, 8.507059e+37
  %v1572 = vand.u32 %v1543, 2147483648
  %v1573 = vor.u32 1.1754944e-38, %v1572
  %v1574 = vsel %vm1571, %v1573, %v1569
  %v1575 = vmul.f32 1.0, %v1574
  %v1576 = vrcp.pop %v1544
  %v1577 = vmul.f32 %v1544, %v1576
  %v1578 = vsub.f32 1.0, %v1577
  %v1579 = vmul.f32 %v1576, %v1578
  %v1580 = vadd.f32 %v1576, %v1579
  %vm1581 = vweird.f32 %v1544
  %vm1582 = vweird.f32 %v1576
  %vm1583 = vmor %vm1581, %vm1582
  %v1584 = vsel %vm1583, %v1576, %v1580
  %v1585 = vand.u32 2147483647, %v1544
  %vm1586 = vcmp.eq.f32.partialorder %v1585, 8.507059e+37
  %v1587 = vand.u32 %v1544, 2147483648
  %v1588 = vor.u32 1.1754944e-38, %v1587
  %v1589 = vsel %vm1586, %v1588, %v1584
  %v1590 = vmul.f32 1.0, %v1589
  %v1591 = vrcp.pop %v1545
  %v1592 = vmul.f32 %v1545, %v1591
  %v1593 = vsub.f32 1.0, %v1592
  %v1594 = vmul.f32 %v1591, %v1593
  %v1595 = vadd.f32 %v1591, %v1594
  %vm1596 = vweird.f32 %v1545
  %vm1597 = vweird.f32 %v1591
  %vm1598 = vmor %vm1596, %vm1597
  %v1599 = vsel %vm1598, %v1591, %v1595
  %v1600 = vand.u32 2147483647, %v1545
  %vm1601 = vcmp.eq.f32.partialorder %v1600, 8.507059e+37
  %v1602 = vand.u32 %v1545, 2147483648
  %v1603 = vor.u32 1.1754944e-38, %v1602
  %v1604 = vsel %vm1601, %v1603, %v1599
  %v1605 = vmul.f32 1.0, %v1604
  %1610 = vrot.lane.b32.xlu0 %v1560, 96
  %v1611 = vpop.permute.xlu0 %1610
  %1612 = vrot.lane.b32.xlu0 %v1575, 96
  %v1613 = vpop.permute.xlu0 %1612
  %1614 = vrot.lane.b32.xlu0 %v1590, 96
  %v1615 = vpop.permute.xlu0 %1614
  %1616 = vrot.lane.b32.xlu0 %v1605, 96
  %v1617 = vpop.permute.xlu0 %1616
  %v1622 = vmul.f32 %v1468, %v1611
  %v1623 = vmul.f32 %v1469, %v1613
  %v1624 = vmul.f32 %v1470, %v1615
  %v1625 = vmul.f32 %v1471, %v1617
  %v1626 = vpack.c.bf16 %v1623, %v1622
  %v1627 = vpack.c.bf16 %v1625, %v1624
  %v1629 = vsel %vm33, %v1626, 0
  %v1632 = vsel %vm33, %v1627, 0
  %1634 = vmatpush.bf16.msra.mxu0 0
  %1635 = vmatpush.bf16.msra.mxu0 0
  %1636 = vmatpush.bf16.msra.mxu0 0
  %1637 = vmatpush.bf16.msra.mxu0 0
  %1638 = vmatpush.bf16.msra.mxu0 0
  %1639 = vmatpush.bf16.msra.mxu0 0
  %1640 = vmatpush.bf16.msra.mxu0 %v366
  %1641 = vmatpush.bf16.msra.mxu0 %v365
  %1642 = vmatmul.bf16.gmra.mxu0 %v1629
  %v1643 = vpop.f32.mrf.mxu0
  %v1644 = vadd.f32 0.0, %v1643
  %v1645 = vpop.f32.mrf.mxu0
  %v1646 = vadd.f32 0.0, %v1645
  %1647 = vmatmul.bf16.gmra.mxu0 %v1632
  %v1648 = vpop.f32.mrf.mxu0
  %v1649 = vadd.f32 0.0, %v1648
  %v1650 = vpop.f32.mrf.mxu0
  %v1651 = vadd.f32 0.0, %v1650
  %1652 = vdwg.mxu0
  %1657 = vrot.lane.b32.xlu0 %v1644, 64
  %v1658 = vpop.permute.xlu0 %1657
  %1659 = vrot.lane.b32.xlu0 %v1646, 64
  %v1660 = vpop.permute.xlu0 %1659
  %1661 = vrot.lane.b32.xlu0 %v1649, 64
  %v1662 = vpop.permute.xlu0 %1661
  %1663 = vrot.lane.b32.xlu0 %v1651, 64
  %v1664 = vpop.permute.xlu0 %1663
  %v1669 = vadd.f32 %v1526, %v1658
  %v1670 = vadd.f32 %v1527, %v1660
  %v1671 = vadd.f32 %v1528, %v1662
  %v1672 = vadd.f32 %v1529, %v1664
  %v1673 = vtanh.pop %v1669
  %v1674 = vtanh.pop %v1670
  %v1675 = vtanh.pop %v1671
  %v1676 = vtanh.pop %v1672
  %v1677 = vmul.f32 %v1560, %v1468
  %v1678 = vmul.f32 %v1575, %v1469
  %v1679 = vmul.f32 %v1590, %v1470
  %v1680 = vmul.f32 %v1605, %v1471
  %v1681 = vsub.f32 1.0, %v1560
  %v1682 = vsub.f32 1.0, %v1575
  %v1683 = vsub.f32 1.0, %v1590
  %v1684 = vsub.f32 1.0, %v1605
  %1689 = vrot.lane.b32.xlu0 %v1673, 64
  %v1690 = vpop.permute.xlu0 %1689
  %1691 = vrot.lane.b32.xlu0 %v1674, 64
  %v1692 = vpop.permute.xlu0 %1691
  %1693 = vrot.lane.b32.xlu0 %v1675, 64
  %v1694 = vpop.permute.xlu0 %1693
  %1695 = vrot.lane.b32.xlu0 %v1676, 64
  %v1696 = vpop.permute.xlu0 %1695
  %v1701 = vmul.f32 %v1681, %v1690
  %v1702 = vmul.f32 %v1682, %v1692
  %v1703 = vmul.f32 %v1683, %v1694
  %v1704 = vmul.f32 %v1684, %v1696
  %v1705 = vadd.f32 %v1677, %v1701
  %v1706 = vadd.f32 %v1678, %v1702
  %v1707 = vadd.f32 %v1679, %v1703
  %v1708 = vadd.f32 %v1680, %v1704
  %1709 = vst.msk [vmem:[#allocation2] sm:$0xff] %vm33, %v1705
  %1710 = vst.msk [vmem:[#allocation2 + $0x8] sm:$0xff] %vm33, %v1706
  %1711 = vst.msk [vmem:[#allocation2 + $0x10] sm:$0xff] %vm33, %v1707
  %1712 = vst.msk [vmem:[#allocation2 + $0x18] sm:$0xff] %vm33, %v1708
  %v1713 = vmax.f32 %v1705, 0.0
  %v1714 = vmax.f32 %v1706, 0.0
  %v1715 = vmax.f32 %v1707, 0.0
  %v1716 = vmax.f32 %v1708, 0.0
  %s1717 = scalar_lea.vmem [#allocation3], 128
  %1718 = vst.msk [vmem:[%s1717] sm:$0xff] %vm33, %v1713
  %1719 = vst.msk [vmem:[%s1717 + $0x8] sm:$0xff] %vm33, %v1714
  %1720 = vst.msk [vmem:[%s1717 + $0x10] sm:$0xff] %vm33, %v1715
  %1721 = vst.msk [vmem:[%s1717 + $0x18] sm:$0xff] %vm33, %v1716
  %s1722 = scalar_lea.vmem %s0, 80
  %v1723 = vld [vmem:[%s1722] sm:$0xf]
  %v1724 = vld [vmem:[%s1722 + $0x4] sm:$0xf]
  %v1725 = vld [vmem:[%s1722 + $0x8] sm:$0xf]
  %v1726 = vld [vmem:[%s1722 + $0xc] sm:$0xf]
  %v1731 = vunpack.c.l.b16 %v1723
  %v1732 = vunpack.c.l.b16 %v1724
  %v1733 = vunpack.c.l.b16 %v1725
  %v1734 = vunpack.c.l.b16 %v1726
  %v1735 = vpack.c.b16 %v1732, %v1731
  %v1736 = vpack.c.b16 %v1734, %v1733
  %v1738 = vsel %vm78, %v1735, 0
  %v1741 = vsel %vm78, %v1736, 0
  %1743 = vmatpush.bf16.msra.mxu0 0
  %1744 = vmatpush.bf16.msra.mxu0 0
  %1745 = vmatpush.bf16.msra.mxu0 0
  %1746 = vmatpush.bf16.msra.mxu0 0
  %1747 = vmatpush.bf16.msra.mxu0 0
  %1748 = vmatpush.bf16.msra.mxu0 0
  %1749 = vmatpush.bf16.msra.mxu0 0
  %1750 = vmatpush.bf16.msra.mxu0 %v87
  %1751 = vmatmul.bf16.gmra.mxu0 %v1738
  %v1752 = vpop.f32.mrf.mxu0
  %v1753 = vadd.f32 0.0, %v1752
  %v1754 = vpop.f32.mrf.mxu0
  %v1755 = vadd.f32 0.0, %v1754
  %1756 = vmatmul.bf16.gmra.mxu0 %v1741
  %v1757 = vpop.f32.mrf.mxu0
  %v1758 = vadd.f32 0.0, %v1757
  %v1759 = vpop.f32.mrf.mxu0
  %v1760 = vadd.f32 0.0, %v1759
  %1761 = vdwg.mxu0
  %v1762 = vpack.c.bf16 %v1755, %v1753
  %v1763 = vpack.c.bf16 %v1760, %v1758
  %1764 = vmatpush.bf16.msra.mxu0 0
  %1765 = vmatpush.bf16.msra.mxu0 0
  %1766 = vmatpush.bf16.msra.mxu0 0
  %1767 = vmatpush.bf16.msra.mxu0 0
  %1768 = vmatpush.bf16.msra.mxu0 0
  %1769 = vmatpush.bf16.msra.mxu0 0
  %1770 = vmatpush.bf16.msra.mxu0 %v1763
  %1771 = vmatpush.bf16.msra.mxu0 %v1762
  %1772 = vmatmul.bf16.gmra.mxu0 %v121
  %v1773 = vpop.f32.mrf.mxu0
  %v1774 = vadd.f32 0.0, %v1773
  %v1775 = vpop.f32.mrf.mxu0
  %v1776 = vadd.f32 0.0, %v1775
  %1777 = vmatmul.bf16.gmra.mxu0 %v124
  %v1778 = vpop.f32.mrf.mxu0
  %v1779 = vadd.f32 0.0, %v1778
  %v1780 = vpop.f32.mrf.mxu0
  %v1781 = vadd.f32 0.0, %v1780
  %1782 = vdwg.mxu0
  %v1783 = vld [vmem:[#allocation2] sm:$0xff]
  %v1784 = vld [vmem:[#allocation2 + $0x8] sm:$0xff]
  %v1785 = vld [vmem:[#allocation2 + $0x10] sm:$0xff]
  %v1786 = vld [vmem:[#allocation2 + $0x18] sm:$0xff]
  %v1787 = vpack.c.bf16 %v1776, %v1774
  %v1788 = vpack.c.bf16 %v1781, %v1779
  %v1789 = vpack.c.bf16 %v1784, %v1783
  %v1790 = vpack.c.bf16 %v1786, %v1785
  %v1792 = vsel %vm33, %v1789, 0
  %v1795 = vsel %vm33, %v1790, 0
  %1797 = vmatpush.bf16.msra.mxu0 0
  %1798 = vmatpush.bf16.msra.mxu0 0
  %1799 = vmatpush.bf16.msra.mxu0 0
  %1800 = vmatpush.bf16.msra.mxu0 0
  %1801 = vmatpush.bf16.msra.mxu0 0
  %1802 = vmatpush.bf16.msra.mxu0 0
  %1803 = vmatpush.bf16.msra.mxu0 %v162
  %1804 = vmatpush.bf16.msra.mxu0 %v161
  %1805 = vmatmul.bf16.gmra.mxu0 %v1792
  %v1806 = vpop.f32.mrf.mxu0
  %v1807 = vadd.f32 0.0, %v1806
  %v1808 = vpop.f32.mrf.mxu0
  %v1809 = vadd.f32 0.0, %v1808
  %1810 = vmatmul.bf16.gmra.mxu0 %v1795
  %v1811 = vpop.f32.mrf.mxu0
  %v1812 = vadd.f32 0.0, %v1811
  %v1813 = vpop.f32.mrf.mxu0
  %v1814 = vadd.f32 0.0, %v1813
  %1815 = vdwg.mxu0
  %v1817 = vsel %vm226, %v1787, 0
  %v1820 = vsel %vm226, %v1788, 0
  %1822 = vmatpush.bf16.msra.mxu0 0
  %1823 = vmatpush.bf16.msra.mxu0 0
  %1824 = vmatpush.bf16.msra.mxu0 %v219
  %1825 = vmatpush.bf16.msra.mxu0 %v218
  %1826 = vmatpush.bf16.msra.mxu0 %v217
  %1827 = vmatpush.bf16.msra.mxu0 %v216
  %1828 = vmatpush.bf16.msra.mxu0 %v215
  %1829 = vmatpush.bf16.msra.mxu0 %v214
  %1830 = vmatmul.bf16.gmra.mxu0 %v1817
  %v1831 = vpop.f32.mrf.mxu0
  %v1832 = vadd.f32 %v1807, %v1831
  %v1833 = vpop.f32.mrf.mxu0
  %v1834 = vadd.f32 %v1809, %v1833
  %1835 = vmatmul.bf16.gmra.mxu0 %v1820
  %v1836 = vpop.f32.mrf.mxu0
  %v1837 = vadd.f32 %v1812, %v1836
  %v1838 = vpop.f32.mrf.mxu0
  %v1839 = vadd.f32 %v1814, %v1838
  %1840 = vdwg.mxu0
  %v1841 = vadd.f32 %v1832, %v253
  %v1842 = vadd.f32 %v1834, %v253
  %v1843 = vadd.f32 %v1837, %v253
  %v1844 = vadd.f32 %v1839, %v253
  %v1845 = vxor.u32 %v1841, 2147483648
  %v1846 = vxor.u32 %v1842, 2147483648
  %v1847 = vxor.u32 %v1843, 2147483648
  %v1848 = vxor.u32 %v1844, 2147483648
  %v1849 = vmul.f32 %v1845, 1.442695
  %v1850 = vpow.pop %v1849
  %v1851 = vmul.f32 %v1846, 1.442695
  %v1852 = vpow.pop %v1851
  %v1853 = vmul.f32 %v1847, 1.442695
  %v1854 = vpow.pop %v1853
  %v1855 = vmul.f32 %v1848, 1.442695
  %v1856 = vpow.pop %v1855
  %v1857 = vadd.f32 %v1850, 1.0
  %v1858 = vadd.f32 %v1852, 1.0
  %v1859 = vadd.f32 %v1854, 1.0
  %v1860 = vadd.f32 %v1856, 1.0
  %v1861 = vrcp.pop %v1857
  %v1862 = vmul.f32 %v1857, %v1861
  %v1863 = vsub.f32 1.0, %v1862
  %v1864 = vmul.f32 %v1861, %v1863
  %v1865 = vadd.f32 %v1861, %v1864
  %vm1866 = vweird.f32 %v1857
  %vm1867 = vweird.f32 %v1861
  %vm1868 = vmor %vm1866, %vm1867
  %v1869 = vsel %vm1868, %v1861, %v1865
  %v1870 = vand.u32 2147483647, %v1857
  %vm1871 = vcmp.eq.f32.partialorder %v1870, 8.507059e+37
  %v1872 = vand.u32 %v1857, 2147483648
  %v1873 = vor.u32 1.1754944e-38, %v1872
  %v1874 = vsel %vm1871, %v1873, %v1869
  %v1875 = vmul.f32 1.0, %v1874
  %v1876 = vrcp.pop %v1858
  %v1877 = vmul.f32 %v1858, %v1876
  %v1878 = vsub.f32 1.0, %v1877
  %v1879 = vmul.f32 %v1876, %v1878
  %v1880 = vadd.f32 %v1876, %v1879
  %vm1881 = vweird.f32 %v1858
  %vm1882 = vweird.f32 %v1876
  %vm1883 = vmor %vm1881, %vm1882
  %v1884 = vsel %vm1883, %v1876, %v1880
  %v1885 = vand.u32 2147483647, %v1858
  %vm1886 = vcmp.eq.f32.partialorder %v1885, 8.507059e+37
  %v1887 = vand.u32 %v1858, 2147483648
  %v1888 = vor.u32 1.1754944e-38, %v1887
  %v1889 = vsel %vm1886, %v1888, %v1884
  %v1890 = vmul.f32 1.0, %v1889
  %v1891 = vrcp.pop %v1859
  %v1892 = vmul.f32 %v1859, %v1891
  %v1893 = vsub.f32 1.0, %v1892
  %v1894 = vmul.f32 %v1891, %v1893
  %v1895 = vadd.f32 %v1891, %v1894
  %vm1896 = vweird.f32 %v1859
  %vm1897 = vweird.f32 %v1891
  %vm1898 = vmor %vm1896, %vm1897
  %v1899 = vsel %vm1898, %v1891, %v1895
  %v1900 = vand.u32 2147483647, %v1859
  %vm1901 = vcmp.eq.f32.partialorder %v1900, 8.507059e+37
  %v1902 = vand.u32 %v1859, 2147483648
  %v1903 = vor.u32 1.1754944e-38, %v1902
  %v1904 = vsel %vm1901, %v1903, %v1899
  %v1905 = vmul.f32 1.0, %v1904
  %v1906 = vrcp.pop %v1860
  %v1907 = vmul.f32 %v1860, %v1906
  %v1908 = vsub.f32 1.0, %v1907
  %v1909 = vmul.f32 %v1906, %v1908
  %v1910 = vadd.f32 %v1906, %v1909
  %vm1911 = vweird.f32 %v1860
  %vm1912 = vweird.f32 %v1906
  %vm1913 = vmor %vm1911, %vm1912
  %v1914 = vsel %vm1913, %v1906, %v1910
  %v1915 = vand.u32 2147483647, %v1860
  %vm1916 = vcmp.eq.f32.partialorder %v1915, 8.507059e+37
  %v1917 = vand.u32 %v1860, 2147483648
  %v1918 = vor.u32 1.1754944e-38, %v1917
  %v1919 = vsel %vm1916, %v1918, %v1914
  %v1920 = vmul.f32 1.0, %v1919
  %1925 = vrot.lane.b32.xlu0 %v1875, 96
  %v1926 = vpop.permute.xlu0 %1925
  %1927 = vrot.lane.b32.xlu0 %v1890, 96
  %v1928 = vpop.permute.xlu0 %1927
  %1929 = vrot.lane.b32.xlu0 %v1905, 96
  %v1930 = vpop.permute.xlu0 %1929
  %1931 = vrot.lane.b32.xlu0 %v1920, 96
  %v1932 = vpop.permute.xlu0 %1931
  %v1937 = vmul.f32 %v1783, %v1926
  %v1938 = vmul.f32 %v1784, %v1928
  %v1939 = vmul.f32 %v1785, %v1930
  %v1940 = vmul.f32 %v1786, %v1932
  %v1941 = vpack.c.bf16 %v1938, %v1937
  %v1942 = vpack.c.bf16 %v1940, %v1939
  %v1944 = vsel %vm33, %v1941, 0
  %v1947 = vsel %vm33, %v1942, 0
  %1949 = vmatpush.bf16.msra.mxu0 0
  %1950 = vmatpush.bf16.msra.mxu0 0
  %1951 = vmatpush.bf16.msra.mxu0 0
  %1952 = vmatpush.bf16.msra.mxu0 0
  %1953 = vmatpush.bf16.msra.mxu0 0
  %1954 = vmatpush.bf16.msra.mxu0 0
  %1955 = vmatpush.bf16.msra.mxu0 %v366
  %1956 = vmatpush.bf16.msra.mxu0 %v365
  %1957 = vmatmul.bf16.gmra.mxu0 %v1944
  %v1958 = vpop.f32.mrf.mxu0
  %v1959 = vadd.f32 0.0, %v1958
  %v1960 = vpop.f32.mrf.mxu0
  %v1961 = vadd.f32 0.0, %v1960
  %1962 = vmatmul.bf16.gmra.mxu0 %v1947
  %v1963 = vpop.f32.mrf.mxu0
  %v1964 = vadd.f32 0.0, %v1963
  %v1965 = vpop.f32.mrf.mxu0
  %v1966 = vadd.f32 0.0, %v1965
  %1967 = vdwg.mxu0
  %1972 = vrot.lane.b32.xlu0 %v1959, 64
  %v1973 = vpop.permute.xlu0 %1972
  %1974 = vrot.lane.b32.xlu0 %v1961, 64
  %v1975 = vpop.permute.xlu0 %1974
  %1976 = vrot.lane.b32.xlu0 %v1964, 64
  %v1977 = vpop.permute.xlu0 %1976
  %1978 = vrot.lane.b32.xlu0 %v1966, 64
  %v1979 = vpop.permute.xlu0 %1978
  %v1984 = vadd.f32 %v1841, %v1973
  %v1985 = vadd.f32 %v1842, %v1975
  %v1986 = vadd.f32 %v1843, %v1977
  %v1987 = vadd.f32 %v1844, %v1979
  %v1988 = vtanh.pop %v1984
  %v1989 = vtanh.pop %v1985
  %v1990 = vtanh.pop %v1986
  %v1991 = vtanh.pop %v1987
  %v1992 = vmul.f32 %v1875, %v1783
  %v1993 = vmul.f32 %v1890, %v1784
  %v1994 = vmul.f32 %v1905, %v1785
  %v1995 = vmul.f32 %v1920, %v1786
  %v1996 = vsub.f32 1.0, %v1875
  %v1997 = vsub.f32 1.0, %v1890
  %v1998 = vsub.f32 1.0, %v1905
  %v1999 = vsub.f32 1.0, %v1920
  %2004 = vrot.lane.b32.xlu0 %v1988, 64
  %v2005 = vpop.permute.xlu0 %2004
  %2006 = vrot.lane.b32.xlu0 %v1989, 64
  %v2007 = vpop.permute.xlu0 %2006
  %2008 = vrot.lane.b32.xlu0 %v1990, 64
  %v2009 = vpop.permute.xlu0 %2008
  %2010 = vrot.lane.b32.xlu0 %v1991, 64
  %v2011 = vpop.permute.xlu0 %2010
  %v2016 = vmul.f32 %v1996, %v2005
  %v2017 = vmul.f32 %v1997, %v2007
  %v2018 = vmul.f32 %v1998, %v2009
  %v2019 = vmul.f32 %v1999, %v2011
  %v2020 = vadd.f32 %v1992, %v2016
  %v2021 = vadd.f32 %v1993, %v2017
  %v2022 = vadd.f32 %v1994, %v2018
  %v2023 = vadd.f32 %v1995, %v2019
  %2024 = vst.msk [vmem:[#allocation2] sm:$0xff] %vm33, %v2020
  %2025 = vst.msk [vmem:[#allocation2 + $0x8] sm:$0xff] %vm33, %v2021
  %2026 = vst.msk [vmem:[#allocation2 + $0x10] sm:$0xff] %vm33, %v2022
  %2027 = vst.msk [vmem:[#allocation2 + $0x18] sm:$0xff] %vm33, %v2023
  %v2028 = vmax.f32 %v2020, 0.0
  %v2029 = vmax.f32 %v2021, 0.0
  %v2030 = vmax.f32 %v2022, 0.0
  %v2031 = vmax.f32 %v2023, 0.0
  %s2032 = scalar_lea.vmem [#allocation3], 160
  %2033 = vst.msk [vmem:[%s2032] sm:$0xff] %vm33, %v2028
  %2034 = vst.msk [vmem:[%s2032 + $0x8] sm:$0xff] %vm33, %v2029
  %2035 = vst.msk [vmem:[%s2032 + $0x10] sm:$0xff] %vm33, %v2030
  %2036 = vst.msk [vmem:[%s2032 + $0x18] sm:$0xff] %vm33, %v2031
  %s2037 = scalar_lea.vmem %s0, 96
  %v2038 = vld [vmem:[%s2037] sm:$0xf]
  %v2039 = vld [vmem:[%s2037 + $0x4] sm:$0xf]
  %v2040 = vld [vmem:[%s2037 + $0x8] sm:$0xf]
  %v2041 = vld [vmem:[%s2037 + $0xc] sm:$0xf]
  %v2046 = vunpack.c.l.b16 %v2038
  %v2047 = vunpack.c.l.b16 %v2039
  %v2048 = vunpack.c.l.b16 %v2040
  %v2049 = vunpack.c.l.b16 %v2041
  %v2050 = vpack.c.b16 %v2047, %v2046
  %v2051 = vpack.c.b16 %v2049, %v2048
  %v2053 = vsel %vm78, %v2050, 0
  %v2056 = vsel %vm78, %v2051, 0
  %2058 = vmatpush.bf16.msra.mxu0 0
  %2059 = vmatpush.bf16.msra.mxu0 0
  %2060 = vmatpush.bf16.msra.mxu0 0
  %2061 = vmatpush.bf16.msra.mxu0 0
  %2062 = vmatpush.bf16.msra.mxu0 0
  %2063 = vmatpush.bf16.msra.mxu0 0
  %2064 = vmatpush.bf16.msra.mxu0 0
  %2065 = vmatpush.bf16.msra.mxu0 %v87
  %2066 = vmatmul.bf16.gmra.mxu0 %v2053
  %v2067 = vpop.f32.mrf.mxu0
  %v2068 = vadd.f32 0.0, %v2067
  %v2069 = vpop.f32.mrf.mxu0
  %v2070 = vadd.f32 0.0, %v2069
  %2071 = vmatmul.bf16.gmra.mxu0 %v2056
  %v2072 = vpop.f32.mrf.mxu0
  %v2073 = vadd.f32 0.0, %v2072
  %v2074 = vpop.f32.mrf.mxu0
  %v2075 = vadd.f32 0.0, %v2074
  %2076 = vdwg.mxu0
  %v2077 = vpack.c.bf16 %v2070, %v2068
  %v2078 = vpack.c.bf16 %v2075, %v2073
  %2079 = vmatpush.bf16.msra.mxu0 0
  %2080 = vmatpush.bf16.msra.mxu0 0
  %2081 = vmatpush.bf16.msra.mxu0 0
  %2082 = vmatpush.bf16.msra.mxu0 0
  %2083 = vmatpush.bf16.msra.mxu0 0
  %2084 = vmatpush.bf16.msra.mxu0 0
  %2085 = vmatpush.bf16.msra.mxu0 %v2078
  %2086 = vmatpush.bf16.msra.mxu0 %v2077
  %2087 = vmatmul.bf16.gmra.mxu0 %v121
  %v2088 = vpop.f32.mrf.mxu0
  %v2089 = vadd.f32 0.0, %v2088
  %v2090 = vpop.f32.mrf.mxu0
  %v2091 = vadd.f32 0.0, %v2090
  %2092 = vmatmul.bf16.gmra.mxu0 %v124
  %v2093 = vpop.f32.mrf.mxu0
  %v2094 = vadd.f32 0.0, %v2093
  %v2095 = vpop.f32.mrf.mxu0
  %v2096 = vadd.f32 0.0, %v2095
  %2097 = vdwg.mxu0
  %v2098 = vld [vmem:[#allocation2] sm:$0xff]
  %v2099 = vld [vmem:[#allocation2 + $0x8] sm:$0xff]
  %v2100 = vld [vmem:[#allocation2 + $0x10] sm:$0xff]
  %v2101 = vld [vmem:[#allocation2 + $0x18] sm:$0xff]
  %v2102 = vpack.c.bf16 %v2091, %v2089
  %v2103 = vpack.c.bf16 %v2096, %v2094
  %v2104 = vpack.c.bf16 %v2099, %v2098
  %v2105 = vpack.c.bf16 %v2101, %v2100
  %v2107 = vsel %vm33, %v2104, 0
  %v2110 = vsel %vm33, %v2105, 0
  %2112 = vmatpush.bf16.msra.mxu0 0
  %2113 = vmatpush.bf16.msra.mxu0 0
  %2114 = vmatpush.bf16.msra.mxu0 0
  %2115 = vmatpush.bf16.msra.mxu0 0
  %2116 = vmatpush.bf16.msra.mxu0 0
  %2117 = vmatpush.bf16.msra.mxu0 0
  %2118 = vmatpush.bf16.msra.mxu0 %v162
  %2119 = vmatpush.bf16.msra.mxu0 %v161
  %2120 = vmatmul.bf16.gmra.mxu0 %v2107
  %v2121 = vpop.f32.mrf.mxu0
  %v2122 = vadd.f32 0.0, %v2121
  %v2123 = vpop.f32.mrf.mxu0
  %v2124 = vadd.f32 0.0, %v2123
  %2125 = vmatmul.bf16.gmra.mxu0 %v2110
  %v2126 = vpop.f32.mrf.mxu0
  %v2127 = vadd.f32 0.0, %v2126
  %v2128 = vpop.f32.mrf.mxu0
  %v2129 = vadd.f32 0.0, %v2128
  %2130 = vdwg.mxu0
  %v2132 = vsel %vm226, %v2102, 0
  %v2135 = vsel %vm226, %v2103, 0
  %2137 = vmatpush.bf16.msra.mxu0 0
  %2138 = vmatpush.bf16.msra.mxu0 0
  %2139 = vmatpush.bf16.msra.mxu0 %v219
  %2140 = vmatpush.bf16.msra.mxu0 %v218
  %2141 = vmatpush.bf16.msra.mxu0 %v217
  %2142 = vmatpush.bf16.msra.mxu0 %v216
  %2143 = vmatpush.bf16.msra.mxu0 %v215
  %2144 = vmatpush.bf16.msra.mxu0 %v214
  %2145 = vmatmul.bf16.gmra.mxu0 %v2132
  %v2146 = vpop.f32.mrf.mxu0
  %v2147 = vadd.f32 %v2122, %v2146
  %v2148 = vpop.f32.mrf.mxu0
  %v2149 = vadd.f32 %v2124, %v2148
  %2150 = vmatmul.bf16.gmra.mxu0 %v2135
  %v2151 = vpop.f32.mrf.mxu0
  %v2152 = vadd.f32 %v2127, %v2151
  %v2153 = vpop.f32.mrf.mxu0
  %v2154 = vadd.f32 %v2129, %v2153
  %2155 = vdwg.mxu0
  %v2156 = vadd.f32 %v2147, %v253
  %v2157 = vadd.f32 %v2149, %v253
  %v2158 = vadd.f32 %v2152, %v253
  %v2159 = vadd.f32 %v2154, %v253
  %v2160 = vxor.u32 %v2156, 2147483648
  %v2161 = vxor.u32 %v2157, 2147483648
  %v2162 = vxor.u32 %v2158, 2147483648
  %v2163 = vxor.u32 %v2159, 2147483648
  %v2164 = vmul.f32 %v2160, 1.442695
  %v2165 = vpow.pop %v2164
  %v2166 = vmul.f32 %v2161, 1.442695
  %v2167 = vpow.pop %v2166
  %v2168 = vmul.f32 %v2162, 1.442695
  %v2169 = vpow.pop %v2168
  %v2170 = vmul.f32 %v2163, 1.442695
  %v2171 = vpow.pop %v2170
  %v2172 = vadd.f32 %v2165, 1.0
  %v2173 = vadd.f32 %v2167, 1.0
  %v2174 = vadd.f32 %v2169, 1.0
  %v2175 = vadd.f32 %v2171, 1.0
  %v2176 = vrcp.pop %v2172
  %v2177 = vmul.f32 %v2172, %v2176
  %v2178 = vsub.f32 1.0, %v2177
  %v2179 = vmul.f32 %v2176, %v2178
  %v2180 = vadd.f32 %v2176, %v2179
  %vm2181 = vweird.f32 %v2172
  %vm2182 = vweird.f32 %v2176
  %vm2183 = vmor %vm2181, %vm2182
  %v2184 = vsel %vm2183, %v2176, %v2180
  %v2185 = vand.u32 2147483647, %v2172
  %vm2186 = vcmp.eq.f32.partialorder %v2185, 8.507059e+37
  %v2187 = vand.u32 %v2172, 2147483648
  %v2188 = vor.u32 1.1754944e-38, %v2187
  %v2189 = vsel %vm2186, %v2188, %v2184
  %v2190 = vmul.f32 1.0, %v2189
  %v2191 = vrcp.pop %v2173
  %v2192 = vmul.f32 %v2173, %v2191
  %v2193 = vsub.f32 1.0, %v2192
  %v2194 = vmul.f32 %v2191, %v2193
  %v2195 = vadd.f32 %v2191, %v2194
  %vm2196 = vweird.f32 %v2173
  %vm2197 = vweird.f32 %v2191
  %vm2198 = vmor %vm2196, %vm2197
  %v2199 = vsel %vm2198, %v2191, %v2195
  %v2200 = vand.u32 2147483647, %v2173
  %vm2201 = vcmp.eq.f32.partialorder %v2200, 8.507059e+37
  %v2202 = vand.u32 %v2173, 2147483648
  %v2203 = vor.u32 1.1754944e-38, %v2202
  %v2204 = vsel %vm2201, %v2203, %v2199
  %v2205 = vmul.f32 1.0, %v2204
  %v2206 = vrcp.pop %v2174
  %v2207 = vmul.f32 %v2174, %v2206
  %v2208 = vsub.f32 1.0, %v2207
  %v2209 = vmul.f32 %v2206, %v2208
  %v2210 = vadd.f32 %v2206, %v2209
  %vm2211 = vweird.f32 %v2174
  %vm2212 = vweird.f32 %v2206
  %vm2213 = vmor %vm2211, %vm2212
  %v2214 = vsel %vm2213, %v2206, %v2210
  %v2215 = vand.u32 2147483647, %v2174
  %vm2216 = vcmp.eq.f32.partialorder %v2215, 8.507059e+37
  %v2217 = vand.u32 %v2174, 2147483648
  %v2218 = vor.u32 1.1754944e-38, %v2217
  %v2219 = vsel %vm2216, %v2218, %v2214
  %v2220 = vmul.f32 1.0, %v2219
  %v2221 = vrcp.pop %v2175
  %v2222 = vmul.f32 %v2175, %v2221
  %v2223 = vsub.f32 1.0, %v2222
  %v2224 = vmul.f32 %v2221, %v2223
  %v2225 = vadd.f32 %v2221, %v2224
  %vm2226 = vweird.f32 %v2175
  %vm2227 = vweird.f32 %v2221
  %vm2228 = vmor %vm2226, %vm2227
  %v2229 = vsel %vm2228, %v2221, %v2225
  %v2230 = vand.u32 2147483647, %v2175
  %vm2231 = vcmp.eq.f32.partialorder %v2230, 8.507059e+37
  %v2232 = vand.u32 %v2175, 2147483648
  %v2233 = vor.u32 1.1754944e-38, %v2232
  %v2234 = vsel %vm2231, %v2233, %v2229
  %v2235 = vmul.f32 1.0, %v2234
  %2240 = vrot.lane.b32.xlu0 %v2190, 96
  %v2241 = vpop.permute.xlu0 %2240
  %2242 = vrot.lane.b32.xlu0 %v2205, 96
  %v2243 = vpop.permute.xlu0 %2242
  %2244 = vrot.lane.b32.xlu0 %v2220, 96
  %v2245 = vpop.permute.xlu0 %2244
  %2246 = vrot.lane.b32.xlu0 %v2235, 96
  %v2247 = vpop.permute.xlu0 %2246
  %v2252 = vmul.f32 %v2098, %v2241
  %v2253 = vmul.f32 %v2099, %v2243
  %v2254 = vmul.f32 %v2100, %v2245
  %v2255 = vmul.f32 %v2101, %v2247
  %v2256 = vpack.c.bf16 %v2253, %v2252
  %v2257 = vpack.c.bf16 %v2255, %v2254
  %v2259 = vsel %vm33, %v2256, 0
  %v2262 = vsel %vm33, %v2257, 0
  %2264 = vmatpush.bf16.msra.mxu0 0
  %2265 = vmatpush.bf16.msra.mxu0 0
  %2266 = vmatpush.bf16.msra.mxu0 0
  %2267 = vmatpush.bf16.msra.mxu0 0
  %2268 = vmatpush.bf16.msra.mxu0 0
  %2269 = vmatpush.bf16.msra.mxu0 0
  %2270 = vmatpush.bf16.msra.mxu0 %v366
  %2271 = vmatpush.bf16.msra.mxu0 %v365
  %2272 = vmatmul.bf16.gmra.mxu0 %v2259
  %v2273 = vpop.f32.mrf.mxu0
  %v2274 = vadd.f32 0.0, %v2273
  %v2275 = vpop.f32.mrf.mxu0
  %v2276 = vadd.f32 0.0, %v2275
  %2277 = vmatmul.bf16.gmra.mxu0 %v2262
  %v2278 = vpop.f32.mrf.mxu0
  %v2279 = vadd.f32 0.0, %v2278
  %v2280 = vpop.f32.mrf.mxu0
  %v2281 = vadd.f32 0.0, %v2280
  %2282 = vdwg.mxu0
  %2287 = vrot.lane.b32.xlu0 %v2274, 64
  %v2288 = vpop.permute.xlu0 %2287
  %2289 = vrot.lane.b32.xlu0 %v2276, 64
  %v2290 = vpop.permute.xlu0 %2289
  %2291 = vrot.lane.b32.xlu0 %v2279, 64
  %v2292 = vpop.permute.xlu0 %2291
  %2293 = vrot.lane.b32.xlu0 %v2281, 64
  %v2294 = vpop.permute.xlu0 %2293
  %v2299 = vadd.f32 %v2156, %v2288
  %v2300 = vadd.f32 %v2157, %v2290
  %v2301 = vadd.f32 %v2158, %v2292
  %v2302 = vadd.f32 %v2159, %v2294
  %v2303 = vtanh.pop %v2299
  %v2304 = vtanh.pop %v2300
  %v2305 = vtanh.pop %v2301
  %v2306 = vtanh.pop %v2302
  %v2307 = vmul.f32 %v2190, %v2098
  %v2308 = vmul.f32 %v2205, %v2099
  %v2309 = vmul.f32 %v2220, %v2100
  %v2310 = vmul.f32 %v2235, %v2101
  %v2311 = vsub.f32 1.0, %v2190
  %v2312 = vsub.f32 1.0, %v2205
  %v2313 = vsub.f32 1.0, %v2220
  %v2314 = vsub.f32 1.0, %v2235
  %2319 = vrot.lane.b32.xlu0 %v2303, 64
  %v2320 = vpop.permute.xlu0 %2319
  %2321 = vrot.lane.b32.xlu0 %v2304, 64
  %v2322 = vpop.permute.xlu0 %2321
  %2323 = vrot.lane.b32.xlu0 %v2305, 64
  %v2324 = vpop.permute.xlu0 %2323
  %2325 = vrot.lane.b32.xlu0 %v2306, 64
  %v2326 = vpop.permute.xlu0 %2325
  %v2331 = vmul.f32 %v2311, %v2320
  %v2332 = vmul.f32 %v2312, %v2322
  %v2333 = vmul.f32 %v2313, %v2324
  %v2334 = vmul.f32 %v2314, %v2326
  %v2335 = vadd.f32 %v2307, %v2331
  %v2336 = vadd.f32 %v2308, %v2332
  %v2337 = vadd.f32 %v2309, %v2333
  %v2338 = vadd.f32 %v2310, %v2334
  %2339 = vst.msk [vmem:[#allocation2] sm:$0xff] %vm33, %v2335
  %2340 = vst.msk [vmem:[#allocation2 + $0x8] sm:$0xff] %vm33, %v2336
  %2341 = vst.msk [vmem:[#allocation2 + $0x10] sm:$0xff] %vm33, %v2337
  %2342 = vst.msk [vmem:[#allocation2 + $0x18] sm:$0xff] %vm33, %v2338
  %v2343 = vmax.f32 %v2335, 0.0
  %v2344 = vmax.f32 %v2336, 0.0
  %v2345 = vmax.f32 %v2337, 0.0
  %v2346 = vmax.f32 %v2338, 0.0
  %s2347 = scalar_lea.vmem [#allocation3], 192
  %2348 = vst.msk [vmem:[%s2347] sm:$0xff] %vm33, %v2343
  %2349 = vst.msk [vmem:[%s2347 + $0x8] sm:$0xff] %vm33, %v2344
  %2350 = vst.msk [vmem:[%s2347 + $0x10] sm:$0xff] %vm33, %v2345
  %2351 = vst.msk [vmem:[%s2347 + $0x18] sm:$0xff] %vm33, %v2346
  %s2352 = scalar_lea.vmem %s0, 112
  %v2353 = vld [vmem:[%s2352] sm:$0xf]
  %v2354 = vld [vmem:[%s2352 + $0x4] sm:$0xf]
  %v2355 = vld [vmem:[%s2352 + $0x8] sm:$0xf]
  %v2356 = vld [vmem:[%s2352 + $0xc] sm:$0xf]
  %v2361 = vunpack.c.l.b16 %v2353
  %v2362 = vunpack.c.l.b16 %v2354
  %v2363 = vunpack.c.l.b16 %v2355
  %v2364 = vunpack.c.l.b16 %v2356
  %v2365 = vpack.c.b16 %v2362, %v2361
  %v2366 = vpack.c.b16 %v2364, %v2363
  %v2368 = vsel %vm78, %v2365, 0
  %v2371 = vsel %vm78, %v2366, 0
  %2373 = vmatpush.bf16.msra.mxu0 0
  %2374 = vmatpush.bf16.msra.mxu0 0
  %2375 = vmatpush.bf16.msra.mxu0 0
  %2376 = vmatpush.bf16.msra.mxu0 0
  %2377 = vmatpush.bf16.msra.mxu0 0
  %2378 = vmatpush.bf16.msra.mxu0 0
  %2379 = vmatpush.bf16.msra.mxu0 0
  %2380 = vmatpush.bf16.msra.mxu0 %v87
  %2381 = vmatmul.bf16.gmra.mxu0 %v2368
  %v2382 = vpop.f32.mrf.mxu0
  %v2383 = vadd.f32 0.0, %v2382
  %v2384 = vpop.f32.mrf.mxu0
  %v2385 = vadd.f32 0.0, %v2384
  %2386 = vmatmul.bf16.gmra.mxu0 %v2371
  %v2387 = vpop.f32.mrf.mxu0
  %v2388 = vadd.f32 0.0, %v2387
  %v2389 = vpop.f32.mrf.mxu0
  %v2390 = vadd.f32 0.0, %v2389
  %2391 = vdwg.mxu0
  %v2392 = vpack.c.bf16 %v2385, %v2383
  %v2393 = vpack.c.bf16 %v2390, %v2388
  %2394 = vmatpush.bf16.msra.mxu0 0
  %2395 = vmatpush.bf16.msra.mxu0 0
  %2396 = vmatpush.bf16.msra.mxu0 0
  %2397 = vmatpush.bf16.msra.mxu0 0
  %2398 = vmatpush.bf16.msra.mxu0 0
  %2399 = vmatpush.bf16.msra.mxu0 0
  %2400 = vmatpush.bf16.msra.mxu0 %v2393
  %2401 = vmatpush.bf16.msra.mxu0 %v2392
  %2402 = vmatmul.bf16.gmra.mxu0 %v121
  %v2403 = vpop.f32.mrf.mxu0
  %v2404 = vadd.f32 0.0, %v2403
  %v2405 = vpop.f32.mrf.mxu0
  %v2406 = vadd.f32 0.0, %v2405
  %2407 = vmatmul.bf16.gmra.mxu0 %v124
  %v2408 = vpop.f32.mrf.mxu0
  %v2409 = vadd.f32 0.0, %v2408
  %v2410 = vpop.f32.mrf.mxu0
  %v2411 = vadd.f32 0.0, %v2410
  %2412 = vdwg.mxu0
  %v2413 = vld [vmem:[#allocation2] sm:$0xff]
  %v2414 = vld [vmem:[#allocation2 + $0x8] sm:$0xff]
  %v2415 = vld [vmem:[#allocation2 + $0x10] sm:$0xff]
  %v2416 = vld [vmem:[#allocation2 + $0x18] sm:$0xff]
  %v2417 = vpack.c.bf16 %v2406, %v2404
  %v2418 = vpack.c.bf16 %v2411, %v2409
  %v2419 = vpack.c.bf16 %v2414, %v2413
  %v2420 = vpack.c.bf16 %v2416, %v2415
  %v2422 = vsel %vm33, %v2419, 0
  %v2425 = vsel %vm33, %v2420, 0
  %2427 = vmatpush.bf16.msra.mxu0 0
  %2428 = vmatpush.bf16.msra.mxu0 0
  %2429 = vmatpush.bf16.msra.mxu0 0
  %2430 = vmatpush.bf16.msra.mxu0 0
  %2431 = vmatpush.bf16.msra.mxu0 0
  %2432 = vmatpush.bf16.msra.mxu0 0
  %2433 = vmatpush.bf16.msra.mxu0 %v162
  %2434 = vmatpush.bf16.msra.mxu0 %v161
  %2435 = vmatmul.bf16.gmra.mxu0 %v2422
  %v2436 = vpop.f32.mrf.mxu0
  %v2437 = vadd.f32 0.0, %v2436
  %v2438 = vpop.f32.mrf.mxu0
  %v2439 = vadd.f32 0.0, %v2438
  %2440 = vmatmul.bf16.gmra.mxu0 %v2425
  %v2441 = vpop.f32.mrf.mxu0
  %v2442 = vadd.f32 0.0, %v2441
  %v2443 = vpop.f32.mrf.mxu0
  %v2444 = vadd.f32 0.0, %v2443
  %2445 = vdwg.mxu0
  %v2447 = vsel %vm226, %v2417, 0
  %v2450 = vsel %vm226, %v2418, 0
  %2452 = vmatpush.bf16.msra.mxu0 0
  %2453 = vmatpush.bf16.msra.mxu0 0
  %2454 = vmatpush.bf16.msra.mxu0 %v219
  %2455 = vmatpush.bf16.msra.mxu0 %v218
  %2456 = vmatpush.bf16.msra.mxu0 %v217
  %2457 = vmatpush.bf16.msra.mxu0 %v216
  %2458 = vmatpush.bf16.msra.mxu0 %v215
  %2459 = vmatpush.bf16.msra.mxu0 %v214
  %2460 = vmatmul.bf16.gmra.mxu0 %v2447
  %v2461 = vpop.f32.mrf.mxu0
  %v2462 = vadd.f32 %v2437, %v2461
  %v2463 = vpop.f32.mrf.mxu0
  %v2464 = vadd.f32 %v2439, %v2463
  %2465 = vmatmul.bf16.gmra.mxu0 %v2450
  %v2466 = vpop.f32.mrf.mxu0
  %v2467 = vadd.f32 %v2442, %v2466
  %v2468 = vpop.f32.mrf.mxu0
  %v2469 = vadd.f32 %v2444, %v2468
  %2470 = vdwg.mxu0
  %v2471 = vadd.f32 %v2462, %v253
  %v2472 = vadd.f32 %v2464, %v253
  %v2473 = vadd.f32 %v2467, %v253
  %v2474 = vadd.f32 %v2469, %v253
  %v2475 = vxor.u32 %v2471, 2147483648
  %v2476 = vxor.u32 %v2472, 2147483648
  %v2477 = vxor.u32 %v2473, 2147483648
  %v2478 = vxor.u32 %v2474, 2147483648
  %v2479 = vmul.f32 %v2475, 1.442695
  %v2480 = vpow.pop %v2479
  %v2481 = vmul.f32 %v2476, 1.442695
  %v2482 = vpow.pop %v2481
  %v2483 = vmul.f32 %v2477, 1.442695
  %v2484 = vpow.pop %v2483
  %v2485 = vmul.f32 %v2478, 1.442695
  %v2486 = vpow.pop %v2485
  %v2487 = vadd.f32 %v2480, 1.0
  %v2488 = vadd.f32 %v2482, 1.0
  %v2489 = vadd.f32 %v2484, 1.0
  %v2490 = vadd.f32 %v2486, 1.0
  %v2491 = vrcp.pop %v2487
  %v2492 = vmul.f32 %v2487, %v2491
  %v2493 = vsub.f32 1.0, %v2492
  %v2494 = vmul.f32 %v2491, %v2493
  %v2495 = vadd.f32 %v2491, %v2494
  %vm2496 = vweird.f32 %v2487
  %vm2497 = vweird.f32 %v2491
  %vm2498 = vmor %vm2496, %vm2497
  %v2499 = vsel %vm2498, %v2491, %v2495
  %v2500 = vand.u32 2147483647, %v2487
  %vm2501 = vcmp.eq.f32.partialorder %v2500, 8.507059e+37
  %v2502 = vand.u32 %v2487, 2147483648
  %v2503 = vor.u32 1.1754944e-38, %v2502
  %v2504 = vsel %vm2501, %v2503, %v2499
  %v2505 = vmul.f32 1.0, %v2504
  %v2506 = vrcp.pop %v2488
  %v2507 = vmul.f32 %v2488, %v2506
  %v2508 = vsub.f32 1.0, %v2507
  %v2509 = vmul.f32 %v2506, %v2508
  %v2510 = vadd.f32 %v2506, %v2509
  %vm2511 = vweird.f32 %v2488
  %vm2512 = vweird.f32 %v2506
  %vm2513 = vmor %vm2511, %vm2512
  %v2514 = vsel %vm2513, %v2506, %v2510
  %v2515 = vand.u32 2147483647, %v2488
  %vm2516 = vcmp.eq.f32.partialorder %v2515, 8.507059e+37
  %v2517 = vand.u32 %v2488, 2147483648
  %v2518 = vor.u32 1.1754944e-38, %v2517
  %v2519 = vsel %vm2516, %v2518, %v2514
  %v2520 = vmul.f32 1.0, %v2519
  %v2521 = vrcp.pop %v2489
  %v2522 = vmul.f32 %v2489, %v2521
  %v2523 = vsub.f32 1.0, %v2522
  %v2524 = vmul.f32 %v2521, %v2523
  %v2525 = vadd.f32 %v2521, %v2524
  %vm2526 = vweird.f32 %v2489
  %vm2527 = vweird.f32 %v2521
  %vm2528 = vmor %vm2526, %vm2527
  %v2529 = vsel %vm2528, %v2521, %v2525
  %v2530 = vand.u32 2147483647, %v2489
  %vm2531 = vcmp.eq.f32.partialorder %v2530, 8.507059e+37
  %v2532 = vand.u32 %v2489, 2147483648
  %v2533 = vor.u32 1.1754944e-38, %v2532
  %v2534 = vsel %vm2531, %v2533, %v2529
  %v2535 = vmul.f32 1.0, %v2534
  %v2536 = vrcp.pop %v2490
  %v2537 = vmul.f32 %v2490, %v2536
  %v2538 = vsub.f32 1.0, %v2537
  %v2539 = vmul.f32 %v2536, %v2538
  %v2540 = vadd.f32 %v2536, %v2539
  %vm2541 = vweird.f32 %v2490
  %vm2542 = vweird.f32 %v2536
  %vm2543 = vmor %vm2541, %vm2542
  %v2544 = vsel %vm2543, %v2536, %v2540
  %v2545 = vand.u32 2147483647, %v2490
  %vm2546 = vcmp.eq.f32.partialorder %v2545, 8.507059e+37
  %v2547 = vand.u32 %v2490, 2147483648
  %v2548 = vor.u32 1.1754944e-38, %v2547
  %v2549 = vsel %vm2546, %v2548, %v2544
  %v2550 = vmul.f32 1.0, %v2549
  %2555 = vrot.lane.b32.xlu0 %v2505, 96
  %v2556 = vpop.permute.xlu0 %2555
  %2557 = vrot.lane.b32.xlu0 %v2520, 96
  %v2558 = vpop.permute.xlu0 %2557
  %2559 = vrot.lane.b32.xlu0 %v2535, 96
  %v2560 = vpop.permute.xlu0 %2559
  %2561 = vrot.lane.b32.xlu0 %v2550, 96
  %v2562 = vpop.permute.xlu0 %2561
  %v2567 = vmul.f32 %v2413, %v2556
  %v2568 = vmul.f32 %v2414, %v2558
  %v2569 = vmul.f32 %v2415, %v2560
  %v2570 = vmul.f32 %v2416, %v2562
  %v2571 = vpack.c.bf16 %v2568, %v2567
  %v2572 = vpack.c.bf16 %v2570, %v2569
  %v2574 = vsel %vm33, %v2571, 0
  %v2577 = vsel %vm33, %v2572, 0
  %2579 = vmatpush.bf16.msra.mxu0 0
  %2580 = vmatpush.bf16.msra.mxu0 0
  %2581 = vmatpush.bf16.msra.mxu0 0
  %2582 = vmatpush.bf16.msra.mxu0 0
  %2583 = vmatpush.bf16.msra.mxu0 0
  %2584 = vmatpush.bf16.msra.mxu0 0
  %2585 = vmatpush.bf16.msra.mxu0 %v366
  %2586 = vmatpush.bf16.msra.mxu0 %v365
  %2587 = vmatmul.bf16.gmra.mxu0 %v2574
  %v2588 = vpop.f32.mrf.mxu0
  %v2589 = vadd.f32 0.0, %v2588
  %v2590 = vpop.f32.mrf.mxu0
  %v2591 = vadd.f32 0.0, %v2590
  %2592 = vmatmul.bf16.gmra.mxu0 %v2577
  %v2593 = vpop.f32.mrf.mxu0
  %v2594 = vadd.f32 0.0, %v2593
  %v2595 = vpop.f32.mrf.mxu0
  %v2596 = vadd.f32 0.0, %v2595
  %2597 = vdwg.mxu0
  %2602 = vrot.lane.b32.xlu0 %v2589, 64
  %v2603 = vpop.permute.xlu0 %2602
  %2604 = vrot.lane.b32.xlu0 %v2591, 64
  %v2605 = vpop.permute.xlu0 %2604
  %2606 = vrot.lane.b32.xlu0 %v2594, 64
  %v2607 = vpop.permute.xlu0 %2606
  %2608 = vrot.lane.b32.xlu0 %v2596, 64
  %v2609 = vpop.permute.xlu0 %2608
  %v2614 = vadd.f32 %v2471, %v2603
  %v2615 = vadd.f32 %v2472, %v2605
  %v2616 = vadd.f32 %v2473, %v2607
  %v2617 = vadd.f32 %v2474, %v2609
  %v2618 = vtanh.pop %v2614
  %v2619 = vtanh.pop %v2615
  %v2620 = vtanh.pop %v2616
  %v2621 = vtanh.pop %v2617
  %v2622 = vmul.f32 %v2505, %v2413
  %v2623 = vmul.f32 %v2520, %v2414
  %v2624 = vmul.f32 %v2535, %v2415
  %v2625 = vmul.f32 %v2550, %v2416
  %v2626 = vsub.f32 1.0, %v2505
  %v2627 = vsub.f32 1.0, %v2520
  %v2628 = vsub.f32 1.0, %v2535
  %v2629 = vsub.f32 1.0, %v2550
  %2634 = vrot.lane.b32.xlu0 %v2618, 64
  %v2635 = vpop.permute.xlu0 %2634
  %2636 = vrot.lane.b32.xlu0 %v2619, 64
  %v2637 = vpop.permute.xlu0 %2636
  %2638 = vrot.lane.b32.xlu0 %v2620, 64
  %v2639 = vpop.permute.xlu0 %2638
  %2640 = vrot.lane.b32.xlu0 %v2621, 64
  %v2641 = vpop.permute.xlu0 %2640
  %v2646 = vmul.f32 %v2626, %v2635
  %v2647 = vmul.f32 %v2627, %v2637
  %v2648 = vmul.f32 %v2628, %v2639
  %v2649 = vmul.f32 %v2629, %v2641
  %v2650 = vadd.f32 %v2622, %v2646
  %v2651 = vadd.f32 %v2623, %v2647
  %v2652 = vadd.f32 %v2624, %v2648
  %v2653 = vadd.f32 %v2625, %v2649
  %2654 = vst.msk [vmem:[#allocation2] sm:$0xff] %vm33, %v2650
  %2655 = vst.msk [vmem:[#allocation2 + $0x8] sm:$0xff] %vm33, %v2651
  %2656 = vst.msk [vmem:[#allocation2 + $0x10] sm:$0xff] %vm33, %v2652
  %2657 = vst.msk [vmem:[#allocation2 + $0x18] sm:$0xff] %vm33, %v2653
  %v2658 = vmax.f32 %v2650, 0.0
  %v2659 = vmax.f32 %v2651, 0.0
  %v2660 = vmax.f32 %v2652, 0.0
  %v2661 = vmax.f32 %v2653, 0.0
  %s2662 = scalar_lea.vmem [#allocation3], 224
  %2663 = vst.msk [vmem:[%s2662] sm:$0xff] %vm33, %v2658
  %2664 = vst.msk [vmem:[%s2662 + $0x8] sm:$0xff] %vm33, %v2659
  %2665 = vst.msk [vmem:[%s2662 + $0x10] sm:$0xff] %vm33, %v2660
  %2666 = vst.msk [vmem:[%s2662 + $0x18] sm:$0xff] %vm33, %v2661
  %v2667 = vld [vmem:[#allocation3] sm:$0xff]
  %v2668 = vld [vmem:[#allocation3 + $0x8] sm:$0xff]
  %v2669 = vld [vmem:[#allocation3 + $0x10] sm:$0xff]
  %v2670 = vld [vmem:[#allocation3 + $0x18] sm:$0xff]
  %v2671 = vld [vmem:[#allocation3 + $0x20] sm:$0xff]
  %v2672 = vld [vmem:[#allocation3 + $0x28] sm:$0xff]
  %v2673 = vld [vmem:[#allocation3 + $0x30] sm:$0xff]
  %v2674 = vld [vmem:[#allocation3 + $0x38] sm:$0xff]
  %v2675 = vld [vmem:[#allocation3 + $0x40] sm:$0xff]
  %v2676 = vld [vmem:[#allocation3 + $0x48] sm:$0xff]
  %v2677 = vld [vmem:[#allocation3 + $0x50] sm:$0xff]
  %v2678 = vld [vmem:[#allocation3 + $0x58] sm:$0xff]
  %v2679 = vld [vmem:[#allocation3 + $0x60] sm:$0xff]
  %v2680 = vld [vmem:[#allocation3 + $0x68] sm:$0xff]
  %v2681 = vld [vmem:[#allocation3 + $0x70] sm:$0xff]
  %v2682 = vld [vmem:[#allocation3 + $0x78] sm:$0xff]
  %v2683 = vld [vmem:[#allocation3 + $0x80] sm:$0xff]
  %v2684 = vld [vmem:[#allocation3 + $0x88] sm:$0xff]
  %v2685 = vld [vmem:[#allocation3 + $0x90] sm:$0xff]
  %v2686 = vld [vmem:[#allocation3 + $0x98] sm:$0xff]
  %v2687 = vld [vmem:[#allocation3 + $0xa0] sm:$0xff]
  %v2688 = vld [vmem:[#allocation3 + $0xa8] sm:$0xff]
  %v2689 = vld [vmem:[#allocation3 + $0xb0] sm:$0xff]
  %v2690 = vld [vmem:[#allocation3 + $0xb8] sm:$0xff]
  %v2691 = vld [vmem:[#allocation3 + $0xc0] sm:$0xff]
  %v2692 = vld [vmem:[#allocation3 + $0xc8] sm:$0xff]
  %v2693 = vld [vmem:[#allocation3 + $0xd0] sm:$0xff]
  %v2694 = vld [vmem:[#allocation3 + $0xd8] sm:$0xff]
  %v2695 = vld [vmem:[#allocation3 + $0xe0] sm:$0xff]
  %v2696 = vld [vmem:[#allocation3 + $0xe8] sm:$0xff]
  %v2697 = vld [vmem:[#allocation3 + $0xf0] sm:$0xff]
  %v2698 = vld [vmem:[#allocation3 + $0xf8] sm:$0xff]
  %v2699 = vpack.c.bf16 %v2668, %v2667
  %v2700 = vpack.c.bf16 %v2670, %v2669
  %v2701 = vpack.c.bf16 %v2672, %v2671
  %v2702 = vpack.c.bf16 %v2674, %v2673
  %v2703 = vpack.c.bf16 %v2676, %v2675
  %v2704 = vpack.c.bf16 %v2678, %v2677
  %v2705 = vpack.c.bf16 %v2680, %v2679
  %v2706 = vpack.c.bf16 %v2682, %v2681
  %v2707 = vpack.c.bf16 %v2684, %v2683
  %v2708 = vpack.c.bf16 %v2686, %v2685
  %v2709 = vpack.c.bf16 %v2688, %v2687
  %v2710 = vpack.c.bf16 %v2690, %v2689
  %v2711 = vpack.c.bf16 %v2692, %v2691
  %v2712 = vpack.c.bf16 %v2694, %v2693
  %v2713 = vpack.c.bf16 %v2696, %v2695
  %v2714 = vpack.c.bf16 %v2698, %v2697
  %v2715 = vld [vmem:[%s7] sm:$0xf]
  %v2716 = vld [vmem:[%s7 + $0x4] sm:$0xf]
  %v2717 = vld [vmem:[%s7 + $0x8] sm:$0xf]
  %v2718 = vld [vmem:[%s7 + $0xc] sm:$0xf]
  %v2719 = vld [vmem:[%s8] sm:$0x1]
  %v2721 = vperm.slane %v2719, 0
  %v2727 = vunpack.c.l.b16 %v2715
  %v2728 = vunpack.c.l.b16 %v2716
  %v2729 = vunpack.c.l.b16 %v2717
  %v2730 = vunpack.c.l.b16 %v2718
  %v2731 = vpack.c.b16 %v2728, %v2727
  %v2732 = vpack.c.b16 %v2730, %v2729
  %v2736 = vsel %vm33, %v2699, 0
  %v2739 = vsel %vm33, %v2700, 0
  %v2742 = vsel %vm33, %v2701, 0
  %v2745 = vsel %vm33, %v2702, 0
  %v2748 = vsel %vm33, %v2703, 0
  %v2751 = vsel %vm33, %v2704, 0
  %v2754 = vsel %vm33, %v2705, 0
  %v2757 = vsel %vm33, %v2706, 0
  %v2760 = vsel %vm33, %v2707, 0
  %v2763 = vsel %vm33, %v2708, 0
  %v2766 = vsel %vm33, %v2709, 0
  %v2769 = vsel %vm33, %v2710, 0
  %v2772 = vsel %vm33, %v2711, 0
  %v2775 = vsel %vm33, %v2712, 0
  %v2778 = vsel %vm33, %v2713, 0
  %v2781 = vsel %vm33, %v2714, 0
  %2783 = vmatpush.bf16.msra.mxu0 0
  %2784 = vmatpush.bf16.msra.mxu0 0
  %2785 = vmatpush.bf16.msra.mxu0 0
  %2786 = vmatpush.bf16.msra.mxu0 0
  %2787 = vmatpush.bf16.msra.mxu0 0
  %2788 = vmatpush.bf16.msra.mxu0 0
  %2789 = vmatpush.bf16.msra.mxu0 %v2732
  %2790 = vmatpush.bf16.msra.mxu0 %v2731
  %2791 = vmatmul.bf16.gmra.mxu0 %v2736
  %v2792 = vpop.f32.mrf.mxu0
  %v2793 = vadd.f32 %v2721, %v2792
  %v2794 = vpop.f32.mrf.mxu0
  %v2795 = vadd.f32 %v2721, %v2794
  %2796 = vmatmul.bf16.gmra.mxu0 %v2739
  %v2797 = vpop.f32.mrf.mxu0
  %v2798 = vadd.f32 %v2721, %v2797
  %v2799 = vpop.f32.mrf.mxu0
  %v2800 = vadd.f32 %v2721, %v2799
  %2801 = vmatmul.bf16.gmra.mxu0 %v2742
  %v2802 = vpop.f32.mrf.mxu0
  %v2803 = vadd.f32 %v2721, %v2802
  %v2804 = vpop.f32.mrf.mxu0
  %v2805 = vadd.f32 %v2721, %v2804
  %2806 = vmatmul.bf16.gmra.mxu0 %v2745
  %v2807 = vpop.f32.mrf.mxu0
  %v2808 = vadd.f32 %v2721, %v2807
  %v2809 = vpop.f32.mrf.mxu0
  %v2810 = vadd.f32 %v2721, %v2809
  %2811 = vmatmul.bf16.gmra.mxu0 %v2748
  %v2812 = vpop.f32.mrf.mxu0
  %v2813 = vadd.f32 %v2721, %v2812
  %v2814 = vpop.f32.mrf.mxu0
  %v2815 = vadd.f32 %v2721, %v2814
  %2816 = vmatmul.bf16.gmra.mxu0 %v2751
  %v2817 = vpop.f32.mrf.mxu0
  %v2818 = vadd.f32 %v2721, %v2817
  %v2819 = vpop.f32.mrf.mxu0
  %v2820 = vadd.f32 %v2721, %v2819
  %2821 = vmatmul.bf16.gmra.mxu0 %v2754
  %v2822 = vpop.f32.mrf.mxu0
  %v2823 = vadd.f32 %v2721, %v2822
  %v2824 = vpop.f32.mrf.mxu0
  %v2825 = vadd.f32 %v2721, %v2824
  %2826 = vmatmul.bf16.gmra.mxu0 %v2757
  %v2827 = vpop.f32.mrf.mxu0
  %v2828 = vadd.f32 %v2721, %v2827
  %v2829 = vpop.f32.mrf.mxu0
  %v2830 = vadd.f32 %v2721, %v2829
  %2831 = vmatmul.bf16.gmra.mxu0 %v2760
  %v2832 = vpop.f32.mrf.mxu0
  %v2833 = vadd.f32 %v2721, %v2832
  %v2834 = vpop.f32.mrf.mxu0
  %v2835 = vadd.f32 %v2721, %v2834
  %2836 = vmatmul.bf16.gmra.mxu0 %v2763
  %v2837 = vpop.f32.mrf.mxu0
  %v2838 = vadd.f32 %v2721, %v2837
  %v2839 = vpop.f32.mrf.mxu0
  %v2840 = vadd.f32 %v2721, %v2839
  %2841 = vmatmul.bf16.gmra.mxu0 %v2766
  %v2842 = vpop.f32.mrf.mxu0
  %v2843 = vadd.f32 %v2721, %v2842
  %v2844 = vpop.f32.mrf.mxu0
  %v2845 = vadd.f32 %v2721, %v2844
  %2846 = vmatmul.bf16.gmra.mxu0 %v2769
  %v2847 = vpop.f32.mrf.mxu0
  %v2848 = vadd.f32 %v2721, %v2847
  %v2849 = vpop.f32.mrf.mxu0
  %v2850 = vadd.f32 %v2721, %v2849
  %2851 = vmatmul.bf16.gmra.mxu0 %v2772
  %v2852 = vpop.f32.mrf.mxu0
  %v2853 = vadd.f32 %v2721, %v2852
  %v2854 = vpop.f32.mrf.mxu0
  %v2855 = vadd.f32 %v2721, %v2854
  %2856 = vmatmul.bf16.gmra.mxu0 %v2775
  %v2857 = vpop.f32.mrf.mxu0
  %v2858 = vadd.f32 %v2721, %v2857
  %v2859 = vpop.f32.mrf.mxu0
  %v2860 = vadd.f32 %v2721, %v2859
  %2861 = vmatmul.bf16.gmra.mxu0 %v2778
  %v2862 = vpop.f32.mrf.mxu0
  %v2863 = vadd.f32 %v2721, %v2862
  %v2864 = vpop.f32.mrf.mxu0
  %v2865 = vadd.f32 %v2721, %v2864
  %2866 = vmatmul.bf16.gmra.mxu0 %v2781
  %v2867 = vpop.f32.mrf.mxu0
  %v2868 = vadd.f32 %v2721, %v2867
  %v2869 = vpop.f32.mrf.mxu0
  %v2870 = vadd.f32 %v2721, %v2869
  %2871 = vdwg.mxu0
  %2872 = vst.msk [vmem:[%s9] sm:$0xff] %vm78, %v2793
  %2873 = vst.msk [vmem:[%s9 + $0x8] sm:$0xff] %vm78, %v2795
  %2874 = vst.msk [vmem:[%s9 + $0x10] sm:$0xff] %vm78, %v2798
  %2875 = vst.msk [vmem:[%s9 + $0x18] sm:$0xff] %vm78, %v2800
  %2876 = vst.msk [vmem:[%s9 + $0x20] sm:$0xff] %vm78, %v2803
  %2877 = vst.msk [vmem:[%s9 + $0x28] sm:$0xff] %vm78, %v2805
  %2878 = vst.msk [vmem:[%s9 + $0x30] sm:$0xff] %vm78, %v2808
  %2879 = vst.msk [vmem:[%s9 + $0x38] sm:$0xff] %vm78, %v2810
  %2880 = vst.msk [vmem:[%s9 + $0x40] sm:$0xff] %vm78, %v2813
  %2881 = vst.msk [vmem:[%s9 + $0x48] sm:$0xff] %vm78, %v2815
  %2882 = vst.msk [vmem:[%s9 + $0x50] sm:$0xff] %vm78, %v2818
  %2883 = vst.msk [vmem:[%s9 + $0x58] sm:$0xff] %vm78, %v2820
  %2884 = vst.msk [vmem:[%s9 + $0x60] sm:$0xff] %vm78, %v2823
  %2885 = vst.msk [vmem:[%s9 + $0x68] sm:$0xff] %vm78, %v2825
  %2886 = vst.msk [vmem:[%s9 + $0x70] sm:$0xff] %vm78, %v2828
  %2887 = vst.msk [vmem:[%s9 + $0x78] sm:$0xff] %vm78, %v2830
  %2888 = vst.msk [vmem:[%s9 + $0x80] sm:$0xff] %vm78, %v2833
  %2889 = vst.msk [vmem:[%s9 + $0x88] sm:$0xff] %vm78, %v2835
  %2890 = vst.msk [vmem:[%s9 + $0x90] sm:$0xff] %vm78, %v2838
  %2891 = vst.msk [vmem:[%s9 + $0x98] sm:$0xff] %vm78, %v2840
  %2892 = vst.msk [vmem:[%s9 + $0xa0] sm:$0xff] %vm78, %v2843
  %2893 = vst.msk [vmem:[%s9 + $0xa8] sm:$0xff] %vm78, %v2845
  %2894 = vst.msk [vmem:[%s9 + $0xb0] sm:$0xff] %vm78, %v2848
  %2895 = vst.msk [vmem:[%s9 + $0xb8] sm:$0xff] %vm78, %v2850
  %2896 = vst.msk [vmem:[%s9 + $0xc0] sm:$0xff] %vm78, %v2853
  %2897 = vst.msk [vmem:[%s9 + $0xc8] sm:$0xff] %vm78, %v2855
  %2898 = vst.msk [vmem:[%s9 + $0xd0] sm:$0xff] %vm78, %v2858
  %2899 = vst.msk [vmem:[%s9 + $0xd8] sm:$0xff] %vm78, %v2860
  %2900 = vst.msk [vmem:[%s9 + $0xe0] sm:$0xff] %vm78, %v2863
  %2901 = vst.msk [vmem:[%s9 + $0xe8] sm:$0xff] %vm78, %v2865
  %2902 = vst.msk [vmem:[%s9 + $0xf0] sm:$0xff] %vm78, %v2868
  %2903 = vst.msk [vmem:[%s9 + $0xf8] sm:$0xff] %vm78, %v2870
  // Predicated region
  $region38: #{tpu_custom_call.1} parent=0 // pred_check
    _
  $region39: #{tpu_custom_call.1} parent=0 // pred_check_branch
    %2905 = sbr.rel (0) target = $region41
  $region40: #{tpu_custom_call.1} parent=0 // pred_region
    _
  $region41: #{tpu_custom_call.1} parent=0 // pred_fallthru
    _
  // Predicated region
  $region42: #{tpu_custom_call.1} parent=0 // pred_check
    _
  $region43: #{tpu_custom_call.1} parent=0 // pred_check_branch
    %2907 = sbr.rel (0) target = $region45
  $region44: #{tpu_custom_call.1} parent=0 // pred_region
    _
  $region45: #{tpu_custom_call.1} parent=0 // pred_fallthru
    _

</llo_original>
